<compile_context>
chip_gen: v7x
topology: tpu7x:2x2x1
jax: 0.10.0
libtpu: 0.0.40
codegen_flags: <defaults>
</compile_context>

<pallas_src>
import functools

import jax
import jax.numpy as jnp
from jax.experimental import pallas as pl
from jax.experimental.pallas import tpu as pltpu

# ----------------------------- configuration --------------------------------
NUM_LAYERS = 2
EMB_DIM = 32
N_HEAD = 4
B_GRAPHS = 2          # len(batched_data)
S_NODES = 8           # nodes per graph
N_NODES = B_GRAPHS * S_NODES
N_FEATURES = 9        # data_type == 'smiles'
N_EDGE_FEATURES = 3
E_PER_GRAPH = 16
N_EDGES = B_GRAPHS * E_PER_GRAPH
ATOM_VOCAB = 16
EDGE_VOCAB = 8
BN_EPS = 1e-5


# --------------------- Pallas kernel: fully fused forward --------------------
def fused_gin_kernel(h0_ref, e_ref, src1h_ref, dst1h_ref,
                     w1_ref, b1_ref, w2_ref, b2_ref,
                     wqkv_ref, bqkv_ref, wo_ref, bo_ref,
                     out_ref, *, num_layers, n_head, b_graphs, s_nodes):
    h = h0_ref[...]                                   # [N, D] stays in VMEM/vregs
    src1h = src1h_ref[...]                            # [E, N] one-hot(src)
    dst1h = dst1h_ref[...]                            # [N, E] one-hot(dst)^T
    D = h.shape[1]
    dh = D // n_head

    for l in range(num_layers):                       # static unroll over layers
        # ---- GINConv aggregation as dense one-hot matmuls (== segment_sum) ----
        h_src = jnp.dot(src1h, h, preferred_element_type=jnp.float32)   # h[src]
        msg = jnp.maximum(h_src + e_ref[l], 0.0)                        # relu(h_j + e_ij)
        aggr = jnp.dot(dst1h, msg, preferred_element_type=jnp.float32)  # scatter-add by dst
        # TODO(synk): learnable GIN eps treated as its init value 0 -> (1+eps)=1
        z = h + aggr

        # ---- GIN MLP (Linear -> ReLU -> Linear) with eval-BatchNorm folded in ----
        hid = jnp.maximum(
            jnp.dot(z, w1_ref[l], preferred_element_type=jnp.float32) + b1_ref[l], 0.0)
        y = jnp.dot(hid, w2_ref[l], preferred_element_type=jnp.float32) + b2_ref[l]

        # ---- multi-head attention, batched over graphs (no grid) ----
        qkv = jnp.dot(y, wqkv_ref[l], preferred_element_type=jnp.float32) + bqkv_ref[l]
        q = qkv[:, :D].reshape(b_graphs, s_nodes, D)      # 1/sqrt(dh) folded into Wq/bq
        k = qkv[:, D:2 * D].reshape(b_graphs, s_nodes, D)
        v = qkv[:, 2 * D:].reshape(b_graphs, s_nodes, D)

        wo_l = wo_ref[l]
        acc = jnp.zeros((b_graphs * s_nodes, D), jnp.float32)
        for hh in range(n_head):                          # static head loop
            qh = q[:, :, hh * dh:(hh + 1) * dh]           # [B, S, dh]
            kh = k[:, :, hh * dh:(hh + 1) * dh]
            vh = v[:, :, hh * dh:(hh + 1) * dh]
            s = jnp.einsum('bqd,bkd->bqk', qh, kh,
                           preferred_element_type=jnp.float32)          # [B, S, S]
            s = s - jnp.max(s, axis=-1, keepdims=True)
            p = jnp.exp(s)
            p = p * pl.reciprocal(jnp.sum(p, axis=-1, keepdims=True), approx=True)
            oh = jnp.einsum('bqk,bkd->bqd', p, vh,
                            preferred_element_type=jnp.float32)         # [B, S, dh]
            # concat(heads) @ Wo == sum_h head_h @ Wo[h*dh:(h+1)*dh, :]
            acc = acc + jnp.dot(oh.reshape(b_graphs * s_nodes, dh),
                                wo_l[hh * dh:(hh + 1) * dh, :],
                                preferred_element_type=jnp.float32)
        h = acc + bo_ref[l]

        if l != num_layers - 1:                           # F.relu for non-last layers
            h = jnp.maximum(h, 0.0)
        # dropout(p=0.1): identity in eval mode

    out_ref[...] = h                                      # single HBM writeback


# ------------------------- host-side param/input folding ---------------------
def prepare_inputs(params, x, pos, edge_index, bond_length, edge_attr):
    enc = params["encoder"]
    # atom encoder: single gather (N,9,D) + sum + pos linear
    atom_g = enc["atom_emb"][jnp.arange(N_FEATURES), x, :]          # [N, 9, D]
    h0 = atom_g.sum(axis=1) + pos @ enc["pos_w"] + enc["pos_b"]     # [N, D]

    # per-layer edge embeddings (independent of h -> precompute once)
    def edge_embed(edge_emb, bond_w):
        g = edge_emb[jnp.arange(N_EDGE_FEATURES), edge_attr, :]     # [E, 3, D]
        return g.sum(axis=1) + bond_length[:, None] * bond_w[None, :]
    edge_emb_all = jnp.stack([lp["edge_emb"] for lp in params["layers"]])
    bond_w_all = jnp.stack([lp["bond_w"] for lp in params["layers"]])
    e_all = jax.vmap(edge_embed)(edge_emb_all, bond_w_all)          # [L, E, D]

    # dense one-hot gather/scatter operators for the in-kernel aggregation
    src, dst = edge_index[0], edge_index[1]
    src1h = jax.nn.one_hot(src, N_NODES, dtype=jnp.float32)         # [E, N]
    dst1h = jax.nn.one_hot(dst, N_NODES, dtype=jnp.float32).T       # [N, E]

    # fold eval-BatchNorm into w2/b2, fold 1/sqrt(dh) into Wq/bq, pack QKV
    att_scale = 1.0 / float((EMB_DIM // N_HEAD) ** 0.5)
    w1l, b1l, w2l, b2l, wqkvl, bqkvl, wol, bol = [], [], [], [], [], [], [], []
    for lp in params["layers"]:
        bn_scale = lp["bn_gamma"] * jax.lax.rsqrt(lp["bn_var"] + BN_EPS)   # [1, D]
        w1l.append(lp["w1"])
        b1l.append(lp["b1"])
        w2l.append(lp["w2"] * bn_scale)
        b2l.append((lp["b2"] - lp["bn_mean"]) * bn_scale + lp["bn_beta"])
        wqkvl.append(jnp.concatenate([lp["wq"] * att_scale, lp["wk"], lp["wv"]], axis=1))
        bqkvl.append(jnp.concatenate([lp["bq"] * att_scale, lp["bk"], lp["bv"]], axis=1))
        wol.append(lp["wo"])
        bol.append(lp["bo"])

    st = jnp.stack
    return (h0, e_all, src1h, dst1h,
            st(w1l), st(b1l), st(w2l), st(b2l),
            st(wqkvl), st(bqkvl), st(wol), st(bol))


def gin_node_embedding_forward(params, x, edge_index, bond_length, edge_attr, pos):
    args = prepare_inputs(params, x, pos, edge_index, bond_length, edge_attr)
    kernel = functools.partial(fused_gin_kernel,
                               num_layers=NUM_LAYERS, n_head=N_HEAD,
                               b_graphs=B_GRAPHS, s_nodes=S_NODES)
    vmem = pl.BlockSpec(memory_space=pltpu.MemorySpace.VMEM)
    return pl.pallas_call(
        kernel,
        out_shape=jax.ShapeDtypeStruct((N_NODES, EMB_DIM), jnp.float32),
        in_specs=[vmem] * len(args),
        out_specs=vmem,
    )(*args)


forward_jit = jax.jit(gin_node_embedding_forward)


# --------------------------- deterministic params ----------------------------
def init_params(key):
    def nrm(k, shape, scale=0.1):
        return scale * jax.random.normal(k, shape, dtype=jnp.float32)

    keys = iter(jax.random.split(key, 64))
    enc = {
        "atom_emb": nrm(next(keys), (N_FEATURES, ATOM_VOCAB, EMB_DIM)),
        "pos_w": nrm(next(keys), (3, EMB_DIM)),
        "pos_b": nrm(next(keys), (EMB_DIM,)),
    }
    layers = []
    for _ in range(NUM_LAYERS):
        layers.append({
            # GINConv
            "edge_emb": nrm(next(keys), (N_EDGE_FEATURES, EDGE_VOCAB, EMB_DIM)),
            "bond_w": nrm(next(keys), (EMB_DIM,)),
            "w1": nrm(next(keys), (EMB_DIM, 2 * EMB_DIM)),
            "b1": nrm(next(keys), (1, 2 * EMB_DIM)),
            "w2": nrm(next(keys), (2 * EMB_DIM, EMB_DIM)),
            "b2": nrm(next(keys), (1, EMB_DIM)),
            # BatchNorm1d (running stats, eval mode)
            "bn_gamma": jnp.ones((1, EMB_DIM), jnp.float32),
            "bn_beta": jnp.zeros((1, EMB_DIM), jnp.float32),
            "bn_mean": jnp.zeros((1, EMB_DIM), jnp.float32),
            "bn_var": jnp.ones((1, EMB_DIM), jnp.float32),
            # MultiHeadAttention
            "wq": nrm(next(keys), (EMB_DIM, EMB_DIM)),
            "wk": nrm(next(keys), (EMB_DIM, EMB_DIM)),
            "wv": nrm(next(keys), (EMB_DIM, EMB_DIM)),
            "wo": nrm(next(keys), (EMB_DIM, EMB_DIM)),
            "bq": nrm(next(keys), (1, EMB_DIM)),
            "bk": nrm(next(keys), (1, EMB_DIM)),
            "bv": nrm(next(keys), (1, EMB_DIM)),
            "bo": nrm(next(keys), (1, EMB_DIM)),
        })
    return {"encoder": enc, "layers": layers}


# ----------------------------------- main ------------------------------------
if __name__ == "__main__":
    key = jax.random.PRNGKey(0)
    k_p, k_x, k_pos, k_src, k_dst, k_ea, k_bl = jax.random.split(key, 7)

    params = init_params(k_p)

    # batched_data fields (synthetic, deterministic)
    x = jax.random.randint(k_x, (N_NODES, N_FEATURES), 0, ATOM_VOCAB, dtype=jnp.int32)
    pos = jax.random.normal(k_pos, (N_NODES, 3), dtype=jnp.float32)

    src_local = jax.random.randint(k_src, (B_GRAPHS, E_PER_GRAPH), 0, S_NODES, dtype=jnp.int32)
    dst_local = jax.random.randint(k_dst, (B_GRAPHS, E_PER_GRAPH), 0, S_NODES, dtype=jnp.int32)
    offsets = (jnp.arange(B_GRAPHS, dtype=jnp.int32) * S_NODES)[:, None]
    edge_index = jnp.stack([(src_local + offsets).reshape(-1),
                            (dst_local + offsets).reshape(-1)], axis=0)
    edge_attr = jax.random.randint(k_ea, (N_EDGES, N_EDGE_FEATURES), 0, EDGE_VOCAB, dtype=jnp.int32)
    bond_length = jax.random.uniform(k_bl, (N_EDGES,), dtype=jnp.float32, minval=0.8, maxval=2.0)

    node_repr = forward_jit(params, x, edge_index, bond_length, edge_attr, pos)
    node_repr = jax.block_until_ready(node_repr)

    assert node_repr.shape == (N_NODES, EMB_DIM)
    assert jnp.all(jnp.isfinite(node_repr))
    print("KERNEL_OK")
</pallas_src>

<mosaic_0001>
module attributes {stable_mosaic.version = 11 : i64} {
  func.func @fused_gin_kernel(%arg0: memref<16x32xf32, #tpu.memory_space<vmem>>, %arg1: memref<2x32x32xf32, #tpu.memory_space<vmem>>, %arg2: memref<32x16xf32, #tpu.memory_space<vmem>>, %arg3: memref<16x32xf32, #tpu.memory_space<vmem>>, %arg4: memref<2x32x64xf32, #tpu.memory_space<vmem>>, %arg5: memref<2x1x64xf32, #tpu.memory_space<vmem>>, %arg6: memref<2x64x32xf32, #tpu.memory_space<vmem>>, %arg7: memref<2x1x32xf32, #tpu.memory_space<vmem>>, %arg8: memref<2x32x96xf32, #tpu.memory_space<vmem>>, %arg9: memref<2x1x96xf32, #tpu.memory_space<vmem>>, %arg10: memref<2x32x32xf32, #tpu.memory_space<vmem>>, %arg11: memref<2x1x32xf32, #tpu.memory_space<vmem>>, %arg12: memref<16x32xf32, #tpu.memory_space<vmem>>) attributes {dimension_semantics = [], scalar_prefetch = 0 : i64, scratch_operands = 0 : i64, tpu.core_type = #tpu.core_type<tc>} {
    %c0 = arith.constant 0 : index
    %c0_0 = arith.constant 0 : index
    %0 = vector.load %arg0[%c0, %c0_0] : memref<16x32xf32, #tpu.memory_space<vmem>>, vector<16x32xf32>
    %c0_1 = arith.constant 0 : index
    %c0_2 = arith.constant 0 : index
    %1 = vector.load %arg2[%c0_1, %c0_2] : memref<32x16xf32, #tpu.memory_space<vmem>>, vector<32x16xf32>
    %c0_3 = arith.constant 0 : index
    %c0_4 = arith.constant 0 : index
    %2 = vector.load %arg3[%c0_3, %c0_4] : memref<16x32xf32, #tpu.memory_space<vmem>>, vector<16x32xf32>
    %cst = arith.constant dense<0.000000e+00> : vector<32x32xf32>
    %3 = tpu.matmul %1, %0, %cst {dimension_numbers = #tpu.dot_dimension_numbers<[1], [0], [0], [1], [0, 0, 1, 1], [], []>} : vector<32x16xf32>, vector<16x32xf32>, vector<32x32xf32> -> vector<32x32xf32>
    %c0_5 = arith.constant 0 : index
    %c0_6 = arith.constant 0 : index
    %c0_7 = arith.constant 0 : index
    %4 = vector.load %arg1[%c0_5, %c0_6, %c0_7] : memref<2x32x32xf32, #tpu.memory_space<vmem>>, vector<1x32x32xf32>
    %5 = vector.shape_cast %4 : vector<1x32x32xf32> to vector<32x32xf32>
    %6 = arith.addf %3, %5 : vector<32x32xf32>
    %cst_8 = arith.constant 0.000000e+00 : f32
    %7 = vector.broadcast %cst_8 : f32 to vector<32x32xf32>
    %8 = arith.maximumf %6, %7 : vector<32x32xf32>
    %cst_9 = arith.constant dense<0.000000e+00> : vector<16x32xf32>
    %9 = tpu.matmul %2, %8, %cst_9 {dimension_numbers = #tpu.dot_dimension_numbers<[1], [0], [0], [1], [0, 0, 1, 1], [], []>} : vector<16x32xf32>, vector<32x32xf32>, vector<16x32xf32> -> vector<16x32xf32>
    %10 = arith.addf %0, %9 : vector<16x32xf32>
    %c0_10 = arith.constant 0 : index
    %c0_11 = arith.constant 0 : index
    %c0_12 = arith.constant 0 : index
    %11 = vector.load %arg4[%c0_10, %c0_11, %c0_12] : memref<2x32x64xf32, #tpu.memory_space<vmem>>, vector<1x32x64xf32>
    %12 = vector.shape_cast %11 : vector<1x32x64xf32> to vector<32x64xf32>
    %cst_13 = arith.constant dense<0.000000e+00> : vector<16x64xf32>
    %13 = tpu.matmul %10, %12, %cst_13 {dimension_numbers = #tpu.dot_dimension_numbers<[1], [0], [0], [1], [0, 0, 1, 1], [], []>} : vector<16x32xf32>, vector<32x64xf32>, vector<16x64xf32> -> vector<16x64xf32>
    %c0_14 = arith.constant 0 : index
    %c0_15 = arith.constant 0 : index
    %c0_16 = arith.constant 0 : index
    %14 = vector.load %arg5[%c0_14, %c0_15, %c0_16] : memref<2x1x64xf32, #tpu.memory_space<vmem>>, vector<1x1x64xf32>
    %15 = vector.shape_cast %14 : vector<1x1x64xf32> to vector<1x64xf32>
    %16 = vector.broadcast %15 : vector<1x64xf32> to vector<16x64xf32>
    %17 = arith.addf %13, %16 : vector<16x64xf32>
    %cst_17 = arith.constant 0.000000e+00 : f32
    %18 = vector.broadcast %cst_17 : f32 to vector<16x64xf32>
    %19 = arith.maximumf %17, %18 : vector<16x64xf32>
    %c0_18 = arith.constant 0 : index
    %c0_19 = arith.constant 0 : index
    %c0_20 = arith.constant 0 : index
    %20 = vector.load %arg6[%c0_18, %c0_19, %c0_20] : memref<2x64x32xf32, #tpu.memory_space<vmem>>, vector<1x64x32xf32>
    %21 = vector.shape_cast %20 : vector<1x64x32xf32> to vector<64x32xf32>
    %cst_21 = arith.constant dense<0.000000e+00> : vector<16x32xf32>
    %22 = tpu.matmul %19, %21, %cst_21 {dimension_numbers = #tpu.dot_dimension_numbers<[1], [0], [0], [1], [0, 0, 1, 1], [], []>} : vector<16x64xf32>, vector<64x32xf32>, vector<16x32xf32> -> vector<16x32xf32>
    %c0_22 = arith.constant 0 : index
    %c0_23 = arith.constant 0 : index
    %c0_24 = arith.constant 0 : index
    %23 = vector.load %arg7[%c0_22, %c0_23, %c0_24] : memref<2x1x32xf32, #tpu.memory_space<vmem>>, vector<1x1x32xf32>
    %24 = vector.shape_cast %23 : vector<1x1x32xf32> to vector<1x32xf32>
    %25 = vector.broadcast %24 : vector<1x32xf32> to vector<16x32xf32>
    %26 = arith.addf %22, %25 : vector<16x32xf32>
    %c0_25 = arith.constant 0 : index
    %c0_26 = arith.constant 0 : index
    %c0_27 = arith.constant 0 : index
    %27 = vector.load %arg8[%c0_25, %c0_26, %c0_27] : memref<2x32x96xf32, #tpu.memory_space<vmem>>, vector<1x32x96xf32>
    %28 = vector.shape_cast %27 : vector<1x32x96xf32> to vector<32x96xf32>
    %cst_28 = arith.constant dense<0.000000e+00> : vector<16x96xf32>
    %29 = tpu.matmul %26, %28, %cst_28 {dimension_numbers = #tpu.dot_dimension_numbers<[1], [0], [0], [1], [0, 0, 1, 1], [], []>} : vector<16x32xf32>, vector<32x96xf32>, vector<16x96xf32> -> vector<16x96xf32>
    %c0_29 = arith.constant 0 : index
    %c0_30 = arith.constant 0 : index
    %c0_31 = arith.constant 0 : index
    %30 = vector.load %arg9[%c0_29, %c0_30, %c0_31] : memref<2x1x96xf32, #tpu.memory_space<vmem>>, vector<1x1x96xf32>
    %31 = vector.shape_cast %30 : vector<1x1x96xf32> to vector<1x96xf32>
    %32 = vector.broadcast %31 : vector<1x96xf32> to vector<16x96xf32>
    %33 = arith.addf %29, %32 : vector<16x96xf32>
    %34 = vector.extract_strided_slice %33 {offsets = [0, 0], sizes = [16, 32], strides = [1, 1]} : vector<16x96xf32> to vector<16x32xf32>
    %35 = vector.shape_cast %34 : vector<16x32xf32> to vector<2x8x32xf32>
    %36 = vector.extract_strided_slice %33 {offsets = [0, 32], sizes = [16, 32], strides = [1, 1]} : vector<16x96xf32> to vector<16x32xf32>
    %37 = vector.shape_cast %36 : vector<16x32xf32> to vector<2x8x32xf32>
    %38 = vector.extract_strided_slice %33 {offsets = [0, 64], sizes = [16, 32], strides = [1, 1]} : vector<16x96xf32> to vector<16x32xf32>
    %39 = vector.shape_cast %38 : vector<16x32xf32> to vector<2x8x32xf32>
    %c0_32 = arith.constant 0 : index
    %c0_33 = arith.constant 0 : index
    %c0_34 = arith.constant 0 : index
    %40 = vector.load %arg10[%c0_32, %c0_33, %c0_34] : memref<2x32x32xf32, #tpu.memory_space<vmem>>, vector<1x32x32xf32>
    %41 = vector.shape_cast %40 : vector<1x32x32xf32> to vector<32x32xf32>
    %cst_35 = arith.constant 0.000000e+00 : f32
    %42 = vector.broadcast %cst_35 : f32 to vector<16x32xf32>
    %43 = vector.extract_strided_slice %35 {offsets = [0, 0, 0], sizes = [2, 8, 8], strides = [1, 1, 1]} : vector<2x8x32xf32> to vector<2x8x8xf32>
    %44 = vector.extract_strided_slice %37 {offsets = [0, 0, 0], sizes = [2, 8, 8], strides = [1, 1, 1]} : vector<2x8x32xf32> to vector<2x8x8xf32>
    %45 = vector.extract_strided_slice %39 {offsets = [0, 0, 0], sizes = [2, 8, 8], strides = [1, 1, 1]} : vector<2x8x32xf32> to vector<2x8x8xf32>
    "tpu.trace_start"() <{level = 10 : i32, message = "bqd,bkd->bqk"}> : () -> ()
    %cst_36 = arith.constant dense<0.000000e+00> : vector<2x8x8xf32>
    %46 = tpu.matmul %43, %44, %cst_36 {dimension_numbers = #tpu.dot_dimension_numbers<[2], [2], [1], [1], [0, 0, 0, 1, 1, 1], [0], [0]>} : vector<2x8x8xf32>, vector<2x8x8xf32>, vector<2x8x8xf32> -> vector<2x8x8xf32>
    "tpu.trace_stop"() : () -> ()
    %cst_37 = arith.constant dense<0xFF800000> : vector<2x8xf32>
    %47 = vector.multi_reduction <maximumf>, %46, %cst_37 [2] : vector<2x8x8xf32> to vector<2x8xf32>
    %48 = vector.shape_cast %47 : vector<2x8xf32> to vector<2x8x1xf32>
    %49 = vector.broadcast %48 : vector<2x8x1xf32> to vector<2x8x8xf32>
    %50 = arith.subf %46, %49 : vector<2x8x8xf32>
    %51 = math.exp %50 : vector<2x8x8xf32>
    %cst_38 = arith.constant dense<0.000000e+00> : vector<2x8xf32>
    %52 = vector.multi_reduction <add>, %51, %cst_38 [2] : vector<2x8x8xf32> to vector<2x8xf32>
    %53 = vector.shape_cast %52 : vector<2x8xf32> to vector<2x8x1xf32>
    %54 = tpu.reciprocal %53 {approx = true} : vector<2x8x1xf32> -> vector<2x8x1xf32>
    %55 = vector.broadcast %54 : vector<2x8x1xf32> to vector<2x8x8xf32>
    %56 = arith.mulf %51, %55 : vector<2x8x8xf32>
    "tpu.trace_start"() <{level = 10 : i32, message = "bqk,bkd->bqd"}> : () -> ()
    %cst_39 = arith.constant dense<0.000000e+00> : vector<2x8x8xf32>
    %57 = tpu.matmul %56, %45, %cst_39 {dimension_numbers = #tpu.dot_dimension_numbers<[2], [1], [1], [2], [0, 0, 0, 1, 1, 2], [0], [0]>} : vector<2x8x8xf32>, vector<2x8x8xf32>, vector<2x8x8xf32> -> vector<2x8x8xf32>
    "tpu.trace_stop"() : () -> ()
    %58 = vector.shape_cast %57 : vector<2x8x8xf32> to vector<16x8xf32>
    %59 = vector.extract_strided_slice %41 {offsets = [0, 0], sizes = [8, 32], strides = [1, 1]} : vector<32x32xf32> to vector<8x32xf32>
    %cst_40 = arith.constant dense<0.000000e+00> : vector<16x32xf32>
    %60 = tpu.matmul %58, %59, %cst_40 {dimension_numbers = #tpu.dot_dimension_numbers<[1], [0], [0], [1], [0, 0, 1, 1], [], []>} : vector<16x8xf32>, vector<8x32xf32>, vector<16x32xf32> -> vector<16x32xf32>
    %61 = arith.addf %42, %60 : vector<16x32xf32>
    %62 = vector.extract_strided_slice %35 {offsets = [0, 0, 8], sizes = [2, 8, 8], strides = [1, 1, 1]} : vector<2x8x32xf32> to vector<2x8x8xf32>
    %63 = vector.extract_strided_slice %37 {offsets = [0, 0, 8], sizes = [2, 8, 8], strides = [1, 1, 1]} : vector<2x8x32xf32> to vector<2x8x8xf32>
    %64 = vector.extract_strided_slice %39 {offsets = [0, 0, 8], sizes = [2, 8, 8], strides = [1, 1, 1]} : vector<2x8x32xf32> to vector<2x8x8xf32>
    "tpu.trace_start"() <{level = 10 : i32, message = "bqd,bkd->bqk"}> : () -> ()
    %cst_41 = arith.constant dense<0.000000e+00> : vector<2x8x8xf32>
    %65 = tpu.matmul %62, %63, %cst_41 {dimension_numbers = #tpu.dot_dimension_numbers<[2], [2], [1], [1], [0, 0, 0, 1, 1, 1], [0], [0]>} : vector<2x8x8xf32>, vector<2x8x8xf32>, vector<2x8x8xf32> -> vector<2x8x8xf32>
    "tpu.trace_stop"() : () -> ()
    %cst_42 = arith.constant dense<0xFF800000> : vector<2x8xf32>
    %66 = vector.multi_reduction <maximumf>, %65, %cst_42 [2] : vector<2x8x8xf32> to vector<2x8xf32>
    %67 = vector.shape_cast %66 : vector<2x8xf32> to vector<2x8x1xf32>
    %68 = vector.broadcast %67 : vector<2x8x1xf32> to vector<2x8x8xf32>
    %69 = arith.subf %65, %68 : vector<2x8x8xf32>
    %70 = math.exp %69 : vector<2x8x8xf32>
    %cst_43 = arith.constant dense<0.000000e+00> : vector<2x8xf32>
    %71 = vector.multi_reduction <add>, %70, %cst_43 [2] : vector<2x8x8xf32> to vector<2x8xf32>
    %72 = vector.shape_cast %71 : vector<2x8xf32> to vector<2x8x1xf32>
    %73 = tpu.reciprocal %72 {approx = true} : vector<2x8x1xf32> -> vector<2x8x1xf32>
    %74 = vector.broadcast %73 : vector<2x8x1xf32> to vector<2x8x8xf32>
    %75 = arith.mulf %70, %74 : vector<2x8x8xf32>
    "tpu.trace_start"() <{level = 10 : i32, message = "bqk,bkd->bqd"}> : () -> ()
    %cst_44 = arith.constant dense<0.000000e+00> : vector<2x8x8xf32>
    %76 = tpu.matmul %75, %64, %cst_44 {dimension_numbers = #tpu.dot_dimension_numbers<[2], [1], [1], [2], [0, 0, 0, 1, 1, 2], [0], [0]>} : vector<2x8x8xf32>, vector<2x8x8xf32>, vector<2x8x8xf32> -> vector<2x8x8xf32>
    "tpu.trace_stop"() : () -> ()
    %77 = vector.shape_cast %76 : vector<2x8x8xf32> to vector<16x8xf32>
    %78 = vector.extract_strided_slice %41 {offsets = [8, 0], sizes = [8, 32], strides = [1, 1]} : vector<32x32xf32> to vector<8x32xf32>
    %cst_45 = arith.constant dense<0.000000e+00> : vector<16x32xf32>
    %79 = tpu.matmul %77, %78, %cst_45 {dimension_numbers = #tpu.dot_dimension_numbers<[1], [0], [0], [1], [0, 0, 1, 1], [], []>} : vector<16x8xf32>, vector<8x32xf32>, vector<16x32xf32> -> vector<16x32xf32>
    %80 = arith.addf %61, %79 : vector<16x32xf32>
    %81 = vector.extract_strided_slice %35 {offsets = [0, 0, 16], sizes = [2, 8, 8], strides = [1, 1, 1]} : vector<2x8x32xf32> to vector<2x8x8xf32>
    %82 = vector.extract_strided_slice %37 {offsets = [0, 0, 16], sizes = [2, 8, 8], strides = [1, 1, 1]} : vector<2x8x32xf32> to vector<2x8x8xf32>
    %83 = vector.extract_strided_slice %39 {offsets = [0, 0, 16], sizes = [2, 8, 8], strides = [1, 1, 1]} : vector<2x8x32xf32> to vector<2x8x8xf32>
    "tpu.trace_start"() <{level = 10 : i32, message = "bqd,bkd->bqk"}> : () -> ()
    %cst_46 = arith.constant dense<0.000000e+00> : vector<2x8x8xf32>
    %84 = tpu.matmul %81, %82, %cst_46 {dimension_numbers = #tpu.dot_dimension_numbers<[2], [2], [1], [1], [0, 0, 0, 1, 1, 1], [0], [0]>} : vector<2x8x8xf32>, vector<2x8x8xf32>, vector<2x8x8xf32> -> vector<2x8x8xf32>
    "tpu.trace_stop"() : () -> ()
    %cst_47 = arith.constant dense<0xFF800000> : vector<2x8xf32>
    %85 = vector.multi_reduction <maximumf>, %84, %cst_47 [2] : vector<2x8x8xf32> to vector<2x8xf32>
    %86 = vector.shape_cast %85 : vector<2x8xf32> to vector<2x8x1xf32>
    %87 = vector.broadcast %86 : vector<2x8x1xf32> to vector<2x8x8xf32>
    %88 = arith.subf %84, %87 : vector<2x8x8xf32>
    %89 = math.exp %88 : vector<2x8x8xf32>
    %cst_48 = arith.constant dense<0.000000e+00> : vector<2x8xf32>
    %90 = vector.multi_reduction <add>, %89, %cst_48 [2] : vector<2x8x8xf32> to vector<2x8xf32>
    %91 = vector.shape_cast %90 : vector<2x8xf32> to vector<2x8x1xf32>
    %92 = tpu.reciprocal %91 {approx = true} : vector<2x8x1xf32> -> vector<2x8x1xf32>
    %93 = vector.broadcast %92 : vector<2x8x1xf32> to vector<2x8x8xf32>
    %94 = arith.mulf %89, %93 : vector<2x8x8xf32>
    "tpu.trace_start"() <{level = 10 : i32, message = "bqk,bkd->bqd"}> : () -> ()
    %cst_49 = arith.constant dense<0.000000e+00> : vector<2x8x8xf32>
    %95 = tpu.matmul %94, %83, %cst_49 {dimension_numbers = #tpu.dot_dimension_numbers<[2], [1], [1], [2], [0, 0, 0, 1, 1, 2], [0], [0]>} : vector<2x8x8xf32>, vector<2x8x8xf32>, vector<2x8x8xf32> -> vector<2x8x8xf32>
    "tpu.trace_stop"() : () -> ()
    %96 = vector.shape_cast %95 : vector<2x8x8xf32> to vector<16x8xf32>
    %97 = vector.extract_strided_slice %41 {offsets = [16, 0], sizes = [8, 32], strides = [1, 1]} : vector<32x32xf32> to vector<8x32xf32>
    %cst_50 = arith.constant dense<0.000000e+00> : vector<16x32xf32>
    %98 = tpu.matmul %96, %97, %cst_50 {dimension_numbers = #tpu.dot_dimension_numbers<[1], [0], [0], [1], [0, 0, 1, 1], [], []>} : vector<16x8xf32>, vector<8x32xf32>, vector<16x32xf32> -> vector<16x32xf32>
    %99 = arith.addf %80, %98 : vector<16x32xf32>
    %100 = vector.extract_strided_slice %35 {offsets = [0, 0, 24], sizes = [2, 8, 8], strides = [1, 1, 1]} : vector<2x8x32xf32> to vector<2x8x8xf32>
    %101 = vector.extract_strided_slice %37 {offsets = [0, 0, 24], sizes = [2, 8, 8], strides = [1, 1, 1]} : vector<2x8x32xf32> to vector<2x8x8xf32>
    %102 = vector.extract_strided_slice %39 {offsets = [0, 0, 24], sizes = [2, 8, 8], strides = [1, 1, 1]} : vector<2x8x32xf32> to vector<2x8x8xf32>
    "tpu.trace_start"() <{level = 10 : i32, message = "bqd,bkd->bqk"}> : () -> ()
    %cst_51 = arith.constant dense<0.000000e+00> : vector<2x8x8xf32>
    %103 = tpu.matmul %100, %101, %cst_51 {dimension_numbers = #tpu.dot_dimension_numbers<[2], [2], [1], [1], [0, 0, 0, 1, 1, 1], [0], [0]>} : vector<2x8x8xf32>, vector<2x8x8xf32>, vector<2x8x8xf32> -> vector<2x8x8xf32>
    "tpu.trace_stop"() : () -> ()
    %cst_52 = arith.constant dense<0xFF800000> : vector<2x8xf32>
    %104 = vector.multi_reduction <maximumf>, %103, %cst_52 [2] : vector<2x8x8xf32> to vector<2x8xf32>
    %105 = vector.shape_cast %104 : vector<2x8xf32> to vector<2x8x1xf32>
    %106 = vector.broadcast %105 : vector<2x8x1xf32> to vector<2x8x8xf32>
    %107 = arith.subf %103, %106 : vector<2x8x8xf32>
    %108 = math.exp %107 : vector<2x8x8xf32>
    %cst_53 = arith.constant dense<0.000000e+00> : vector<2x8xf32>
    %109 = vector.multi_reduction <add>, %108, %cst_53 [2] : vector<2x8x8xf32> to vector<2x8xf32>
    %110 = vector.shape_cast %109 : vector<2x8xf32> to vector<2x8x1xf32>
    %111 = tpu.reciprocal %110 {approx = true} : vector<2x8x1xf32> -> vector<2x8x1xf32>
    %112 = vector.broadcast %111 : vector<2x8x1xf32> to vector<2x8x8xf32>
    %113 = arith.mulf %108, %112 : vector<2x8x8xf32>
    "tpu.trace_start"() <{level = 10 : i32, message = "bqk,bkd->bqd"}> : () -> ()
    %cst_54 = arith.constant dense<0.000000e+00> : vector<2x8x8xf32>
    %114 = tpu.matmul %113, %102, %cst_54 {dimension_numbers = #tpu.dot_dimension_numbers<[2], [1], [1], [2], [0, 0, 0, 1, 1, 2], [0], [0]>} : vector<2x8x8xf32>, vector<2x8x8xf32>, vector<2x8x8xf32> -> vector<2x8x8xf32>
    "tpu.trace_stop"() : () -> ()
    %115 = vector.shape_cast %114 : vector<2x8x8xf32> to vector<16x8xf32>
    %116 = vector.extract_strided_slice %41 {offsets = [24, 0], sizes = [8, 32], strides = [1, 1]} : vector<32x32xf32> to vector<8x32xf32>
    %cst_55 = arith.constant dense<0.000000e+00> : vector<16x32xf32>
    %117 = tpu.matmul %115, %116, %cst_55 {dimension_numbers = #tpu.dot_dimension_numbers<[1], [0], [0], [1], [0, 0, 1, 1], [], []>} : vector<16x8xf32>, vector<8x32xf32>, vector<16x32xf32> -> vector<16x32xf32>
    %118 = arith.addf %99, %117 : vector<16x32xf32>
    %c0_56 = arith.constant 0 : index
    %c0_57 = arith.constant 0 : index
    %c0_58 = arith.constant 0 : index
    %119 = vector.load %arg11[%c0_56, %c0_57, %c0_58] : memref<2x1x32xf32, #tpu.memory_space<vmem>>, vector<1x1x32xf32>
    %120 = vector.shape_cast %119 : vector<1x1x32xf32> to vector<1x32xf32>
    %121 = vector.broadcast %120 : vector<1x32xf32> to vector<16x32xf32>
    %122 = arith.addf %118, %121 : vector<16x32xf32>
    %cst_59 = arith.constant 0.000000e+00 : f32
    %123 = vector.broadcast %cst_59 : f32 to vector<16x32xf32>
    %124 = arith.maximumf %122, %123 : vector<16x32xf32>
    %cst_60 = arith.constant dense<0.000000e+00> : vector<32x32xf32>
    %125 = tpu.matmul %1, %124, %cst_60 {dimension_numbers = #tpu.dot_dimension_numbers<[1], [0], [0], [1], [0, 0, 1, 1], [], []>} : vector<32x16xf32>, vector<16x32xf32>, vector<32x32xf32> -> vector<32x32xf32>
    %c1 = arith.constant 1 : index
    %c0_61 = arith.constant 0 : index
    %c0_62 = arith.constant 0 : index
    %126 = vector.load %arg1[%c1, %c0_61, %c0_62] : memref<2x32x32xf32, #tpu.memory_space<vmem>>, vector<1x32x32xf32>
    %127 = vector.shape_cast %126 : vector<1x32x32xf32> to vector<32x32xf32>
    %128 = arith.addf %125, %127 : vector<32x32xf32>
    %cst_63 = arith.constant 0.000000e+00 : f32
    %129 = vector.broadcast %cst_63 : f32 to vector<32x32xf32>
    %130 = arith.maximumf %128, %129 : vector<32x32xf32>
    %cst_64 = arith.constant dense<0.000000e+00> : vector<16x32xf32>
    %131 = tpu.matmul %2, %130, %cst_64 {dimension_numbers = #tpu.dot_dimension_numbers<[1], [0], [0], [1], [0, 0, 1, 1], [], []>} : vector<16x32xf32>, vector<32x32xf32>, vector<16x32xf32> -> vector<16x32xf32>
    %132 = arith.addf %124, %131 : vector<16x32xf32>
    %c1_65 = arith.constant 1 : index
    %c0_66 = arith.constant 0 : index
    %c0_67 = arith.constant 0 : index
    %133 = vector.load %arg4[%c1_65, %c0_66, %c0_67] : memref<2x32x64xf32, #tpu.memory_space<vmem>>, vector<1x32x64xf32>
    %134 = vector.shape_cast %133 : vector<1x32x64xf32> to vector<32x64xf32>
    %cst_68 = arith.constant dense<0.000000e+00> : vector<16x64xf32>
    %135 = tpu.matmul %132, %134, %cst_68 {dimension_numbers = #tpu.dot_dimension_numbers<[1], [0], [0], [1], [0, 0, 1, 1], [], []>} : vector<16x32xf32>, vector<32x64xf32>, vector<16x64xf32> -> vector<16x64xf32>
    %c1_69 = arith.constant 1 : index
    %c0_70 = arith.constant 0 : index
    %c0_71 = arith.constant 0 : index
    %136 = vector.load %arg5[%c1_69, %c0_70, %c0_71] : memref<2x1x64xf32, #tpu.memory_space<vmem>>, vector<1x1x64xf32>
    %137 = vector.shape_cast %136 : vector<1x1x64xf32> to vector<1x64xf32>
    %138 = vector.broadcast %137 : vector<1x64xf32> to vector<16x64xf32>
    %139 = arith.addf %135, %138 : vector<16x64xf32>
    %cst_72 = arith.constant 0.000000e+00 : f32
    %140 = vector.broadcast %cst_72 : f32 to vector<16x64xf32>
    %141 = arith.maximumf %139, %140 : vector<16x64xf32>
    %c1_73 = arith.constant 1 : index
    %c0_74 = arith.constant 0 : index
    %c0_75 = arith.constant 0 : index
    %142 = vector.load %arg6[%c1_73, %c0_74, %c0_75] : memref<2x64x32xf32, #tpu.memory_space<vmem>>, vector<1x64x32xf32>
    %143 = vector.shape_cast %142 : vector<1x64x32xf32> to vector<64x32xf32>
    %cst_76 = arith.constant dense<0.000000e+00> : vector<16x32xf32>
    %144 = tpu.matmul %141, %143, %cst_76 {dimension_numbers = #tpu.dot_dimension_numbers<[1], [0], [0], [1], [0, 0, 1, 1], [], []>} : vector<16x64xf32>, vector<64x32xf32>, vector<16x32xf32> -> vector<16x32xf32>
    %c1_77 = arith.constant 1 : index
    %c0_78 = arith.constant 0 : index
    %c0_79 = arith.constant 0 : index
    %145 = vector.load %arg7[%c1_77, %c0_78, %c0_79] : memref<2x1x32xf32, #tpu.memory_space<vmem>>, vector<1x1x32xf32>
    %146 = vector.shape_cast %145 : vector<1x1x32xf32> to vector<1x32xf32>
    %147 = vector.broadcast %146 : vector<1x32xf32> to vector<16x32xf32>
    %148 = arith.addf %144, %147 : vector<16x32xf32>
    %c1_80 = arith.constant 1 : index
    %c0_81 = arith.constant 0 : index
    %c0_82 = arith.constant 0 : index
    %149 = vector.load %arg8[%c1_80, %c0_81, %c0_82] : memref<2x32x96xf32, #tpu.memory_space<vmem>>, vector<1x32x96xf32>
    %150 = vector.shape_cast %149 : vector<1x32x96xf32> to vector<32x96xf32>
    %cst_83 = arith.constant dense<0.000000e+00> : vector<16x96xf32>
    %151 = tpu.matmul %148, %150, %cst_83 {dimension_numbers = #tpu.dot_dimension_numbers<[1], [0], [0], [1], [0, 0, 1, 1], [], []>} : vector<16x32xf32>, vector<32x96xf32>, vector<16x96xf32> -> vector<16x96xf32>
    %c1_84 = arith.constant 1 : index
    %c0_85 = arith.constant 0 : index
    %c0_86 = arith.constant 0 : index
    %152 = vector.load %arg9[%c1_84, %c0_85, %c0_86] : memref<2x1x96xf32, #tpu.memory_space<vmem>>, vector<1x1x96xf32>
    %153 = vector.shape_cast %152 : vector<1x1x96xf32> to vector<1x96xf32>
    %154 = vector.broadcast %153 : vector<1x96xf32> to vector<16x96xf32>
    %155 = arith.addf %151, %154 : vector<16x96xf32>
    %156 = vector.extract_strided_slice %155 {offsets = [0, 0], sizes = [16, 32], strides = [1, 1]} : vector<16x96xf32> to vector<16x32xf32>
    %157 = vector.shape_cast %156 : vector<16x32xf32> to vector<2x8x32xf32>
    %158 = vector.extract_strided_slice %155 {offsets = [0, 32], sizes = [16, 32], strides = [1, 1]} : vector<16x96xf32> to vector<16x32xf32>
    %159 = vector.shape_cast %158 : vector<16x32xf32> to vector<2x8x32xf32>
    %160 = vector.extract_strided_slice %155 {offsets = [0, 64], sizes = [16, 32], strides = [1, 1]} : vector<16x96xf32> to vector<16x32xf32>
    %161 = vector.shape_cast %160 : vector<16x32xf32> to vector<2x8x32xf32>
    %c1_87 = arith.constant 1 : index
    %c0_88 = arith.constant 0 : index
    %c0_89 = arith.constant 0 : index
    %162 = vector.load %arg10[%c1_87, %c0_88, %c0_89] : memref<2x32x32xf32, #tpu.memory_space<vmem>>, vector<1x32x32xf32>
    %163 = vector.shape_cast %162 : vector<1x32x32xf32> to vector<32x32xf32>
    %cst_90 = arith.constant 0.000000e+00 : f32
    %164 = vector.broadcast %cst_90 : f32 to vector<16x32xf32>
    %165 = vector.extract_strided_slice %157 {offsets = [0, 0, 0], sizes = [2, 8, 8], strides = [1, 1, 1]} : vector<2x8x32xf32> to vector<2x8x8xf32>
    %166 = vector.extract_strided_slice %159 {offsets = [0, 0, 0], sizes = [2, 8, 8], strides = [1, 1, 1]} : vector<2x8x32xf32> to vector<2x8x8xf32>
    %167 = vector.extract_strided_slice %161 {offsets = [0, 0, 0], sizes = [2, 8, 8], strides = [1, 1, 1]} : vector<2x8x32xf32> to vector<2x8x8xf32>
    "tpu.trace_start"() <{level = 10 : i32, message = "bqd,bkd->bqk"}> : () -> ()
    %cst_91 = arith.constant dense<0.000000e+00> : vector<2x8x8xf32>
    %168 = tpu.matmul %165, %166, %cst_91 {dimension_numbers = #tpu.dot_dimension_numbers<[2], [2], [1], [1], [0, 0, 0, 1, 1, 1], [0], [0]>} : vector<2x8x8xf32>, vector<2x8x8xf32>, vector<2x8x8xf32> -> vector<2x8x8xf32>
    "tpu.trace_stop"() : () -> ()
    %cst_92 = arith.constant dense<0xFF800000> : vector<2x8xf32>
    %169 = vector.multi_reduction <maximumf>, %168, %cst_92 [2] : vector<2x8x8xf32> to vector<2x8xf32>
    %170 = vector.shape_cast %169 : vector<2x8xf32> to vector<2x8x1xf32>
    %171 = vector.broadcast %170 : vector<2x8x1xf32> to vector<2x8x8xf32>
    %172 = arith.subf %168, %171 : vector<2x8x8xf32>
    %173 = math.exp %172 : vector<2x8x8xf32>
    %cst_93 = arith.constant dense<0.000000e+00> : vector<2x8xf32>
    %174 = vector.multi_reduction <add>, %173, %cst_93 [2] : vector<2x8x8xf32> to vector<2x8xf32>
    %175 = vector.shape_cast %174 : vector<2x8xf32> to vector<2x8x1xf32>
    %176 = tpu.reciprocal %175 {approx = true} : vector<2x8x1xf32> -> vector<2x8x1xf32>
    %177 = vector.broadcast %176 : vector<2x8x1xf32> to vector<2x8x8xf32>
    %178 = arith.mulf %173, %177 : vector<2x8x8xf32>
    "tpu.trace_start"() <{level = 10 : i32, message = "bqk,bkd->bqd"}> : () -> ()
    %cst_94 = arith.constant dense<0.000000e+00> : vector<2x8x8xf32>
    %179 = tpu.matmul %178, %167, %cst_94 {dimension_numbers = #tpu.dot_dimension_numbers<[2], [1], [1], [2], [0, 0, 0, 1, 1, 2], [0], [0]>} : vector<2x8x8xf32>, vector<2x8x8xf32>, vector<2x8x8xf32> -> vector<2x8x8xf32>
    "tpu.trace_stop"() : () -> ()
    %180 = vector.shape_cast %179 : vector<2x8x8xf32> to vector<16x8xf32>
    %181 = vector.extract_strided_slice %163 {offsets = [0, 0], sizes = [8, 32], strides = [1, 1]} : vector<32x32xf32> to vector<8x32xf32>
    %cst_95 = arith.constant dense<0.000000e+00> : vector<16x32xf32>
    %182 = tpu.matmul %180, %181, %cst_95 {dimension_numbers = #tpu.dot_dimension_numbers<[1], [0], [0], [1], [0, 0, 1, 1], [], []>} : vector<16x8xf32>, vector<8x32xf32>, vector<16x32xf32> -> vector<16x32xf32>
    %183 = arith.addf %164, %182 : vector<16x32xf32>
    %184 = vector.extract_strided_slice %157 {offsets = [0, 0, 8], sizes = [2, 8, 8], strides = [1, 1, 1]} : vector<2x8x32xf32> to vector<2x8x8xf32>
    %185 = vector.extract_strided_slice %159 {offsets = [0, 0, 8], sizes = [2, 8, 8], strides = [1, 1, 1]} : vector<2x8x32xf32> to vector<2x8x8xf32>
    %186 = vector.extract_strided_slice %161 {offsets = [0, 0, 8], sizes = [2, 8, 8], strides = [1, 1, 1]} : vector<2x8x32xf32> to vector<2x8x8xf32>
    "tpu.trace_start"() <{level = 10 : i32, message = "bqd,bkd->bqk"}> : () -> ()
    %cst_96 = arith.constant dense<0.000000e+00> : vector<2x8x8xf32>
    %187 = tpu.matmul %184, %185, %cst_96 {dimension_numbers = #tpu.dot_dimension_numbers<[2], [2], [1], [1], [0, 0, 0, 1, 1, 1], [0], [0]>} : vector<2x8x8xf32>, vector<2x8x8xf32>, vector<2x8x8xf32> -> vector<2x8x8xf32>
    "tpu.trace_stop"() : () -> ()
    %cst_97 = arith.constant dense<0xFF800000> : vector<2x8xf32>
    %188 = vector.multi_reduction <maximumf>, %187, %cst_97 [2] : vector<2x8x8xf32> to vector<2x8xf32>
    %189 = vector.shape_cast %188 : vector<2x8xf32> to vector<2x8x1xf32>
    %190 = vector.broadcast %189 : vector<2x8x1xf32> to vector<2x8x8xf32>
    %191 = arith.subf %187, %190 : vector<2x8x8xf32>
    %192 = math.exp %191 : vector<2x8x8xf32>
    %cst_98 = arith.constant dense<0.000000e+00> : vector<2x8xf32>
    %193 = vector.multi_reduction <add>, %192, %cst_98 [2] : vector<2x8x8xf32> to vector<2x8xf32>
    %194 = vector.shape_cast %193 : vector<2x8xf32> to vector<2x8x1xf32>
    %195 = tpu.reciprocal %194 {approx = true} : vector<2x8x1xf32> -> vector<2x8x1xf32>
    %196 = vector.broadcast %195 : vector<2x8x1xf32> to vector<2x8x8xf32>
    %197 = arith.mulf %192, %196 : vector<2x8x8xf32>
    "tpu.trace_start"() <{level = 10 : i32, message = "bqk,bkd->bqd"}> : () -> ()
    %cst_99 = arith.constant dense<0.000000e+00> : vector<2x8x8xf32>
    %198 = tpu.matmul %197, %186, %cst_99 {dimension_numbers = #tpu.dot_dimension_numbers<[2], [1], [1], [2], [0, 0, 0, 1, 1, 2], [0], [0]>} : vector<2x8x8xf32>, vector<2x8x8xf32>, vector<2x8x8xf32> -> vector<2x8x8xf32>
    "tpu.trace_stop"() : () -> ()
    %199 = vector.shape_cast %198 : vector<2x8x8xf32> to vector<16x8xf32>
    %200 = vector.extract_strided_slice %163 {offsets = [8, 0], sizes = [8, 32], strides = [1, 1]} : vector<32x32xf32> to vector<8x32xf32>
    %cst_100 = arith.constant dense<0.000000e+00> : vector<16x32xf32>
    %201 = tpu.matmul %199, %200, %cst_100 {dimension_numbers = #tpu.dot_dimension_numbers<[1], [0], [0], [1], [0, 0, 1, 1], [], []>} : vector<16x8xf32>, vector<8x32xf32>, vector<16x32xf32> -> vector<16x32xf32>
    %202 = arith.addf %183, %201 : vector<16x32xf32>
    %203 = vector.extract_strided_slice %157 {offsets = [0, 0, 16], sizes = [2, 8, 8], strides = [1, 1, 1]} : vector<2x8x32xf32> to vector<2x8x8xf32>
    %204 = vector.extract_strided_slice %159 {offsets = [0, 0, 16], sizes = [2, 8, 8], strides = [1, 1, 1]} : vector<2x8x32xf32> to vector<2x8x8xf32>
    %205 = vector.extract_strided_slice %161 {offsets = [0, 0, 16], sizes = [2, 8, 8], strides = [1, 1, 1]} : vector<2x8x32xf32> to vector<2x8x8xf32>
    "tpu.trace_start"() <{level = 10 : i32, message = "bqd,bkd->bqk"}> : () -> ()
    %cst_101 = arith.constant dense<0.000000e+00> : vector<2x8x8xf32>
    %206 = tpu.matmul %203, %204, %cst_101 {dimension_numbers = #tpu.dot_dimension_numbers<[2], [2], [1], [1], [0, 0, 0, 1, 1, 1], [0], [0]>} : vector<2x8x8xf32>, vector<2x8x8xf32>, vector<2x8x8xf32> -> vector<2x8x8xf32>
    "tpu.trace_stop"() : () -> ()
    %cst_102 = arith.constant dense<0xFF800000> : vector<2x8xf32>
    %207 = vector.multi_reduction <maximumf>, %206, %cst_102 [2] : vector<2x8x8xf32> to vector<2x8xf32>
    %208 = vector.shape_cast %207 : vector<2x8xf32> to vector<2x8x1xf32>
    %209 = vector.broadcast %208 : vector<2x8x1xf32> to vector<2x8x8xf32>
    %210 = arith.subf %206, %209 : vector<2x8x8xf32>
    %211 = math.exp %210 : vector<2x8x8xf32>
    %cst_103 = arith.constant dense<0.000000e+00> : vector<2x8xf32>
    %212 = vector.multi_reduction <add>, %211, %cst_103 [2] : vector<2x8x8xf32> to vector<2x8xf32>
    %213 = vector.shape_cast %212 : vector<2x8xf32> to vector<2x8x1xf32>
    %214 = tpu.reciprocal %213 {approx = true} : vector<2x8x1xf32> -> vector<2x8x1xf32>
    %215 = vector.broadcast %214 : vector<2x8x1xf32> to vector<2x8x8xf32>
    %216 = arith.mulf %211, %215 : vector<2x8x8xf32>
    "tpu.trace_start"() <{level = 10 : i32, message = "bqk,bkd->bqd"}> : () -> ()
    %cst_104 = arith.constant dense<0.000000e+00> : vector<2x8x8xf32>
    %217 = tpu.matmul %216, %205, %cst_104 {dimension_numbers = #tpu.dot_dimension_numbers<[2], [1], [1], [2], [0, 0, 0, 1, 1, 2], [0], [0]>} : vector<2x8x8xf32>, vector<2x8x8xf32>, vector<2x8x8xf32> -> vector<2x8x8xf32>
    "tpu.trace_stop"() : () -> ()
    %218 = vector.shape_cast %217 : vector<2x8x8xf32> to vector<16x8xf32>
    %219 = vector.extract_strided_slice %163 {offsets = [16, 0], sizes = [8, 32], strides = [1, 1]} : vector<32x32xf32> to vector<8x32xf32>
    %cst_105 = arith.constant dense<0.000000e+00> : vector<16x32xf32>
    %220 = tpu.matmul %218, %219, %cst_105 {dimension_numbers = #tpu.dot_dimension_numbers<[1], [0], [0], [1], [0, 0, 1, 1], [], []>} : vector<16x8xf32>, vector<8x32xf32>, vector<16x32xf32> -> vector<16x32xf32>
    %221 = arith.addf %202, %220 : vector<16x32xf32>
    %222 = vector.extract_strided_slice %157 {offsets = [0, 0, 24], sizes = [2, 8, 8], strides = [1, 1, 1]} : vector<2x8x32xf32> to vector<2x8x8xf32>
    %223 = vector.extract_strided_slice %159 {offsets = [0, 0, 24], sizes = [2, 8, 8], strides = [1, 1, 1]} : vector<2x8x32xf32> to vector<2x8x8xf32>
    %224 = vector.extract_strided_slice %161 {offsets = [0, 0, 24], sizes = [2, 8, 8], strides = [1, 1, 1]} : vector<2x8x32xf32> to vector<2x8x8xf32>
    "tpu.trace_start"() <{level = 10 : i32, message = "bqd,bkd->bqk"}> : () -> ()
    %cst_106 = arith.constant dense<0.000000e+00> : vector<2x8x8xf32>
    %225 = tpu.matmul %222, %223, %cst_106 {dimension_numbers = #tpu.dot_dimension_numbers<[2], [2], [1], [1], [0, 0, 0, 1, 1, 1], [0], [0]>} : vector<2x8x8xf32>, vector<2x8x8xf32>, vector<2x8x8xf32> -> vector<2x8x8xf32>
    "tpu.trace_stop"() : () -> ()
    %cst_107 = arith.constant dense<0xFF800000> : vector<2x8xf32>
    %226 = vector.multi_reduction <maximumf>, %225, %cst_107 [2] : vector<2x8x8xf32> to vector<2x8xf32>
    %227 = vector.shape_cast %226 : vector<2x8xf32> to vector<2x8x1xf32>
    %228 = vector.broadcast %227 : vector<2x8x1xf32> to vector<2x8x8xf32>
    %229 = arith.subf %225, %228 : vector<2x8x8xf32>
    %230 = math.exp %229 : vector<2x8x8xf32>
    %cst_108 = arith.constant dense<0.000000e+00> : vector<2x8xf32>
    %231 = vector.multi_reduction <add>, %230, %cst_108 [2] : vector<2x8x8xf32> to vector<2x8xf32>
    %232 = vector.shape_cast %231 : vector<2x8xf32> to vector<2x8x1xf32>
    %233 = tpu.reciprocal %232 {approx = true} : vector<2x8x1xf32> -> vector<2x8x1xf32>
    %234 = vector.broadcast %233 : vector<2x8x1xf32> to vector<2x8x8xf32>
    %235 = arith.mulf %230, %234 : vector<2x8x8xf32>
    "tpu.trace_start"() <{level = 10 : i32, message = "bqk,bkd->bqd"}> : () -> ()
    %cst_109 = arith.constant dense<0.000000e+00> : vector<2x8x8xf32>
    %236 = tpu.matmul %235, %224, %cst_109 {dimension_numbers = #tpu.dot_dimension_numbers<[2], [1], [1], [2], [0, 0, 0, 1, 1, 2], [0], [0]>} : vector<2x8x8xf32>, vector<2x8x8xf32>, vector<2x8x8xf32> -> vector<2x8x8xf32>
    "tpu.trace_stop"() : () -> ()
    %237 = vector.shape_cast %236 : vector<2x8x8xf32> to vector<16x8xf32>
    %238 = vector.extract_strided_slice %163 {offsets = [24, 0], sizes = [8, 32], strides = [1, 1]} : vector<32x32xf32> to vector<8x32xf32>
    %cst_110 = arith.constant dense<0.000000e+00> : vector<16x32xf32>
    %239 = tpu.matmul %237, %238, %cst_110 {dimension_numbers = #tpu.dot_dimension_numbers<[1], [0], [0], [1], [0, 0, 1, 1], [], []>} : vector<16x8xf32>, vector<8x32xf32>, vector<16x32xf32> -> vector<16x32xf32>
    %240 = arith.addf %221, %239 : vector<16x32xf32>
    %c1_111 = arith.constant 1 : index
    %c0_112 = arith.constant 0 : index
    %c0_113 = arith.constant 0 : index
    %241 = vector.load %arg11[%c1_111, %c0_112, %c0_113] : memref<2x1x32xf32, #tpu.memory_space<vmem>>, vector<1x1x32xf32>
    %242 = vector.shape_cast %241 : vector<1x1x32xf32> to vector<1x32xf32>
    %243 = vector.broadcast %242 : vector<1x32xf32> to vector<16x32xf32>
    %244 = arith.addf %240, %243 : vector<16x32xf32>
    %c0_114 = arith.constant 0 : index
    %c0_115 = arith.constant 0 : index
    %245 = vector.load %arg12[%c0_114, %c0_115] : memref<16x32xf32, #tpu.memory_space<vmem>>, vector<16x32xf32>
    tpu.vector_store %arg12[%c0_114, %c0_115], %244 {strides = array<i32>} : memref<16x32xf32, #tpu.memory_space<vmem>>, vector<16x32xf32>,
    return
  }
}

</mosaic_0001>

<llo_original>
// kernel: gin_node_embedding_forward.1
$region0: #{gin_node_embedding_forward.1}
  #allocation0 [shape = 'u32[]', space=smem, size = 0x4, offset = 0x4, fixed_abs, tag = 'smem constant byte address 0x4 - core index']
  #allocation1 [shape = 'u32[144,128]{1,0:T(1,128)}', space=vmem, size = 0x12000, scoped, tag = 'internal scratch']
  %s0 = inlined_call_operand.vmem [shape: f32[16,32], index: 0, kind: input, shape index: {}]
  %s1 = inlined_call_operand.vmem [shape: f32[2,32,32], index: 1, kind: input, shape index: {}]
  %s2 = inlined_call_operand.vmem [shape: f32[32,16], index: 2, kind: input, shape index: {}]
  %s3 = inlined_call_operand.vmem [shape: f32[16,32], index: 3, kind: input, shape index: {}]
  %s4 = inlined_call_operand.vmem [shape: f32[2,32,64], index: 4, kind: input, shape index: {}]
  %s5 = inlined_call_operand.vmem [shape: f32[2,1,64], index: 5, kind: input, shape index: {}]
  %s6 = inlined_call_operand.vmem [shape: f32[2,64,32], index: 6, kind: input, shape index: {}]
  %s7 = inlined_call_operand.vmem [shape: f32[2,1,32], index: 7, kind: input, shape index: {}]
  %s8 = inlined_call_operand.vmem [shape: f32[2,32,96], index: 8, kind: input, shape index: {}]
  %s9 = inlined_call_operand.vmem [shape: f32[2,1,96], index: 9, kind: input, shape index: {}]
  %s10 = inlined_call_operand.vmem [shape: f32[2,32,32], index: 10, kind: input, shape index: {}]
  %s11 = inlined_call_operand.vmem [shape: f32[2,1,32], index: 11, kind: input, shape index: {}]
  %s12 = inlined_call_operand.hbm [shape: f32[16,32], index: 12, kind: output, shape index: {}]
  %s13 = sld [smem:[#allocation0]]
  $region58: #{gin_node_embedding_forward.1} parent=0
    _
  %s15 = ssub.s32 1, %s13
  %s16 = scalar_select 0, %s15, %s13
  $region1: #{gin_node_embedding_forward.1} parent=0
    #allocation2 [shape = 'u8[8192]{0}', space=vmem, size = 0x2000, scoped, tag = 'output window, operand 0, single buffered']
    #allocation3 [shape = 's32[1]{0}', space=sflag, size = 0x4, scoped, tag = 'scoped memory for gin_node_embedding_forward.1']
    %17 = vsyncpa [#allocation3], 0
    // Predicated region
    $region2: #{gin_node_embedding_forward.1} parent=1 // pred_check
      _
    $region3: #{gin_node_embedding_forward.1} parent=1 // pred_check_branch
      %19 = sbr.rel (0) target = $region5
    $region4: #{gin_node_embedding_forward.1} parent=1 // pred_region
      _
    $region5: #{gin_node_embedding_forward.1} parent=1 // pred_fallthru
      _
    // Predicated region
    $region6: #{gin_node_embedding_forward.1} parent=1 // pred_check
      _
    $region7: #{gin_node_embedding_forward.1} parent=1 // pred_check_branch
      %21 = sbr.rel (0) target = $region9
    $region8: #{gin_node_embedding_forward.1} parent=1 // pred_region
      _
    $region9: #{gin_node_embedding_forward.1} parent=1 // pred_fallthru
      _
    // Predicated region
    $region10: #{gin_node_embedding_forward.1} parent=1 // pred_check
      _
    $region11: #{gin_node_embedding_forward.1} parent=1 // pred_check_branch
      %23 = sbr.rel (0) target = $region13
    $region12: #{gin_node_embedding_forward.1} parent=1 // pred_region
      _
    $region13: #{gin_node_embedding_forward.1} parent=1 // pred_fallthru
      _
    // Predicated region
    $region14: #{gin_node_embedding_forward.1} parent=1 // pred_check
      _
    $region15: #{gin_node_embedding_forward.1} parent=1 // pred_check_branch
      %25 = sbr.rel (0) target = $region17
    $region16: #{gin_node_embedding_forward.1} parent=1 // pred_region
      _
    $region17: #{gin_node_embedding_forward.1} parent=1 // pred_fallthru
      _
    // Predicated region
    $region18: #{gin_node_embedding_forward.1} parent=1 // pred_check
      _
    $region19: #{gin_node_embedding_forward.1} parent=1 // pred_check_branch
      %27 = sbr.rel (0) target = $region21
    $region20: #{gin_node_embedding_forward.1} parent=1 // pred_region
      _
    $region21: #{gin_node_embedding_forward.1} parent=1 // pred_fallthru
      _
    // Predicated region
    $region22: #{gin_node_embedding_forward.1} parent=1 // pred_check
      _
    $region23: #{gin_node_embedding_forward.1} parent=1 // pred_check_branch
      %29 = sbr.rel (0) target = $region25
    $region24: #{gin_node_embedding_forward.1} parent=1 // pred_region
      _
    $region25: #{gin_node_embedding_forward.1} parent=1 // pred_fallthru
      _
    // Predicated region
    $region26: #{gin_node_embedding_forward.1} parent=1 // pred_check
      _
    $region27: #{gin_node_embedding_forward.1} parent=1 // pred_check_branch
      %31 = sbr.rel (0) target = $region29
    $region28: #{gin_node_embedding_forward.1} parent=1 // pred_region
      _
    $region29: #{gin_node_embedding_forward.1} parent=1 // pred_fallthru
      _
    // Predicated region
    $region30: #{gin_node_embedding_forward.1} parent=1 // pred_check
      _
    $region31: #{gin_node_embedding_forward.1} parent=1 // pred_check_branch
      %33 = sbr.rel (0) target = $region33
    $region32: #{gin_node_embedding_forward.1} parent=1 // pred_region
      _
    $region33: #{gin_node_embedding_forward.1} parent=1 // pred_fallthru
      _
    // Predicated region
    $region34: #{gin_node_embedding_forward.1} parent=1 // pred_check
      _
    $region35: #{gin_node_embedding_forward.1} parent=1 // pred_check_branch
      %35 = sbr.rel (0) target = $region37
    $region36: #{gin_node_embedding_forward.1} parent=1 // pred_region
      _
    $region37: #{gin_node_embedding_forward.1} parent=1 // pred_fallthru
      _
    // Predicated region
    $region38: #{gin_node_embedding_forward.1} parent=1 // pred_check
      _
    $region39: #{gin_node_embedding_forward.1} parent=1 // pred_check_branch
      %37 = sbr.rel (0) target = $region41
    $region40: #{gin_node_embedding_forward.1} parent=1 // pred_region
      _
    $region41: #{gin_node_embedding_forward.1} parent=1 // pred_fallthru
      _
    // Predicated region
    $region42: #{gin_node_embedding_forward.1} parent=1 // pred_check
      _
    $region43: #{gin_node_embedding_forward.1} parent=1 // pred_check_branch
      %39 = sbr.rel (0) target = $region45
    $region44: #{gin_node_embedding_forward.1} parent=1 // pred_region
      _
    $region45: #{gin_node_embedding_forward.1} parent=1 // pred_fallthru
      _
    // Predicated region
    $region46: #{gin_node_embedding_forward.1} parent=1 // pred_check
      _
    $region47: #{gin_node_embedding_forward.1} parent=1 // pred_check_branch
      %41 = sbr.rel (0) target = $region49
    $region48: #{gin_node_embedding_forward.1} parent=1 // pred_region
      _
    $region49: #{gin_node_embedding_forward.1} parent=1 // pred_fallthru
      _
    %v42 = vld [vmem:[%s0] sm:$0xff]
    %v43 = vld [vmem:[%s0 + $0x8] sm:$0xff]
    %v44 = vld [vmem:[%s2] sm:$0xff]
    %v45 = vld [vmem:[%s2 + $0x8] sm:$0xff]
    %v46 = vld [vmem:[%s2 + $0x10] sm:$0xff]
    %v47 = vld [vmem:[%s2 + $0x18] sm:$0xff]
    %v48 = vld [vmem:[%s3] sm:$0xff]
    %v49 = vld [vmem:[%s3 + $0x8] sm:$0xff]
    %v50 = vld [vmem:[%s1] sm:$0xff]
    %v51 = vld [vmem:[%s1 + $0x8] sm:$0xff]
    %v52 = vld [vmem:[%s1 + $0x10] sm:$0xff]
    %v53 = vld [vmem:[%s1 + $0x18] sm:$0xff]
    %vm54 = vcmask 130048
    %v56 = vsel %vm54, %v44, 0
    %v59 = vsel %vm54, %v45, 0
    %v62 = vsel %vm54, %v46, 0
    %v65 = vsel %vm54, %v47, 0
    %67 = vmatprep.subr.mxu0 0.0
    %68 = vmatpush1.msra.mxu0 %v42
    %69 = vmatprep.subr.mxu0 0.0
    %70 = vmatpush1.msra.mxu0 %v43
    %71 = vmatprep.subr.mxu0 0.0
    %72 = vmatpush1.msra.mxu0 0.0
    %73 = vmatprep.subr.mxu0 0.0
    %74 = vmatpush1.msra.mxu0 0.0
    %75 = vmatprep.subr.mxu0 0.0
    %76 = vmatpush1.msra.mxu0 0.0
    %77 = vmatprep.subr.mxu0 0.0
    %78 = vmatpush1.msra.mxu0 0.0
    %79 = vmatprep.subr.mxu0 0.0
    %80 = vmatpush1.msra.mxu0 0.0
    %81 = vmatprep.subr.mxu0 0.0
    %82 = vmatpush1.msra.mxu0 0.0
    %83 = vmatprep.subr.mxu0 0.0
    %84 = vmatpush1.msra.mxu0 0.0
    %85 = vmatprep.subr.mxu0 0.0
    %86 = vmatpush1.msra.mxu0 0.0
    %87 = vmatprep.subr.mxu0 0.0
    %88 = vmatpush1.msra.mxu0 0.0
    %89 = vmatprep.subr.mxu0 0.0
    %90 = vmatpush1.msra.mxu0 0.0
    %91 = vmatprep.subr.mxu0 0.0
    %92 = vmatpush1.msra.mxu0 0.0
    %93 = vmatprep.subr.mxu0 0.0
    %94 = vmatpush1.msra.mxu0 0.0
    %95 = vmatprep.subr.mxu0 0.0
    %96 = vmatpush1.msra.mxu0 0.0
    %97 = vmatprep.subr.mxu0 0.0
    %98 = vmatpush1.msra.mxu0 0.0
    %99 = vmatprep.subr.mxu0 0.0
    %100 = vmatpush1.msra.mxu0 0.0
    %101 = vmatprep.subr.mxu0 0.0
    %102 = vmatpush1.msra.mxu0 0.0
    %103 = vmatprep.subr.mxu0 0.0
    %104 = vmatpush1.msra.mxu0 0.0
    %105 = vmatprep.subr.mxu0 0.0
    %106 = vmatpush1.msra.mxu0 0.0
    %107 = vmatprep.subr.mxu0 0.0
    %108 = vmatpush1.msra.mxu0 0.0
    %109 = vmatprep.subr.mxu0 0.0
    %110 = vmatpush1.msra.mxu0 0.0
    %111 = vmatprep.subr.mxu0 0.0
    %112 = vmatpush1.msra.mxu0 0.0
    %113 = vmatprep.subr.mxu0 0.0
    %114 = vmatpush1.msra.mxu0 0.0
    %115 = vmatprep.subr.mxu0 0.0
    %116 = vmatpush1.msra.mxu0 0.0
    %117 = vmatprep.subr.mxu0 0.0
    %118 = vmatpush1.msra.mxu0 0.0
    %119 = vmatprep.subr.mxu0 0.0
    %120 = vmatpush1.msra.mxu0 0.0
    %121 = vmatprep.subr.mxu0 0.0
    %122 = vmatpush1.msra.mxu0 0.0
    %123 = vmatprep.subr.mxu0 0.0
    %124 = vmatpush1.msra.mxu0 0.0
    %125 = vmatprep.subr.mxu0 0.0
    %126 = vmatpush1.msra.mxu0 0.0
    %127 = vmatprep.subr.mxu0 0.0
    %128 = vmatpush1.msra.mxu0 0.0
    %129 = vmatprep.subr.mxu0 0.0
    %130 = vmatpush1.msra.mxu0 0.0
    %131 = vmatprep.mubr.f32.mxu0 0.0
    %132 = vmatmul.mubr.f32.gmra.mrb[0].mxu0 %v56
    %v133 = vpop.f32.mrb[0].mxu0
    %v134 = vadd.f32 %v50, %v133
    %v135 = vpop.f32.mrb[0].mxu0
    %136 = vmatprep.mubr.f32.mxu0 0.0
    %137 = vmatmul.mubr.f32.gmra.mrb[0].mxu0 %v59
    %v138 = vpop.f32.mrb[0].mxu0
    %v139 = vadd.f32 %v51, %v138
    %v140 = vpop.f32.mrb[0].mxu0
    %141 = vmatprep.mubr.f32.mxu0 0.0
    %142 = vmatmul.mubr.f32.gmra.mrb[0].mxu0 %v62
    %v143 = vpop.f32.mrb[0].mxu0
    %v144 = vadd.f32 %v52, %v143
    %v145 = vpop.f32.mrb[0].mxu0
    %146 = vmatprep.mubr.f32.mxu0 0.0
    %147 = vmatmul.mubr.f32.gmra.mrb[0].mxu0 %v65
    %v148 = vpop.f32.mrb[0].mxu0
    %v149 = vadd.f32 %v53, %v148
    %v150 = vpop.f32.mrb[0].mxu0
    %151 = vdwg.mxu0
    %v152 = vmax.f32 %v134, 0.0
    %v153 = vmax.f32 %v139, 0.0
    %v154 = vmax.f32 %v144, 0.0
    %v155 = vmax.f32 %v149, 0.0
    %vm156 = vcmask 261120
    %v158 = vsel %vm156, %v48, 0
    %v161 = vsel %vm156, %v49, 0
    %163 = vmatprep.subr.mxu0 0.0
    %164 = vmatpush1.msra.mxu0 %v152
    %165 = vmatprep.subr.mxu0 0.0
    %166 = vmatpush1.msra.mxu0 %v153
    %167 = vmatprep.subr.mxu0 0.0
    %168 = vmatpush1.msra.mxu0 %v154
    %169 = vmatprep.subr.mxu0 0.0
    %170 = vmatpush1.msra.mxu0 %v155
    %171 = vmatprep.subr.mxu0 0.0
    %172 = vmatpush1.msra.mxu0 0.0
    %173 = vmatprep.subr.mxu0 0.0
    %174 = vmatpush1.msra.mxu0 0.0
    %175 = vmatprep.subr.mxu0 0.0
    %176 = vmatpush1.msra.mxu0 0.0
    %177 = vmatprep.subr.mxu0 0.0
    %178 = vmatpush1.msra.mxu0 0.0
    %179 = vmatprep.subr.mxu0 0.0
    %180 = vmatpush1.msra.mxu0 0.0
    %181 = vmatprep.subr.mxu0 0.0
    %182 = vmatpush1.msra.mxu0 0.0
    %183 = vmatprep.subr.mxu0 0.0
    %184 = vmatpush1.msra.mxu0 0.0
    %185 = vmatprep.subr.mxu0 0.0
    %186 = vmatpush1.msra.mxu0 0.0
    %187 = vmatprep.subr.mxu0 0.0
    %188 = vmatpush1.msra.mxu0 0.0
    %189 = vmatprep.subr.mxu0 0.0
    %190 = vmatpush1.msra.mxu0 0.0
    %191 = vmatprep.subr.mxu0 0.0
    %192 = vmatpush1.msra.mxu0 0.0
    %193 = vmatprep.subr.mxu0 0.0
    %194 = vmatpush1.msra.mxu0 0.0
    %195 = vmatprep.subr.mxu0 0.0
    %196 = vmatpush1.msra.mxu0 0.0
    %197 = vmatprep.subr.mxu0 0.0
    %198 = vmatpush1.msra.mxu0 0.0
    %199 = vmatprep.subr.mxu0 0.0
    %200 = vmatpush1.msra.mxu0 0.0
    %201 = vmatprep.subr.mxu0 0.0
    %202 = vmatpush1.msra.mxu0 0.0
    %203 = vmatprep.subr.mxu0 0.0
    %204 = vmatpush1.msra.mxu0 0.0
    %205 = vmatprep.subr.mxu0 0.0
    %206 = vmatpush1.msra.mxu0 0.0
    %207 = vmatprep.subr.mxu0 0.0
    %208 = vmatpush1.msra.mxu0 0.0
    %209 = vmatprep.subr.mxu0 0.0
    %210 = vmatpush1.msra.mxu0 0.0
    %211 = vmatprep.subr.mxu0 0.0
    %212 = vmatpush1.msra.mxu0 0.0
    %213 = vmatprep.subr.mxu0 0.0
    %214 = vmatpush1.msra.mxu0 0.0
    %215 = vmatprep.subr.mxu0 0.0
    %216 = vmatpush1.msra.mxu0 0.0
    %217 = vmatprep.subr.mxu0 0.0
    %218 = vmatpush1.msra.mxu0 0.0
    %219 = vmatprep.subr.mxu0 0.0
    %220 = vmatpush1.msra.mxu0 0.0
    %221 = vmatprep.subr.mxu0 0.0
    %222 = vmatpush1.msra.mxu0 0.0
    %223 = vmatprep.subr.mxu0 0.0
    %224 = vmatpush1.msra.mxu0 0.0
    %225 = vmatprep.subr.mxu0 0.0
    %226 = vmatpush1.msra.mxu0 0.0
    %227 = vmatprep.mubr.f32.mxu0 0.0
    %228 = vmatmul.mubr.f32.gmra.mrb[0].mxu0 %v158
    %v229 = vpop.f32.mrb[0].mxu0
    %v230 = vadd.f32 0.0, %v229
    %v231 = vpop.f32.mrb[0].mxu0
    %232 = vmatprep.mubr.f32.mxu0 0.0
    %233 = vmatmul.mubr.f32.gmra.mrb[0].mxu0 %v161
    %v234 = vpop.f32.mrb[0].mxu0
    %v235 = vadd.f32 0.0, %v234
    %v236 = vpop.f32.mrb[0].mxu0
    %237 = vdwg.mxu0
    %v238 = vadd.f32 %v42, %v230
    %v239 = vadd.f32 %v43, %v235
    %v240 = vld [vmem:[%s4] sm:$0xff]
    %v241 = vld [vmem:[%s4 + $0x8] sm:$0xff]
    %v242 = vld [vmem:[%s4 + $0x10] sm:$0xff]
    %v243 = vld [vmem:[%s4 + $0x18] sm:$0xff]
    %v244 = vld [vmem:[%s5] sm:$0x1]
    %v246 = vlaneseq
    %v247 = vshrl.u32 %v246, 7
    %v248 = vsub.s32 0, %v247
    %v249 = vrot.slane %v244, %v248
    %v252 = vsel %vm156, %v238, 0
    %v255 = vsel %vm156, %v239, 0
    %257 = vmatprep.subr.mxu0 0.0
    %258 = vmatpush1.msra.mxu0 %v240
    %259 = vmatprep.subr.mxu0 0.0
    %260 = vmatpush1.msra.mxu0 %v241
    %261 = vmatprep.subr.mxu0 0.0
    %262 = vmatpush1.msra.mxu0 %v242
    %263 = vmatprep.subr.mxu0 0.0
    %264 = vmatpush1.msra.mxu0 %v243
    %265 = vmatprep.subr.mxu0 0.0
    %266 = vmatpush1.msra.mxu0 0.0
    %267 = vmatprep.subr.mxu0 0.0
    %268 = vmatpush1.msra.mxu0 0.0
    %269 = vmatprep.subr.mxu0 0.0
    %270 = vmatpush1.msra.mxu0 0.0
    %271 = vmatprep.subr.mxu0 0.0
    %272 = vmatpush1.msra.mxu0 0.0
    %273 = vmatprep.subr.mxu0 0.0
    %274 = vmatpush1.msra.mxu0 0.0
    %275 = vmatprep.subr.mxu0 0.0
    %276 = vmatpush1.msra.mxu0 0.0
    %277 = vmatprep.subr.mxu0 0.0
    %278 = vmatpush1.msra.mxu0 0.0
    %279 = vmatprep.subr.mxu0 0.0
    %280 = vmatpush1.msra.mxu0 0.0
    %281 = vmatprep.subr.mxu0 0.0
    %282 = vmatpush1.msra.mxu0 0.0
    %283 = vmatprep.subr.mxu0 0.0
    %284 = vmatpush1.msra.mxu0 0.0
    %285 = vmatprep.subr.mxu0 0.0
    %286 = vmatpush1.msra.mxu0 0.0
    %287 = vmatprep.subr.mxu0 0.0
    %288 = vmatpush1.msra.mxu0 0.0
    %289 = vmatprep.subr.mxu0 0.0
    %290 = vmatpush1.msra.mxu0 0.0
    %291 = vmatprep.subr.mxu0 0.0
    %292 = vmatpush1.msra.mxu0 0.0
    %293 = vmatprep.subr.mxu0 0.0
    %294 = vmatpush1.msra.mxu0 0.0
    %295 = vmatprep.subr.mxu0 0.0
    %296 = vmatpush1.msra.mxu0 0.0
    %297 = vmatprep.subr.mxu0 0.0
    %298 = vmatpush1.msra.mxu0 0.0
    %299 = vmatprep.subr.mxu0 0.0
    %300 = vmatpush1.msra.mxu0 0.0
    %301 = vmatprep.subr.mxu0 0.0
    %302 = vmatpush1.msra.mxu0 0.0
    %303 = vmatprep.subr.mxu0 0.0
    %304 = vmatpush1.msra.mxu0 0.0
    %305 = vmatprep.subr.mxu0 0.0
    %306 = vmatpush1.msra.mxu0 0.0
    %307 = vmatprep.subr.mxu0 0.0
    %308 = vmatpush1.msra.mxu0 0.0
    %309 = vmatprep.subr.mxu0 0.0
    %310 = vmatpush1.msra.mxu0 0.0
    %311 = vmatprep.subr.mxu0 0.0
    %312 = vmatpush1.msra.mxu0 0.0
    %313 = vmatprep.subr.mxu0 0.0
    %314 = vmatpush1.msra.mxu0 0.0
    %315 = vmatprep.subr.mxu0 0.0
    %316 = vmatpush1.msra.mxu0 0.0
    %317 = vmatprep.subr.mxu0 0.0
    %318 = vmatpush1.msra.mxu0 0.0
    %319 = vmatprep.subr.mxu0 0.0
    %320 = vmatpush1.msra.mxu0 0.0
    %321 = vmatprep.mubr.f32.mxu0 0.0
    %322 = vmatmul.mubr.f32.gmra.mrb[0].mxu0 %v252
    %v323 = vpop.f32.mrb[0].mxu0
    %v324 = vadd.f32 %v249, %v323
    %v325 = vpop.f32.mrb[0].mxu0
    %326 = vmatprep.mubr.f32.mxu0 0.0
    %327 = vmatmul.mubr.f32.gmra.mrb[0].mxu0 %v255
    %v328 = vpop.f32.mrb[0].mxu0
    %v329 = vadd.f32 %v249, %v328
    %v330 = vpop.f32.mrb[0].mxu0
    %331 = vdwg.mxu0
    %v332 = vmax.f32 %v324, 0.0
    %v333 = vmax.f32 %v329, 0.0
    %v334 = vld [vmem:[%s6] sm:$0xff]
    %v335 = vld [vmem:[%s6 + $0x8] sm:$0xff]
    %v336 = vld [vmem:[%s6 + $0x10] sm:$0xff]
    %v337 = vld [vmem:[%s6 + $0x18] sm:$0xff]
    %v338 = vld [vmem:[%s6 + $0x20] sm:$0xff]
    %v339 = vld [vmem:[%s6 + $0x28] sm:$0xff]
    %v340 = vld [vmem:[%s6 + $0x30] sm:$0xff]
    %v341 = vld [vmem:[%s6 + $0x38] sm:$0xff]
    %v342 = vld [vmem:[%s7] sm:$0x1]
    %v344 = vlaneseq
    %v345 = vshrl.u32 %v344, 7
    %v346 = vsub.s32 0, %v345
    %v347 = vrot.slane %v342, %v346
    %vm349 = vcmask 523264
    %v351 = vsel %vm349, %v332, 0
    %v354 = vsel %vm349, %v333, 0
    %356 = vmatprep.subr.mxu0 0.0
    %357 = vmatpush1.msra.mxu0 %v334
    %358 = vmatprep.subr.mxu0 0.0
    %359 = vmatpush1.msra.mxu0 %v335
    %360 = vmatprep.subr.mxu0 0.0
    %361 = vmatpush1.msra.mxu0 %v336
    %362 = vmatprep.subr.mxu0 0.0
    %363 = vmatpush1.msra.mxu0 %v337
    %364 = vmatprep.subr.mxu0 0.0
    %365 = vmatpush1.msra.mxu0 %v338
    %366 = vmatprep.subr.mxu0 0.0
    %367 = vmatpush1.msra.mxu0 %v339
    %368 = vmatprep.subr.mxu0 0.0
    %369 = vmatpush1.msra.mxu0 %v340
    %370 = vmatprep.subr.mxu0 0.0
    %371 = vmatpush1.msra.mxu0 %v341
    %372 = vmatprep.subr.mxu0 0.0
    %373 = vmatpush1.msra.mxu0 0.0
    %374 = vmatprep.subr.mxu0 0.0
    %375 = vmatpush1.msra.mxu0 0.0
    %376 = vmatprep.subr.mxu0 0.0
    %377 = vmatpush1.msra.mxu0 0.0
    %378 = vmatprep.subr.mxu0 0.0
    %379 = vmatpush1.msra.mxu0 0.0
    %380 = vmatprep.subr.mxu0 0.0
    %381 = vmatpush1.msra.mxu0 0.0
    %382 = vmatprep.subr.mxu0 0.0
    %383 = vmatpush1.msra.mxu0 0.0
    %384 = vmatprep.subr.mxu0 0.0
    %385 = vmatpush1.msra.mxu0 0.0
    %386 = vmatprep.subr.mxu0 0.0
    %387 = vmatpush1.msra.mxu0 0.0
    %388 = vmatprep.subr.mxu0 0.0
    %389 = vmatpush1.msra.mxu0 0.0
    %390 = vmatprep.subr.mxu0 0.0
    %391 = vmatpush1.msra.mxu0 0.0
    %392 = vmatprep.subr.mxu0 0.0
    %393 = vmatpush1.msra.mxu0 0.0
    %394 = vmatprep.subr.mxu0 0.0
    %395 = vmatpush1.msra.mxu0 0.0
    %396 = vmatprep.subr.mxu0 0.0
    %397 = vmatpush1.msra.mxu0 0.0
    %398 = vmatprep.subr.mxu0 0.0
    %399 = vmatpush1.msra.mxu0 0.0
    %400 = vmatprep.subr.mxu0 0.0
    %401 = vmatpush1.msra.mxu0 0.0
    %402 = vmatprep.subr.mxu0 0.0
    %403 = vmatpush1.msra.mxu0 0.0
    %404 = vmatprep.subr.mxu0 0.0
    %405 = vmatpush1.msra.mxu0 0.0
    %406 = vmatprep.subr.mxu0 0.0
    %407 = vmatpush1.msra.mxu0 0.0
    %408 = vmatprep.subr.mxu0 0.0
    %409 = vmatpush1.msra.mxu0 0.0
    %410 = vmatprep.subr.mxu0 0.0
    %411 = vmatpush1.msra.mxu0 0.0
    %412 = vmatprep.subr.mxu0 0.0
    %413 = vmatpush1.msra.mxu0 0.0
    %414 = vmatprep.subr.mxu0 0.0
    %415 = vmatpush1.msra.mxu0 0.0
    %416 = vmatprep.subr.mxu0 0.0
    %417 = vmatpush1.msra.mxu0 0.0
    %418 = vmatprep.subr.mxu0 0.0
    %419 = vmatpush1.msra.mxu0 0.0
    %420 = vmatprep.mubr.f32.mxu0 0.0
    %421 = vmatmul.mubr.f32.gmra.mrb[0].mxu0 %v351
    %v422 = vpop.f32.mrb[0].mxu0
    %v423 = vadd.f32 %v347, %v422
    %v424 = vpop.f32.mrb[0].mxu0
    %425 = vmatprep.mubr.f32.mxu0 0.0
    %426 = vmatmul.mubr.f32.gmra.mrb[0].mxu0 %v354
    %v427 = vpop.f32.mrb[0].mxu0
    %v428 = vadd.f32 %v347, %v427
    %v429 = vpop.f32.mrb[0].mxu0
    %430 = vdwg.mxu0
    %v431 = vld [vmem:[%s8] sm:$0xff]
    %v432 = vld [vmem:[%s8 + $0x8] sm:$0xff]
    %v433 = vld [vmem:[%s8 + $0x10] sm:$0xff]
    %v434 = vld [vmem:[%s8 + $0x18] sm:$0xff]
    %v435 = vld [vmem:[%s9] sm:$0x1]
    %v437 = vlaneseq
    %v438 = vshrl.u32 %v437, 7
    %v439 = vsub.s32 0, %v438
    %v440 = vrot.slane %v435, %v439
    %v443 = vsel %vm156, %v423, 0
    %v446 = vsel %vm156, %v428, 0
    %448 = vmatprep.subr.mxu0 0.0
    %449 = vmatpush1.msra.mxu0 %v431
    %450 = vmatprep.subr.mxu0 0.0
    %451 = vmatpush1.msra.mxu0 %v432
    %452 = vmatprep.subr.mxu0 0.0
    %453 = vmatpush1.msra.mxu0 %v433
    %454 = vmatprep.subr.mxu0 0.0
    %455 = vmatpush1.msra.mxu0 %v434
    %456 = vmatprep.subr.mxu0 0.0
    %457 = vmatpush1.msra.mxu0 0.0
    %458 = vmatprep.subr.mxu0 0.0
    %459 = vmatpush1.msra.mxu0 0.0
    %460 = vmatprep.subr.mxu0 0.0
    %461 = vmatpush1.msra.mxu0 0.0
    %462 = vmatprep.subr.mxu0 0.0
    %463 = vmatpush1.msra.mxu0 0.0
    %464 = vmatprep.subr.mxu0 0.0
    %465 = vmatpush1.msra.mxu0 0.0
    %466 = vmatprep.subr.mxu0 0.0
    %467 = vmatpush1.msra.mxu0 0.0
    %468 = vmatprep.subr.mxu0 0.0
    %469 = vmatpush1.msra.mxu0 0.0
    %470 = vmatprep.subr.mxu0 0.0
    %471 = vmatpush1.msra.mxu0 0.0
    %472 = vmatprep.subr.mxu0 0.0
    %473 = vmatpush1.msra.mxu0 0.0
    %474 = vmatprep.subr.mxu0 0.0
    %475 = vmatpush1.msra.mxu0 0.0
    %476 = vmatprep.subr.mxu0 0.0
    %477 = vmatpush1.msra.mxu0 0.0
    %478 = vmatprep.subr.mxu0 0.0
    %479 = vmatpush1.msra.mxu0 0.0
    %480 = vmatprep.subr.mxu0 0.0
    %481 = vmatpush1.msra.mxu0 0.0
    %482 = vmatprep.subr.mxu0 0.0
    %483 = vmatpush1.msra.mxu0 0.0
    %484 = vmatprep.subr.mxu0 0.0
    %485 = vmatpush1.msra.mxu0 0.0
    %486 = vmatprep.subr.mxu0 0.0
    %487 = vmatpush1.msra.mxu0 0.0
    %488 = vmatprep.subr.mxu0 0.0
    %489 = vmatpush1.msra.mxu0 0.0
    %490 = vmatprep.subr.mxu0 0.0
    %491 = vmatpush1.msra.mxu0 0.0
    %492 = vmatprep.subr.mxu0 0.0
    %493 = vmatpush1.msra.mxu0 0.0
    %494 = vmatprep.subr.mxu0 0.0
    %495 = vmatpush1.msra.mxu0 0.0
    %496 = vmatprep.subr.mxu0 0.0
    %497 = vmatpush1.msra.mxu0 0.0
    %498 = vmatprep.subr.mxu0 0.0
    %499 = vmatpush1.msra.mxu0 0.0
    %500 = vmatprep.subr.mxu0 0.0
    %501 = vmatpush1.msra.mxu0 0.0
    %502 = vmatprep.subr.mxu0 0.0
    %503 = vmatpush1.msra.mxu0 0.0
    %504 = vmatprep.subr.mxu0 0.0
    %505 = vmatpush1.msra.mxu0 0.0
    %506 = vmatprep.subr.mxu0 0.0
    %507 = vmatpush1.msra.mxu0 0.0
    %508 = vmatprep.subr.mxu0 0.0
    %509 = vmatpush1.msra.mxu0 0.0
    %510 = vmatprep.subr.mxu0 0.0
    %511 = vmatpush1.msra.mxu0 0.0
    %512 = vmatprep.mubr.f32.mxu0 0.0
    %513 = vmatmul.mubr.f32.gmra.mrb[0].mxu0 %v443
    %v514 = vpop.f32.mrb[0].mxu0
    %v515 = vadd.f32 %v440, %v514
    %v516 = vpop.f32.mrb[0].mxu0
    %517 = vmatprep.mubr.f32.mxu0 0.0
    %518 = vmatmul.mubr.f32.gmra.mrb[0].mxu0 %v446
    %v519 = vpop.f32.mrb[0].mxu0
    %v520 = vadd.f32 %v440, %v519
    %v521 = vpop.f32.mrb[0].mxu0
    %522 = vdwg.mxu0
    %v523 = vld [vmem:[%s10] sm:$0xff]
    %v524 = vld [vmem:[%s10 + $0x8] sm:$0xff]
    %v525 = vld [vmem:[%s10 + $0x10] sm:$0xff]
    %v526 = vld [vmem:[%s10 + $0x18] sm:$0xff]
    %528 = vrot.lane.b32.xlu0 %v515, 96
    %v529 = vpop.permute.xlu0 %528
    %vm530 = vcmask 64512
    %v531 = vsel %vm530, %v515, 0
    %v533 = vsel %vm530, %v529, 0
    %535 = vmatprep.subr.mxu0 0.0
    %536 = vmatpush1.xpose.msra.mxu0 %v533
    %537 = vmatprep.subr.mxu0 0.0
    %538 = vmatpush1.xpose.msra.mxu0 0.0
    %539 = vmatprep.subr.mxu0 0.0
    %540 = vmatpush1.xpose.msra.mxu0 0.0
    %541 = vmatprep.subr.mxu0 0.0
    %542 = vmatpush1.xpose.msra.mxu0 0.0
    %543 = vmatprep.subr.mxu0 0.0
    %544 = vmatpush1.xpose.msra.mxu0 0.0
    %545 = vmatprep.subr.mxu0 0.0
    %546 = vmatpush1.xpose.msra.mxu0 0.0
    %547 = vmatprep.subr.mxu0 0.0
    %548 = vmatpush1.xpose.msra.mxu0 0.0
    %549 = vmatprep.subr.mxu0 0.0
    %550 = vmatpush1.xpose.msra.mxu0 0.0
    %551 = vmatprep.subr.mxu0 0.0
    %552 = vmatpush1.xpose.msra.mxu0 0.0
    %553 = vmatprep.subr.mxu0 0.0
    %554 = vmatpush1.xpose.msra.mxu0 0.0
    %555 = vmatprep.subr.mxu0 0.0
    %556 = vmatpush1.xpose.msra.mxu0 0.0
    %557 = vmatprep.subr.mxu0 0.0
    %558 = vmatpush1.xpose.msra.mxu0 0.0
    %559 = vmatprep.subr.mxu0 0.0
    %560 = vmatpush1.xpose.msra.mxu0 0.0
    %561 = vmatprep.subr.mxu0 0.0
    %562 = vmatpush1.xpose.msra.mxu0 0.0
    %563 = vmatprep.subr.mxu0 0.0
    %564 = vmatpush1.xpose.msra.mxu0 0.0
    %565 = vmatprep.subr.mxu0 0.0
    %566 = vmatpush1.xpose.msra.mxu0 0.0
    %567 = vmatprep.subr.mxu0 0.0
    %568 = vmatpush1.xpose.msra.mxu0 0.0
    %569 = vmatprep.subr.mxu0 0.0
    %570 = vmatpush1.xpose.msra.mxu0 0.0
    %571 = vmatprep.subr.mxu0 0.0
    %572 = vmatpush1.xpose.msra.mxu0 0.0
    %573 = vmatprep.subr.mxu0 0.0
    %574 = vmatpush1.xpose.msra.mxu0 0.0
    %575 = vmatprep.subr.mxu0 0.0
    %576 = vmatpush1.xpose.msra.mxu0 0.0
    %577 = vmatprep.subr.mxu0 0.0
    %578 = vmatpush1.xpose.msra.mxu0 0.0
    %579 = vmatprep.subr.mxu0 0.0
    %580 = vmatpush1.xpose.msra.mxu0 0.0
    %581 = vmatprep.subr.mxu0 0.0
    %582 = vmatpush1.xpose.msra.mxu0 0.0
    %583 = vmatprep.subr.mxu0 0.0
    %584 = vmatpush1.xpose.msra.mxu0 0.0
    %585 = vmatprep.subr.mxu0 0.0
    %586 = vmatpush1.xpose.msra.mxu0 0.0
    %587 = vmatprep.subr.mxu0 0.0
    %588 = vmatpush1.xpose.msra.mxu0 0.0
    %589 = vmatprep.subr.mxu0 0.0
    %590 = vmatpush1.xpose.msra.mxu0 0.0
    %591 = vmatprep.subr.mxu0 0.0
    %592 = vmatpush1.xpose.msra.mxu0 0.0
    %593 = vmatprep.subr.mxu0 0.0
    %594 = vmatpush1.xpose.msra.mxu0 0.0
    %595 = vmatprep.subr.mxu0 0.0
    %596 = vmatpush1.xpose.msra.mxu0 0.0
    %597 = vmatprep.subr.mxu0 0.0
    %598 = vmatpush1.xpose.msra.mxu0 0.0
    %599 = vmatprep.mubr.f32.mxu0 0.0
    %600 = vmatmul.mubr.f32.gmra.mrb[0].mxu0 %v531
    %v601 = vpop.f32.mrb[0].mxu0
    %v602 = vadd.f32 0.0, %v601
    %v603 = vpop.f32.mrb[0].mxu0
    %604 = vdwg.mxu0
    %606 = vrot.lane.b32.xlu0 %v520, 96
    %v607 = vpop.permute.xlu0 %606
    %v608 = vsel %vm530, %v520, 0
    %v610 = vsel %vm530, %v607, 0
    %612 = vmatprep.subr.mxu0 0.0
    %613 = vmatpush1.xpose.msra.mxu0 %v610
    %614 = vmatprep.subr.mxu0 0.0
    %615 = vmatpush1.xpose.msra.mxu0 0.0
    %616 = vmatprep.subr.mxu0 0.0
    %617 = vmatpush1.xpose.msra.mxu0 0.0
    %618 = vmatprep.subr.mxu0 0.0
    %619 = vmatpush1.xpose.msra.mxu0 0.0
    %620 = vmatprep.subr.mxu0 0.0
    %621 = vmatpush1.xpose.msra.mxu0 0.0
    %622 = vmatprep.subr.mxu0 0.0
    %623 = vmatpush1.xpose.msra.mxu0 0.0
    %624 = vmatprep.subr.mxu0 0.0
    %625 = vmatpush1.xpose.msra.mxu0 0.0
    %626 = vmatprep.subr.mxu0 0.0
    %627 = vmatpush1.xpose.msra.mxu0 0.0
    %628 = vmatprep.subr.mxu0 0.0
    %629 = vmatpush1.xpose.msra.mxu0 0.0
    %630 = vmatprep.subr.mxu0 0.0
    %631 = vmatpush1.xpose.msra.mxu0 0.0
    %632 = vmatprep.subr.mxu0 0.0
    %633 = vmatpush1.xpose.msra.mxu0 0.0
    %634 = vmatprep.subr.mxu0 0.0
    %635 = vmatpush1.xpose.msra.mxu0 0.0
    %636 = vmatprep.subr.mxu0 0.0
    %637 = vmatpush1.xpose.msra.mxu0 0.0
    %638 = vmatprep.subr.mxu0 0.0
    %639 = vmatpush1.xpose.msra.mxu0 0.0
    %640 = vmatprep.subr.mxu0 0.0
    %641 = vmatpush1.xpose.msra.mxu0 0.0
    %642 = vmatprep.subr.mxu0 0.0
    %643 = vmatpush1.xpose.msra.mxu0 0.0
    %644 = vmatprep.subr.mxu0 0.0
    %645 = vmatpush1.xpose.msra.mxu0 0.0
    %646 = vmatprep.subr.mxu0 0.0
    %647 = vmatpush1.xpose.msra.mxu0 0.0
    %648 = vmatprep.subr.mxu0 0.0
    %649 = vmatpush1.xpose.msra.mxu0 0.0
    %650 = vmatprep.subr.mxu0 0.0
    %651 = vmatpush1.xpose.msra.mxu0 0.0
    %652 = vmatprep.subr.mxu0 0.0
    %653 = vmatpush1.xpose.msra.mxu0 0.0
    %654 = vmatprep.subr.mxu0 0.0
    %655 = vmatpush1.xpose.msra.mxu0 0.0
    %656 = vmatprep.subr.mxu0 0.0
    %657 = vmatpush1.xpose.msra.mxu0 0.0
    %658 = vmatprep.subr.mxu0 0.0
    %659 = vmatpush1.xpose.msra.mxu0 0.0
    %660 = vmatprep.subr.mxu0 0.0
    %661 = vmatpush1.xpose.msra.mxu0 0.0
    %662 = vmatprep.subr.mxu0 0.0
    %663 = vmatpush1.xpose.msra.mxu0 0.0
    %664 = vmatprep.subr.mxu0 0.0
    %665 = vmatpush1.xpose.msra.mxu0 0.0
    %666 = vmatprep.subr.mxu0 0.0
    %667 = vmatpush1.xpose.msra.mxu0 0.0
    %668 = vmatprep.subr.mxu0 0.0
    %669 = vmatpush1.xpose.msra.mxu0 0.0
    %670 = vmatprep.subr.mxu0 0.0
    %671 = vmatpush1.xpose.msra.mxu0 0.0
    %672 = vmatprep.subr.mxu0 0.0
    %673 = vmatpush1.xpose.msra.mxu0 0.0
    %674 = vmatprep.subr.mxu0 0.0
    %675 = vmatpush1.xpose.msra.mxu0 0.0
    %676 = vmatprep.mubr.f32.mxu0 0.0
    %677 = vmatmul.mubr.f32.gmra.mrb[0].mxu0 %v608
    %v678 = vpop.f32.mrb[0].mxu0
    %v679 = vadd.f32 0.0, %v678
    %v680 = vpop.f32.mrb[0].mxu0
    %681 = vdwg.mxu0
    %v682 = vsel %vm530, %v602, -inf
    %683 = vmax.xlane.f32.xlu0 %v682
    %v684 = vpop.xlane.xlu0 %683
    %v685 = vsel %vm530, %v679, -inf
    %686 = vmax.xlane.f32.xlu0 %v685
    %v687 = vpop.xlane.xlu0 %686
    %v688 = vsub.f32 %v602, %v684
    %v689 = vsub.f32 %v679, %v687
    %v690 = vmul.f32 %v688, 1.442695
    %v691 = vpow.pop %v690
    %v692 = vmul.f32 %v689, 1.442695
    %v693 = vpow.pop %v692
    %v694 = vsel %vm530, %v691, 0.0
    %695 = vadd.xlane.f32.xlu0 %v694
    %v696 = vpop.xlane.xlu0 %695
    %v697 = vsel %vm530, %v693, 0.0
    %698 = vadd.xlane.f32.xlu0 %v697
    %v699 = vpop.xlane.xlu0 %698
    %v700 = vrcp.pop %v696
    %v701 = vrcp.pop %v699
    %v702 = vmul.f32 %v691, %v700
    %v703 = vmul.f32 %v693, %v701
    %704 = vrot.lane.b32.xlu0 %v515, 64
    %v705 = vpop.permute.xlu0 %704
    %v708 = vsel %vm530, %v702, 0
    %710 = vmatprep.subr.mxu0 0.0
    %711 = vmatpush1.msra.mxu0 %v705
    %712 = vmatprep.subr.mxu0 0.0
    %713 = vmatpush1.msra.mxu0 0.0
    %714 = vmatprep.subr.mxu0 0.0
    %715 = vmatpush1.msra.mxu0 0.0
    %716 = vmatprep.subr.mxu0 0.0
    %717 = vmatpush1.msra.mxu0 0.0
    %718 = vmatprep.subr.mxu0 0.0
    %719 = vmatpush1.msra.mxu0 0.0
    %720 = vmatprep.subr.mxu0 0.0
    %721 = vmatpush1.msra.mxu0 0.0
    %722 = vmatprep.subr.mxu0 0.0
    %723 = vmatpush1.msra.mxu0 0.0
    %724 = vmatprep.subr.mxu0 0.0
    %725 = vmatpush1.msra.mxu0 0.0
    %726 = vmatprep.subr.mxu0 0.0
    %727 = vmatpush1.msra.mxu0 0.0
    %728 = vmatprep.subr.mxu0 0.0
    %729 = vmatpush1.msra.mxu0 0.0
    %730 = vmatprep.subr.mxu0 0.0
    %731 = vmatpush1.msra.mxu0 0.0
    %732 = vmatprep.subr.mxu0 0.0
    %733 = vmatpush1.msra.mxu0 0.0
    %734 = vmatprep.subr.mxu0 0.0
    %735 = vmatpush1.msra.mxu0 0.0
    %736 = vmatprep.subr.mxu0 0.0
    %737 = vmatpush1.msra.mxu0 0.0
    %738 = vmatprep.subr.mxu0 0.0
    %739 = vmatpush1.msra.mxu0 0.0
    %740 = vmatprep.subr.mxu0 0.0
    %741 = vmatpush1.msra.mxu0 0.0
    %742 = vmatprep.subr.mxu0 0.0
    %743 = vmatpush1.msra.mxu0 0.0
    %744 = vmatprep.subr.mxu0 0.0
    %745 = vmatpush1.msra.mxu0 0.0
    %746 = vmatprep.subr.mxu0 0.0
    %747 = vmatpush1.msra.mxu0 0.0
    %748 = vmatprep.subr.mxu0 0.0
    %749 = vmatpush1.msra.mxu0 0.0
    %750 = vmatprep.subr.mxu0 0.0
    %751 = vmatpush1.msra.mxu0 0.0
    %752 = vmatprep.subr.mxu0 0.0
    %753 = vmatpush1.msra.mxu0 0.0
    %754 = vmatprep.subr.mxu0 0.0
    %755 = vmatpush1.msra.mxu0 0.0
    %756 = vmatprep.subr.mxu0 0.0
    %757 = vmatpush1.msra.mxu0 0.0
    %758 = vmatprep.subr.mxu0 0.0
    %759 = vmatpush1.msra.mxu0 0.0
    %760 = vmatprep.subr.mxu0 0.0
    %761 = vmatpush1.msra.mxu0 0.0
    %762 = vmatprep.subr.mxu0 0.0
    %763 = vmatpush1.msra.mxu0 0.0
    %764 = vmatprep.subr.mxu0 0.0
    %765 = vmatpush1.msra.mxu0 0.0
    %766 = vmatprep.subr.mxu0 0.0
    %767 = vmatpush1.msra.mxu0 0.0
    %768 = vmatprep.subr.mxu0 0.0
    %769 = vmatpush1.msra.mxu0 0.0
    %770 = vmatprep.subr.mxu0 0.0
    %771 = vmatpush1.msra.mxu0 0.0
    %772 = vmatprep.subr.mxu0 0.0
    %773 = vmatpush1.msra.mxu0 0.0
    %774 = vmatprep.mubr.f32.mxu0 0.0
    %775 = vmatmul.mubr.f32.gmra.mrb[0].mxu0 %v708
    %v776 = vpop.f32.mrb[0].mxu0
    %v777 = vadd.f32 0.0, %v776
    %v778 = vpop.f32.mrb[0].mxu0
    %779 = vdwg.mxu0
    %780 = vrot.lane.b32.xlu0 %v520, 64
    %v781 = vpop.permute.xlu0 %780
    %v784 = vsel %vm530, %v703, 0
    %786 = vmatprep.subr.mxu0 0.0
    %787 = vmatpush1.msra.mxu0 %v781
    %788 = vmatprep.subr.mxu0 0.0
    %789 = vmatpush1.msra.mxu0 0.0
    %790 = vmatprep.subr.mxu0 0.0
    %791 = vmatpush1.msra.mxu0 0.0
    %792 = vmatprep.subr.mxu0 0.0
    %793 = vmatpush1.msra.mxu0 0.0
    %794 = vmatprep.subr.mxu0 0.0
    %795 = vmatpush1.msra.mxu0 0.0
    %796 = vmatprep.subr.mxu0 0.0
    %797 = vmatpush1.msra.mxu0 0.0
    %798 = vmatprep.subr.mxu0 0.0
    %799 = vmatpush1.msra.mxu0 0.0
    %800 = vmatprep.subr.mxu0 0.0
    %801 = vmatpush1.msra.mxu0 0.0
    %802 = vmatprep.subr.mxu0 0.0
    %803 = vmatpush1.msra.mxu0 0.0
    %804 = vmatprep.subr.mxu0 0.0
    %805 = vmatpush1.msra.mxu0 0.0
    %806 = vmatprep.subr.mxu0 0.0
    %807 = vmatpush1.msra.mxu0 0.0
    %808 = vmatprep.subr.mxu0 0.0
    %809 = vmatpush1.msra.mxu0 0.0
    %810 = vmatprep.subr.mxu0 0.0
    %811 = vmatpush1.msra.mxu0 0.0
    %812 = vmatprep.subr.mxu0 0.0
    %813 = vmatpush1.msra.mxu0 0.0
    %814 = vmatprep.subr.mxu0 0.0
    %815 = vmatpush1.msra.mxu0 0.0
    %816 = vmatprep.subr.mxu0 0.0
    %817 = vmatpush1.msra.mxu0 0.0
    %818 = vmatprep.subr.mxu0 0.0
    %819 = vmatpush1.msra.mxu0 0.0
    %820 = vmatprep.subr.mxu0 0.0
    %821 = vmatpush1.msra.mxu0 0.0
    %822 = vmatprep.subr.mxu0 0.0
    %823 = vmatpush1.msra.mxu0 0.0
    %824 = vmatprep.subr.mxu0 0.0
    %825 = vmatpush1.msra.mxu0 0.0
    %826 = vmatprep.subr.mxu0 0.0
    %827 = vmatpush1.msra.mxu0 0.0
    %828 = vmatprep.subr.mxu0 0.0
    %829 = vmatpush1.msra.mxu0 0.0
    %830 = vmatprep.subr.mxu0 0.0
    %831 = vmatpush1.msra.mxu0 0.0
    %832 = vmatprep.subr.mxu0 0.0
    %833 = vmatpush1.msra.mxu0 0.0
    %834 = vmatprep.subr.mxu0 0.0
    %835 = vmatpush1.msra.mxu0 0.0
    %836 = vmatprep.subr.mxu0 0.0
    %837 = vmatpush1.msra.mxu0 0.0
    %838 = vmatprep.subr.mxu0 0.0
    %839 = vmatpush1.msra.mxu0 0.0
    %840 = vmatprep.subr.mxu0 0.0
    %841 = vmatpush1.msra.mxu0 0.0
    %842 = vmatprep.subr.mxu0 0.0
    %843 = vmatpush1.msra.mxu0 0.0
    %844 = vmatprep.subr.mxu0 0.0
    %845 = vmatpush1.msra.mxu0 0.0
    %846 = vmatprep.subr.mxu0 0.0
    %847 = vmatpush1.msra.mxu0 0.0
    %848 = vmatprep.subr.mxu0 0.0
    %849 = vmatpush1.msra.mxu0 0.0
    %850 = vmatprep.mubr.f32.mxu0 0.0
    %851 = vmatmul.mubr.f32.gmra.mrb[0].mxu0 %v784
    %v852 = vpop.f32.mrb[0].mxu0
    %v853 = vadd.f32 0.0, %v852
    %v854 = vpop.f32.mrb[0].mxu0
    %855 = vdwg.mxu0
    %856 = vrot.lane.b32.xlu0 %v515, 120
    %v857 = vpop.permute.xlu0 %856
    %858 = vrot.lane.b32.xlu0 %v515, 88
    %v859 = vpop.permute.xlu0 %858
    %v860 = vsel %vm530, %v857, 0
    %v862 = vsel %vm530, %v859, 0
    %864 = vmatprep.subr.mxu0 0.0
    %865 = vmatpush1.xpose.msra.mxu0 %v862
    %866 = vmatprep.subr.mxu0 0.0
    %867 = vmatpush1.xpose.msra.mxu0 0.0
    %868 = vmatprep.subr.mxu0 0.0
    %869 = vmatpush1.xpose.msra.mxu0 0.0
    %870 = vmatprep.subr.mxu0 0.0
    %871 = vmatpush1.xpose.msra.mxu0 0.0
    %872 = vmatprep.subr.mxu0 0.0
    %873 = vmatpush1.xpose.msra.mxu0 0.0
    %874 = vmatprep.subr.mxu0 0.0
    %875 = vmatpush1.xpose.msra.mxu0 0.0
    %876 = vmatprep.subr.mxu0 0.0
    %877 = vmatpush1.xpose.msra.mxu0 0.0
    %878 = vmatprep.subr.mxu0 0.0
    %879 = vmatpush1.xpose.msra.mxu0 0.0
    %880 = vmatprep.subr.mxu0 0.0
    %881 = vmatpush1.xpose.msra.mxu0 0.0
    %882 = vmatprep.subr.mxu0 0.0
    %883 = vmatpush1.xpose.msra.mxu0 0.0
    %884 = vmatprep.subr.mxu0 0.0
    %885 = vmatpush1.xpose.msra.mxu0 0.0
    %886 = vmatprep.subr.mxu0 0.0
    %887 = vmatpush1.xpose.msra.mxu0 0.0
    %888 = vmatprep.subr.mxu0 0.0
    %889 = vmatpush1.xpose.msra.mxu0 0.0
    %890 = vmatprep.subr.mxu0 0.0
    %891 = vmatpush1.xpose.msra.mxu0 0.0
    %892 = vmatprep.subr.mxu0 0.0
    %893 = vmatpush1.xpose.msra.mxu0 0.0
    %894 = vmatprep.subr.mxu0 0.0
    %895 = vmatpush1.xpose.msra.mxu0 0.0
    %896 = vmatprep.subr.mxu0 0.0
    %897 = vmatpush1.xpose.msra.mxu0 0.0
    %898 = vmatprep.subr.mxu0 0.0
    %899 = vmatpush1.xpose.msra.mxu0 0.0
    %900 = vmatprep.subr.mxu0 0.0
    %901 = vmatpush1.xpose.msra.mxu0 0.0
    %902 = vmatprep.subr.mxu0 0.0
    %903 = vmatpush1.xpose.msra.mxu0 0.0
    %904 = vmatprep.subr.mxu0 0.0
    %905 = vmatpush1.xpose.msra.mxu0 0.0
    %906 = vmatprep.subr.mxu0 0.0
    %907 = vmatpush1.xpose.msra.mxu0 0.0
    %908 = vmatprep.subr.mxu0 0.0
    %909 = vmatpush1.xpose.msra.mxu0 0.0
    %910 = vmatprep.subr.mxu0 0.0
    %911 = vmatpush1.xpose.msra.mxu0 0.0
    %912 = vmatprep.subr.mxu0 0.0
    %913 = vmatpush1.xpose.msra.mxu0 0.0
    %914 = vmatprep.subr.mxu0 0.0
    %915 = vmatpush1.xpose.msra.mxu0 0.0
    %916 = vmatprep.subr.mxu0 0.0
    %917 = vmatpush1.xpose.msra.mxu0 0.0
    %918 = vmatprep.subr.mxu0 0.0
    %919 = vmatpush1.xpose.msra.mxu0 0.0
    %920 = vmatprep.subr.mxu0 0.0
    %921 = vmatpush1.xpose.msra.mxu0 0.0
    %922 = vmatprep.subr.mxu0 0.0
    %923 = vmatpush1.xpose.msra.mxu0 0.0
    %924 = vmatprep.subr.mxu0 0.0
    %925 = vmatpush1.xpose.msra.mxu0 0.0
    %926 = vmatprep.subr.mxu0 0.0
    %927 = vmatpush1.xpose.msra.mxu0 0.0
    %928 = vmatprep.mubr.f32.mxu0 0.0
    %929 = vmatmul.mubr.f32.gmra.mrb[0].mxu0 %v860
    %v930 = vpop.f32.mrb[0].mxu0
    %v931 = vadd.f32 0.0, %v930
    %v932 = vpop.f32.mrb[0].mxu0
    %933 = vdwg.mxu0
    %934 = vrot.lane.b32.xlu0 %v520, 120
    %v935 = vpop.permute.xlu0 %934
    %936 = vrot.lane.b32.xlu0 %v520, 88
    %v937 = vpop.permute.xlu0 %936
    %v938 = vsel %vm530, %v935, 0
    %v940 = vsel %vm530, %v937, 0
    %942 = vmatprep.subr.mxu0 0.0
    %943 = vmatpush1.xpose.msra.mxu0 %v940
    %944 = vmatprep.subr.mxu0 0.0
    %945 = vmatpush1.xpose.msra.mxu0 0.0
    %946 = vmatprep.subr.mxu0 0.0
    %947 = vmatpush1.xpose.msra.mxu0 0.0
    %948 = vmatprep.subr.mxu0 0.0
    %949 = vmatpush1.xpose.msra.mxu0 0.0
    %950 = vmatprep.subr.mxu0 0.0
    %951 = vmatpush1.xpose.msra.mxu0 0.0
    %952 = vmatprep.subr.mxu0 0.0
    %953 = vmatpush1.xpose.msra.mxu0 0.0
    %954 = vmatprep.subr.mxu0 0.0
    %955 = vmatpush1.xpose.msra.mxu0 0.0
    %956 = vmatprep.subr.mxu0 0.0
    %957 = vmatpush1.xpose.msra.mxu0 0.0
    %958 = vmatprep.subr.mxu0 0.0
    %959 = vmatpush1.xpose.msra.mxu0 0.0
    %960 = vmatprep.subr.mxu0 0.0
    %961 = vmatpush1.xpose.msra.mxu0 0.0
    %962 = vmatprep.subr.mxu0 0.0
    %963 = vmatpush1.xpose.msra.mxu0 0.0
    %964 = vmatprep.subr.mxu0 0.0
    %965 = vmatpush1.xpose.msra.mxu0 0.0
    %966 = vmatprep.subr.mxu0 0.0
    %967 = vmatpush1.xpose.msra.mxu0 0.0
    %968 = vmatprep.subr.mxu0 0.0
    %969 = vmatpush1.xpose.msra.mxu0 0.0
    %970 = vmatprep.subr.mxu0 0.0
    %971 = vmatpush1.xpose.msra.mxu0 0.0
    %972 = vmatprep.subr.mxu0 0.0
    %973 = vmatpush1.xpose.msra.mxu0 0.0
    %974 = vmatprep.subr.mxu0 0.0
    %975 = vmatpush1.xpose.msra.mxu0 0.0
    %976 = vmatprep.subr.mxu0 0.0
    %977 = vmatpush1.xpose.msra.mxu0 0.0
    %978 = vmatprep.subr.mxu0 0.0
    %979 = vmatpush1.xpose.msra.mxu0 0.0
    %980 = vmatprep.subr.mxu0 0.0
    %981 = vmatpush1.xpose.msra.mxu0 0.0
    %982 = vmatprep.subr.mxu0 0.0
    %983 = vmatpush1.xpose.msra.mxu0 0.0
    %984 = vmatprep.subr.mxu0 0.0
    %985 = vmatpush1.xpose.msra.mxu0 0.0
    %986 = vmatprep.subr.mxu0 0.0
    %987 = vmatpush1.xpose.msra.mxu0 0.0
    %988 = vmatprep.subr.mxu0 0.0
    %989 = vmatpush1.xpose.msra.mxu0 0.0
    %990 = vmatprep.subr.mxu0 0.0
    %991 = vmatpush1.xpose.msra.mxu0 0.0
    %992 = vmatprep.subr.mxu0 0.0
    %993 = vmatpush1.xpose.msra.mxu0 0.0
    %994 = vmatprep.subr.mxu0 0.0
    %995 = vmatpush1.xpose.msra.mxu0 0.0
    %996 = vmatprep.subr.mxu0 0.0
    %997 = vmatpush1.xpose.msra.mxu0 0.0
    %998 = vmatprep.subr.mxu0 0.0
    %999 = vmatpush1.xpose.msra.mxu0 0.0
    %1000 = vmatprep.subr.mxu0 0.0
    %1001 = vmatpush1.xpose.msra.mxu0 0.0
    %1002 = vmatprep.subr.mxu0 0.0
    %1003 = vmatpush1.xpose.msra.mxu0 0.0
    %1004 = vmatprep.subr.mxu0 0.0
    %1005 = vmatpush1.xpose.msra.mxu0 0.0
    %1006 = vmatprep.mubr.f32.mxu0 0.0
    %1007 = vmatmul.mubr.f32.gmra.mrb[0].mxu0 %v938
    %v1008 = vpop.f32.mrb[0].mxu0
    %v1009 = vadd.f32 0.0, %v1008
    %v1010 = vpop.f32.mrb[0].mxu0
    %1011 = vdwg.mxu0
    %v1012 = vsel %vm530, %v931, -inf
    %1013 = vmax.xlane.f32.xlu0 %v1012
    %v1014 = vpop.xlane.xlu0 %1013
    %v1015 = vsel %vm530, %v1009, -inf
    %1016 = vmax.xlane.f32.xlu0 %v1015
    %v1017 = vpop.xlane.xlu0 %1016
    %v1018 = vsub.f32 %v931, %v1014
    %v1019 = vsub.f32 %v1009, %v1017
    %v1020 = vmul.f32 %v1018, 1.442695
    %v1021 = vpow.pop %v1020
    %v1022 = vmul.f32 %v1019, 1.442695
    %v1023 = vpow.pop %v1022
    %v1024 = vsel %vm530, %v1021, 0.0
    %1025 = vadd.xlane.f32.xlu0 %v1024
    %v1026 = vpop.xlane.xlu0 %1025
    %v1027 = vsel %vm530, %v1023, 0.0
    %1028 = vadd.xlane.f32.xlu0 %v1027
    %v1029 = vpop.xlane.xlu0 %1028
    %v1030 = vrcp.pop %v1026
    %v1031 = vrcp.pop %v1029
    %v1032 = vmul.f32 %v1021, %v1030
    %v1033 = vmul.f32 %v1023, %v1031
    %1034 = vrot.lane.b32.xlu0 %v515, 56
    %v1035 = vpop.permute.xlu0 %1034
    %v1038 = vsel %vm530, %v1032, 0
    %1040 = vmatprep.subr.mxu0 0.0
    %1041 = vmatpush1.msra.mxu0 %v1035
    %1042 = vmatprep.subr.mxu0 0.0
    %1043 = vmatpush1.msra.mxu0 0.0
    %1044 = vmatprep.subr.mxu0 0.0
    %1045 = vmatpush1.msra.mxu0 0.0
    %1046 = vmatprep.subr.mxu0 0.0
    %1047 = vmatpush1.msra.mxu0 0.0
    %1048 = vmatprep.subr.mxu0 0.0
    %1049 = vmatpush1.msra.mxu0 0.0
    %1050 = vmatprep.subr.mxu0 0.0
    %1051 = vmatpush1.msra.mxu0 0.0
    %1052 = vmatprep.subr.mxu0 0.0
    %1053 = vmatpush1.msra.mxu0 0.0
    %1054 = vmatprep.subr.mxu0 0.0
    %1055 = vmatpush1.msra.mxu0 0.0
    %1056 = vmatprep.subr.mxu0 0.0
    %1057 = vmatpush1.msra.mxu0 0.0
    %1058 = vmatprep.subr.mxu0 0.0
    %1059 = vmatpush1.msra.mxu0 0.0
    %1060 = vmatprep.subr.mxu0 0.0
    %1061 = vmatpush1.msra.mxu0 0.0
    %1062 = vmatprep.subr.mxu0 0.0
    %1063 = vmatpush1.msra.mxu0 0.0
    %1064 = vmatprep.subr.mxu0 0.0
    %1065 = vmatpush1.msra.mxu0 0.0
    %1066 = vmatprep.subr.mxu0 0.0
    %1067 = vmatpush1.msra.mxu0 0.0
    %1068 = vmatprep.subr.mxu0 0.0
    %1069 = vmatpush1.msra.mxu0 0.0
    %1070 = vmatprep.subr.mxu0 0.0
    %1071 = vmatpush1.msra.mxu0 0.0
    %1072 = vmatprep.subr.mxu0 0.0
    %1073 = vmatpush1.msra.mxu0 0.0
    %1074 = vmatprep.subr.mxu0 0.0
    %1075 = vmatpush1.msra.mxu0 0.0
    %1076 = vmatprep.subr.mxu0 0.0
    %1077 = vmatpush1.msra.mxu0 0.0
    %1078 = vmatprep.subr.mxu0 0.0
    %1079 = vmatpush1.msra.mxu0 0.0
    %1080 = vmatprep.subr.mxu0 0.0
    %1081 = vmatpush1.msra.mxu0 0.0
    %1082 = vmatprep.subr.mxu0 0.0
    %1083 = vmatpush1.msra.mxu0 0.0
    %1084 = vmatprep.subr.mxu0 0.0
    %1085 = vmatpush1.msra.mxu0 0.0
    %1086 = vmatprep.subr.mxu0 0.0
    %1087 = vmatpush1.msra.mxu0 0.0
    %1088 = vmatprep.subr.mxu0 0.0
    %1089 = vmatpush1.msra.mxu0 0.0
    %1090 = vmatprep.subr.mxu0 0.0
    %1091 = vmatpush1.msra.mxu0 0.0
    %1092 = vmatprep.subr.mxu0 0.0
    %1093 = vmatpush1.msra.mxu0 0.0
    %1094 = vmatprep.subr.mxu0 0.0
    %1095 = vmatpush1.msra.mxu0 0.0
    %1096 = vmatprep.subr.mxu0 0.0
    %1097 = vmatpush1.msra.mxu0 0.0
    %1098 = vmatprep.subr.mxu0 0.0
    %1099 = vmatpush1.msra.mxu0 0.0
    %1100 = vmatprep.subr.mxu0 0.0
    %1101 = vmatpush1.msra.mxu0 0.0
    %1102 = vmatprep.subr.mxu0 0.0
    %1103 = vmatpush1.msra.mxu0 0.0
    %1104 = vmatprep.mubr.f32.mxu0 0.0
    %1105 = vmatmul.mubr.f32.gmra.mrb[0].mxu0 %v1038
    %v1106 = vpop.f32.mrb[0].mxu0
    %v1107 = vadd.f32 0.0, %v1106
    %v1108 = vpop.f32.mrb[0].mxu0
    %1109 = vdwg.mxu0
    %1110 = vrot.lane.b32.xlu0 %v520, 56
    %v1111 = vpop.permute.xlu0 %1110
    %v1114 = vsel %vm530, %v1033, 0
    %1116 = vmatprep.subr.mxu0 0.0
    %1117 = vmatpush1.msra.mxu0 %v1111
    %1118 = vmatprep.subr.mxu0 0.0
    %1119 = vmatpush1.msra.mxu0 0.0
    %1120 = vmatprep.subr.mxu0 0.0
    %1121 = vmatpush1.msra.mxu0 0.0
    %1122 = vmatprep.subr.mxu0 0.0
    %1123 = vmatpush1.msra.mxu0 0.0
    %1124 = vmatprep.subr.mxu0 0.0
    %1125 = vmatpush1.msra.mxu0 0.0
    %1126 = vmatprep.subr.mxu0 0.0
    %1127 = vmatpush1.msra.mxu0 0.0
    %1128 = vmatprep.subr.mxu0 0.0
    %1129 = vmatpush1.msra.mxu0 0.0
    %1130 = vmatprep.subr.mxu0 0.0
    %1131 = vmatpush1.msra.mxu0 0.0
    %1132 = vmatprep.subr.mxu0 0.0
    %1133 = vmatpush1.msra.mxu0 0.0
    %1134 = vmatprep.subr.mxu0 0.0
    %1135 = vmatpush1.msra.mxu0 0.0
    %1136 = vmatprep.subr.mxu0 0.0
    %1137 = vmatpush1.msra.mxu0 0.0
    %1138 = vmatprep.subr.mxu0 0.0
    %1139 = vmatpush1.msra.mxu0 0.0
    %1140 = vmatprep.subr.mxu0 0.0
    %1141 = vmatpush1.msra.mxu0 0.0
    %1142 = vmatprep.subr.mxu0 0.0
    %1143 = vmatpush1.msra.mxu0 0.0
    %1144 = vmatprep.subr.mxu0 0.0
    %1145 = vmatpush1.msra.mxu0 0.0
    %1146 = vmatprep.subr.mxu0 0.0
    %1147 = vmatpush1.msra.mxu0 0.0
    %1148 = vmatprep.subr.mxu0 0.0
    %1149 = vmatpush1.msra.mxu0 0.0
    %1150 = vmatprep.subr.mxu0 0.0
    %1151 = vmatpush1.msra.mxu0 0.0
    %1152 = vmatprep.subr.mxu0 0.0
    %1153 = vmatpush1.msra.mxu0 0.0
    %1154 = vmatprep.subr.mxu0 0.0
    %1155 = vmatpush1.msra.mxu0 0.0
    %1156 = vmatprep.subr.mxu0 0.0
    %1157 = vmatpush1.msra.mxu0 0.0
    %1158 = vmatprep.subr.mxu0 0.0
    %1159 = vmatpush1.msra.mxu0 0.0
    %1160 = vmatprep.subr.mxu0 0.0
    %1161 = vmatpush1.msra.mxu0 0.0
    %1162 = vmatprep.subr.mxu0 0.0
    %1163 = vmatpush1.msra.mxu0 0.0
    %1164 = vmatprep.subr.mxu0 0.0
    %1165 = vmatpush1.msra.mxu0 0.0
    %1166 = vmatprep.subr.mxu0 0.0
    %1167 = vmatpush1.msra.mxu0 0.0
    %1168 = vmatprep.subr.mxu0 0.0
    %1169 = vmatpush1.msra.mxu0 0.0
    %1170 = vmatprep.subr.mxu0 0.0
    %1171 = vmatpush1.msra.mxu0 0.0
    %1172 = vmatprep.subr.mxu0 0.0
    %1173 = vmatpush1.msra.mxu0 0.0
    %1174 = vmatprep.subr.mxu0 0.0
    %1175 = vmatpush1.msra.mxu0 0.0
    %1176 = vmatprep.subr.mxu0 0.0
    %1177 = vmatpush1.msra.mxu0 0.0
    %1178 = vmatprep.subr.mxu0 0.0
    %1179 = vmatpush1.msra.mxu0 0.0
    %1180 = vmatprep.mubr.f32.mxu0 0.0
    %1181 = vmatmul.mubr.f32.gmra.mrb[0].mxu0 %v1114
    %v1182 = vpop.f32.mrb[0].mxu0
    %v1183 = vadd.f32 0.0, %v1182
    %v1184 = vpop.f32.mrb[0].mxu0
    %1185 = vdwg.mxu0
    %v1187 = vsel %vm530, %v1107, 0
    %v1190 = vsel %vm530, %v1183, 0
    %1192 = vmatprep.subr.mxu0 0.0
    %1193 = vmatpush1.msra.mxu0 %v524
    %1194 = vmatprep.subr.mxu0 0.0
    %1195 = vmatpush1.msra.mxu0 0.0
    %1196 = vmatprep.subr.mxu0 0.0
    %1197 = vmatpush1.msra.mxu0 0.0
    %1198 = vmatprep.subr.mxu0 0.0
    %1199 = vmatpush1.msra.mxu0 0.0
    %1200 = vmatprep.subr.mxu0 0.0
    %1201 = vmatpush1.msra.mxu0 0.0
    %1202 = vmatprep.subr.mxu0 0.0
    %1203 = vmatpush1.msra.mxu0 0.0
    %1204 = vmatprep.subr.mxu0 0.0
    %1205 = vmatpush1.msra.mxu0 0.0
    %1206 = vmatprep.subr.mxu0 0.0
    %1207 = vmatpush1.msra.mxu0 0.0
    %1208 = vmatprep.subr.mxu0 0.0
    %1209 = vmatpush1.msra.mxu0 0.0
    %1210 = vmatprep.subr.mxu0 0.0
    %1211 = vmatpush1.msra.mxu0 0.0
    %1212 = vmatprep.subr.mxu0 0.0
    %1213 = vmatpush1.msra.mxu0 0.0
    %1214 = vmatprep.subr.mxu0 0.0
    %1215 = vmatpush1.msra.mxu0 0.0
    %1216 = vmatprep.subr.mxu0 0.0
    %1217 = vmatpush1.msra.mxu0 0.0
    %1218 = vmatprep.subr.mxu0 0.0
    %1219 = vmatpush1.msra.mxu0 0.0
    %1220 = vmatprep.subr.mxu0 0.0
    %1221 = vmatpush1.msra.mxu0 0.0
    %1222 = vmatprep.subr.mxu0 0.0
    %1223 = vmatpush1.msra.mxu0 0.0
    %1224 = vmatprep.subr.mxu0 0.0
    %1225 = vmatpush1.msra.mxu0 0.0
    %1226 = vmatprep.subr.mxu0 0.0
    %1227 = vmatpush1.msra.mxu0 0.0
    %1228 = vmatprep.subr.mxu0 0.0
    %1229 = vmatpush1.msra.mxu0 0.0
    %1230 = vmatprep.subr.mxu0 0.0
    %1231 = vmatpush1.msra.mxu0 0.0
    %1232 = vmatprep.subr.mxu0 0.0
    %1233 = vmatpush1.msra.mxu0 0.0
    %1234 = vmatprep.subr.mxu0 0.0
    %1235 = vmatpush1.msra.mxu0 0.0
    %1236 = vmatprep.subr.mxu0 0.0
    %1237 = vmatpush1.msra.mxu0 0.0
    %1238 = vmatprep.subr.mxu0 0.0
    %1239 = vmatpush1.msra.mxu0 0.0
    %1240 = vmatprep.subr.mxu0 0.0
    %1241 = vmatpush1.msra.mxu0 0.0
    %1242 = vmatprep.subr.mxu0 0.0
    %1243 = vmatpush1.msra.mxu0 0.0
    %1244 = vmatprep.subr.mxu0 0.0
    %1245 = vmatpush1.msra.mxu0 0.0
    %1246 = vmatprep.subr.mxu0 0.0
    %1247 = vmatpush1.msra.mxu0 0.0
    %1248 = vmatprep.subr.mxu0 0.0
    %1249 = vmatpush1.msra.mxu0 0.0
    %1250 = vmatprep.subr.mxu0 0.0
    %1251 = vmatpush1.msra.mxu0 0.0
    %1252 = vmatprep.subr.mxu0 0.0
    %1253 = vmatpush1.msra.mxu0 0.0
    %1254 = vmatprep.subr.mxu0 0.0
    %1255 = vmatpush1.msra.mxu0 0.0
    %1256 = vmatprep.mubr.f32.mxu0 0.0
    %1257 = vmatmul.mubr.f32.gmra.mrb[0].mxu0 %v1187
    %v1258 = vpop.f32.mrb[0].mxu0
    %v1259 = vadd.f32 0.0, %v1258
    %v1260 = vpop.f32.mrb[0].mxu0
    %1261 = vmatprep.mubr.f32.mxu0 0.0
    %1262 = vmatmul.mubr.f32.gmra.mrb[0].mxu0 %v1190
    %v1263 = vpop.f32.mrb[0].mxu0
    %v1264 = vadd.f32 0.0, %v1263
    %v1265 = vpop.f32.mrb[0].mxu0
    %1266 = vdwg.mxu0
    %v1268 = vsel %vm530, %v777, 0
    %v1271 = vsel %vm530, %v853, 0
    %1273 = vmatprep.subr.mxu0 0.0
    %1274 = vmatpush1.msra.mxu0 %v523
    %1275 = vmatprep.subr.mxu0 0.0
    %1276 = vmatpush1.msra.mxu0 0.0
    %1277 = vmatprep.subr.mxu0 0.0
    %1278 = vmatpush1.msra.mxu0 0.0
    %1279 = vmatprep.subr.mxu0 0.0
    %1280 = vmatpush1.msra.mxu0 0.0
    %1281 = vmatprep.subr.mxu0 0.0
    %1282 = vmatpush1.msra.mxu0 0.0
    %1283 = vmatprep.subr.mxu0 0.0
    %1284 = vmatpush1.msra.mxu0 0.0
    %1285 = vmatprep.subr.mxu0 0.0
    %1286 = vmatpush1.msra.mxu0 0.0
    %1287 = vmatprep.subr.mxu0 0.0
    %1288 = vmatpush1.msra.mxu0 0.0
    %1289 = vmatprep.subr.mxu0 0.0
    %1290 = vmatpush1.msra.mxu0 0.0
    %1291 = vmatprep.subr.mxu0 0.0
    %1292 = vmatpush1.msra.mxu0 0.0
    %1293 = vmatprep.subr.mxu0 0.0
    %1294 = vmatpush1.msra.mxu0 0.0
    %1295 = vmatprep.subr.mxu0 0.0
    %1296 = vmatpush1.msra.mxu0 0.0
    %1297 = vmatprep.subr.mxu0 0.0
    %1298 = vmatpush1.msra.mxu0 0.0
    %1299 = vmatprep.subr.mxu0 0.0
    %1300 = vmatpush1.msra.mxu0 0.0
    %1301 = vmatprep.subr.mxu0 0.0
    %1302 = vmatpush1.msra.mxu0 0.0
    %1303 = vmatprep.subr.mxu0 0.0
    %1304 = vmatpush1.msra.mxu0 0.0
    %1305 = vmatprep.subr.mxu0 0.0
    %1306 = vmatpush1.msra.mxu0 0.0
    %1307 = vmatprep.subr.mxu0 0.0
    %1308 = vmatpush1.msra.mxu0 0.0
    %1309 = vmatprep.subr.mxu0 0.0
    %1310 = vmatpush1.msra.mxu0 0.0
    %1311 = vmatprep.subr.mxu0 0.0
    %1312 = vmatpush1.msra.mxu0 0.0
    %1313 = vmatprep.subr.mxu0 0.0
    %1314 = vmatpush1.msra.mxu0 0.0
    %1315 = vmatprep.subr.mxu0 0.0
    %1316 = vmatpush1.msra.mxu0 0.0
    %1317 = vmatprep.subr.mxu0 0.0
    %1318 = vmatpush1.msra.mxu0 0.0
    %1319 = vmatprep.subr.mxu0 0.0
    %1320 = vmatpush1.msra.mxu0 0.0
    %1321 = vmatprep.subr.mxu0 0.0
    %1322 = vmatpush1.msra.mxu0 0.0
    %1323 = vmatprep.subr.mxu0 0.0
    %1324 = vmatpush1.msra.mxu0 0.0
    %1325 = vmatprep.subr.mxu0 0.0
    %1326 = vmatpush1.msra.mxu0 0.0
    %1327 = vmatprep.subr.mxu0 0.0
    %1328 = vmatpush1.msra.mxu0 0.0
    %1329 = vmatprep.subr.mxu0 0.0
    %1330 = vmatpush1.msra.mxu0 0.0
    %1331 = vmatprep.subr.mxu0 0.0
    %1332 = vmatpush1.msra.mxu0 0.0
    %1333 = vmatprep.subr.mxu0 0.0
    %1334 = vmatpush1.msra.mxu0 0.0
    %1335 = vmatprep.subr.mxu0 0.0
    %1336 = vmatpush1.msra.mxu0 0.0
    %1337 = vmatprep.mubr.f32.mxu0 0.0
    %1338 = vmatmul.mubr.f32.gmra.mrb[0].mxu0 %v1268
    %v1339 = vpop.f32.mrb[0].mxu0
    %v1340 = vadd.f32 %v1259, %v1339
    %v1341 = vpop.f32.mrb[0].mxu0
    %1342 = vmatprep.mubr.f32.mxu0 0.0
    %1343 = vmatmul.mubr.f32.gmra.mrb[0].mxu0 %v1271
    %v1344 = vpop.f32.mrb[0].mxu0
    %v1345 = vadd.f32 %v1264, %v1344
    %v1346 = vpop.f32.mrb[0].mxu0
    %1347 = vdwg.mxu0
    %1348 = vrot.lane.b32.xlu0 %v515, 112
    %v1349 = vpop.permute.xlu0 %1348
    %1350 = vrot.lane.b32.xlu0 %v515, 80
    %v1351 = vpop.permute.xlu0 %1350
    %v1352 = vsel %vm530, %v1349, 0
    %v1354 = vsel %vm530, %v1351, 0
    %1356 = vmatprep.subr.mxu0 0.0
    %1357 = vmatpush1.xpose.msra.mxu0 %v1354
    %1358 = vmatprep.subr.mxu0 0.0
    %1359 = vmatpush1.xpose.msra.mxu0 0.0
    %1360 = vmatprep.subr.mxu0 0.0
    %1361 = vmatpush1.xpose.msra.mxu0 0.0
    %1362 = vmatprep.subr.mxu0 0.0
    %1363 = vmatpush1.xpose.msra.mxu0 0.0
    %1364 = vmatprep.subr.mxu0 0.0
    %1365 = vmatpush1.xpose.msra.mxu0 0.0
    %1366 = vmatprep.subr.mxu0 0.0
    %1367 = vmatpush1.xpose.msra.mxu0 0.0
    %1368 = vmatprep.subr.mxu0 0.0
    %1369 = vmatpush1.xpose.msra.mxu0 0.0
    %1370 = vmatprep.subr.mxu0 0.0
    %1371 = vmatpush1.xpose.msra.mxu0 0.0
    %1372 = vmatprep.subr.mxu0 0.0
    %1373 = vmatpush1.xpose.msra.mxu0 0.0
    %1374 = vmatprep.subr.mxu0 0.0
    %1375 = vmatpush1.xpose.msra.mxu0 0.0
    %1376 = vmatprep.subr.mxu0 0.0
    %1377 = vmatpush1.xpose.msra.mxu0 0.0
    %1378 = vmatprep.subr.mxu0 0.0
    %1379 = vmatpush1.xpose.msra.mxu0 0.0
    %1380 = vmatprep.subr.mxu0 0.0
    %1381 = vmatpush1.xpose.msra.mxu0 0.0
    %1382 = vmatprep.subr.mxu0 0.0
    %1383 = vmatpush1.xpose.msra.mxu0 0.0
    %1384 = vmatprep.subr.mxu0 0.0
    %1385 = vmatpush1.xpose.msra.mxu0 0.0
    %1386 = vmatprep.subr.mxu0 0.0
    %1387 = vmatpush1.xpose.msra.mxu0 0.0
    %1388 = vmatprep.subr.mxu0 0.0
    %1389 = vmatpush1.xpose.msra.mxu0 0.0
    %1390 = vmatprep.subr.mxu0 0.0
    %1391 = vmatpush1.xpose.msra.mxu0 0.0
    %1392 = vmatprep.subr.mxu0 0.0
    %1393 = vmatpush1.xpose.msra.mxu0 0.0
    %1394 = vmatprep.subr.mxu0 0.0
    %1395 = vmatpush1.xpose.msra.mxu0 0.0
    %1396 = vmatprep.subr.mxu0 0.0
    %1397 = vmatpush1.xpose.msra.mxu0 0.0
    %1398 = vmatprep.subr.mxu0 0.0
    %1399 = vmatpush1.xpose.msra.mxu0 0.0
    %1400 = vmatprep.subr.mxu0 0.0
    %1401 = vmatpush1.xpose.msra.mxu0 0.0
    %1402 = vmatprep.subr.mxu0 0.0
    %1403 = vmatpush1.xpose.msra.mxu0 0.0
    %1404 = vmatprep.subr.mxu0 0.0
    %1405 = vmatpush1.xpose.msra.mxu0 0.0
    %1406 = vmatprep.subr.mxu0 0.0
    %1407 = vmatpush1.xpose.msra.mxu0 0.0
    %1408 = vmatprep.subr.mxu0 0.0
    %1409 = vmatpush1.xpose.msra.mxu0 0.0
    %1410 = vmatprep.subr.mxu0 0.0
    %1411 = vmatpush1.xpose.msra.mxu0 0.0
    %1412 = vmatprep.subr.mxu0 0.0
    %1413 = vmatpush1.xpose.msra.mxu0 0.0
    %1414 = vmatprep.subr.mxu0 0.0
    %1415 = vmatpush1.xpose.msra.mxu0 0.0
    %1416 = vmatprep.subr.mxu0 0.0
    %1417 = vmatpush1.xpose.msra.mxu0 0.0
    %1418 = vmatprep.subr.mxu0 0.0
    %1419 = vmatpush1.xpose.msra.mxu0 0.0
    %1420 = vmatprep.mubr.f32.mxu0 0.0
    %1421 = vmatmul.mubr.f32.gmra.mrb[0].mxu0 %v1352
    %v1422 = vpop.f32.mrb[0].mxu0
    %v1423 = vadd.f32 0.0, %v1422
    %v1424 = vpop.f32.mrb[0].mxu0
    %1425 = vdwg.mxu0
    %1426 = vrot.lane.b32.xlu0 %v520, 112
    %v1427 = vpop.permute.xlu0 %1426
    %1428 = vrot.lane.b32.xlu0 %v520, 80
    %v1429 = vpop.permute.xlu0 %1428
    %v1430 = vsel %vm530, %v1427, 0
    %v1432 = vsel %vm530, %v1429, 0
    %1434 = vmatprep.subr.mxu0 0.0
    %1435 = vmatpush1.xpose.msra.mxu0 %v1432
    %1436 = vmatprep.subr.mxu0 0.0
    %1437 = vmatpush1.xpose.msra.mxu0 0.0
    %1438 = vmatprep.subr.mxu0 0.0
    %1439 = vmatpush1.xpose.msra.mxu0 0.0
    %1440 = vmatprep.subr.mxu0 0.0
    %1441 = vmatpush1.xpose.msra.mxu0 0.0
    %1442 = vmatprep.subr.mxu0 0.0
    %1443 = vmatpush1.xpose.msra.mxu0 0.0
    %1444 = vmatprep.subr.mxu0 0.0
    %1445 = vmatpush1.xpose.msra.mxu0 0.0
    %1446 = vmatprep.subr.mxu0 0.0
    %1447 = vmatpush1.xpose.msra.mxu0 0.0
    %1448 = vmatprep.subr.mxu0 0.0
    %1449 = vmatpush1.xpose.msra.mxu0 0.0
    %1450 = vmatprep.subr.mxu0 0.0
    %1451 = vmatpush1.xpose.msra.mxu0 0.0
    %1452 = vmatprep.subr.mxu0 0.0
    %1453 = vmatpush1.xpose.msra.mxu0 0.0
    %1454 = vmatprep.subr.mxu0 0.0
    %1455 = vmatpush1.xpose.msra.mxu0 0.0
    %1456 = vmatprep.subr.mxu0 0.0
    %1457 = vmatpush1.xpose.msra.mxu0 0.0
    %1458 = vmatprep.subr.mxu0 0.0
    %1459 = vmatpush1.xpose.msra.mxu0 0.0
    %1460 = vmatprep.subr.mxu0 0.0
    %1461 = vmatpush1.xpose.msra.mxu0 0.0
    %1462 = vmatprep.subr.mxu0 0.0
    %1463 = vmatpush1.xpose.msra.mxu0 0.0
    %1464 = vmatprep.subr.mxu0 0.0
    %1465 = vmatpush1.xpose.msra.mxu0 0.0
    %1466 = vmatprep.subr.mxu0 0.0
    %1467 = vmatpush1.xpose.msra.mxu0 0.0
    %1468 = vmatprep.subr.mxu0 0.0
    %1469 = vmatpush1.xpose.msra.mxu0 0.0
    %1470 = vmatprep.subr.mxu0 0.0
    %1471 = vmatpush1.xpose.msra.mxu0 0.0
    %1472 = vmatprep.subr.mxu0 0.0
    %1473 = vmatpush1.xpose.msra.mxu0 0.0
    %1474 = vmatprep.subr.mxu0 0.0
    %1475 = vmatpush1.xpose.msra.mxu0 0.0
    %1476 = vmatprep.subr.mxu0 0.0
    %1477 = vmatpush1.xpose.msra.mxu0 0.0
    %1478 = vmatprep.subr.mxu0 0.0
    %1479 = vmatpush1.xpose.msra.mxu0 0.0
    %1480 = vmatprep.subr.mxu0 0.0
    %1481 = vmatpush1.xpose.msra.mxu0 0.0
    %1482 = vmatprep.subr.mxu0 0.0
    %1483 = vmatpush1.xpose.msra.mxu0 0.0
    %1484 = vmatprep.subr.mxu0 0.0
    %1485 = vmatpush1.xpose.msra.mxu0 0.0
    %1486 = vmatprep.subr.mxu0 0.0
    %1487 = vmatpush1.xpose.msra.mxu0 0.0
    %1488 = vmatprep.subr.mxu0 0.0
    %1489 = vmatpush1.xpose.msra.mxu0 0.0
    %1490 = vmatprep.subr.mxu0 0.0
    %1491 = vmatpush1.xpose.msra.mxu0 0.0
    %1492 = vmatprep.subr.mxu0 0.0
    %1493 = vmatpush1.xpose.msra.mxu0 0.0
    %1494 = vmatprep.subr.mxu0 0.0
    %1495 = vmatpush1.xpose.msra.mxu0 0.0
    %1496 = vmatprep.subr.mxu0 0.0
    %1497 = vmatpush1.xpose.msra.mxu0 0.0
    %1498 = vmatprep.mubr.f32.mxu0 0.0
    %1499 = vmatmul.mubr.f32.gmra.mrb[0].mxu0 %v1430
    %v1500 = vpop.f32.mrb[0].mxu0
    %v1501 = vadd.f32 0.0, %v1500
    %v1502 = vpop.f32.mrb[0].mxu0
    %1503 = vdwg.mxu0
    %v1504 = vsel %vm530, %v1423, -inf
    %1505 = vmax.xlane.f32.xlu0 %v1504
    %v1506 = vpop.xlane.xlu0 %1505
    %v1507 = vsel %vm530, %v1501, -inf
    %1508 = vmax.xlane.f32.xlu0 %v1507
    %v1509 = vpop.xlane.xlu0 %1508
    %v1510 = vsub.f32 %v1423, %v1506
    %v1511 = vsub.f32 %v1501, %v1509
    %v1512 = vmul.f32 %v1510, 1.442695
    %v1513 = vpow.pop %v1512
    %v1514 = vmul.f32 %v1511, 1.442695
    %v1515 = vpow.pop %v1514
    %v1516 = vsel %vm530, %v1513, 0.0
    %1517 = vadd.xlane.f32.xlu0 %v1516
    %v1518 = vpop.xlane.xlu0 %1517
    %v1519 = vsel %vm530, %v1515, 0.0
    %1520 = vadd.xlane.f32.xlu0 %v1519
    %v1521 = vpop.xlane.xlu0 %1520
    %v1522 = vrcp.pop %v1518
    %v1523 = vrcp.pop %v1521
    %v1524 = vmul.f32 %v1513, %v1522
    %v1525 = vmul.f32 %v1515, %v1523
    %1526 = vrot.lane.b32.xlu0 %v515, 48
    %v1527 = vpop.permute.xlu0 %1526
    %v1530 = vsel %vm530, %v1524, 0
    %1532 = vmatprep.subr.mxu0 0.0
    %1533 = vmatpush1.msra.mxu0 %v1527
    %1534 = vmatprep.subr.mxu0 0.0
    %1535 = vmatpush1.msra.mxu0 0.0
    %1536 = vmatprep.subr.mxu0 0.0
    %1537 = vmatpush1.msra.mxu0 0.0
    %1538 = vmatprep.subr.mxu0 0.0
    %1539 = vmatpush1.msra.mxu0 0.0
    %1540 = vmatprep.subr.mxu0 0.0
    %1541 = vmatpush1.msra.mxu0 0.0
    %1542 = vmatprep.subr.mxu0 0.0
    %1543 = vmatpush1.msra.mxu0 0.0
    %1544 = vmatprep.subr.mxu0 0.0
    %1545 = vmatpush1.msra.mxu0 0.0
    %1546 = vmatprep.subr.mxu0 0.0
    %1547 = vmatpush1.msra.mxu0 0.0
    %1548 = vmatprep.subr.mxu0 0.0
    %1549 = vmatpush1.msra.mxu0 0.0
    %1550 = vmatprep.subr.mxu0 0.0
    %1551 = vmatpush1.msra.mxu0 0.0
    %1552 = vmatprep.subr.mxu0 0.0
    %1553 = vmatpush1.msra.mxu0 0.0
    %1554 = vmatprep.subr.mxu0 0.0
    %1555 = vmatpush1.msra.mxu0 0.0
    %1556 = vmatprep.subr.mxu0 0.0
    %1557 = vmatpush1.msra.mxu0 0.0
    %1558 = vmatprep.subr.mxu0 0.0
    %1559 = vmatpush1.msra.mxu0 0.0
    %1560 = vmatprep.subr.mxu0 0.0
    %1561 = vmatpush1.msra.mxu0 0.0
    %1562 = vmatprep.subr.mxu0 0.0
    %1563 = vmatpush1.msra.mxu0 0.0
    %1564 = vmatprep.subr.mxu0 0.0
    %1565 = vmatpush1.msra.mxu0 0.0
    %1566 = vmatprep.subr.mxu0 0.0
    %1567 = vmatpush1.msra.mxu0 0.0
    %1568 = vmatprep.subr.mxu0 0.0
    %1569 = vmatpush1.msra.mxu0 0.0
    %1570 = vmatprep.subr.mxu0 0.0
    %1571 = vmatpush1.msra.mxu0 0.0
    %1572 = vmatprep.subr.mxu0 0.0
    %1573 = vmatpush1.msra.mxu0 0.0
    %1574 = vmatprep.subr.mxu0 0.0
    %1575 = vmatpush1.msra.mxu0 0.0
    %1576 = vmatprep.subr.mxu0 0.0
    %1577 = vmatpush1.msra.mxu0 0.0
    %1578 = vmatprep.subr.mxu0 0.0
    %1579 = vmatpush1.msra.mxu0 0.0
    %1580 = vmatprep.subr.mxu0 0.0
    %1581 = vmatpush1.msra.mxu0 0.0
    %1582 = vmatprep.subr.mxu0 0.0
    %1583 = vmatpush1.msra.mxu0 0.0
    %1584 = vmatprep.subr.mxu0 0.0
    %1585 = vmatpush1.msra.mxu0 0.0
    %1586 = vmatprep.subr.mxu0 0.0
    %1587 = vmatpush1.msra.mxu0 0.0
    %1588 = vmatprep.subr.mxu0 0.0
    %1589 = vmatpush1.msra.mxu0 0.0
    %1590 = vmatprep.subr.mxu0 0.0
    %1591 = vmatpush1.msra.mxu0 0.0
    %1592 = vmatprep.subr.mxu0 0.0
    %1593 = vmatpush1.msra.mxu0 0.0
    %1594 = vmatprep.subr.mxu0 0.0
    %1595 = vmatpush1.msra.mxu0 0.0
    %1596 = vmatprep.mubr.f32.mxu0 0.0
    %1597 = vmatmul.mubr.f32.gmra.mrb[0].mxu0 %v1530
    %v1598 = vpop.f32.mrb[0].mxu0
    %v1599 = vadd.f32 0.0, %v1598
    %v1600 = vpop.f32.mrb[0].mxu0
    %1601 = vdwg.mxu0
    %1602 = vrot.lane.b32.xlu0 %v520, 48
    %v1603 = vpop.permute.xlu0 %1602
    %v1606 = vsel %vm530, %v1525, 0
    %1608 = vmatprep.subr.mxu0 0.0
    %1609 = vmatpush1.msra.mxu0 %v1603
    %1610 = vmatprep.subr.mxu0 0.0
    %1611 = vmatpush1.msra.mxu0 0.0
    %1612 = vmatprep.subr.mxu0 0.0
    %1613 = vmatpush1.msra.mxu0 0.0
    %1614 = vmatprep.subr.mxu0 0.0
    %1615 = vmatpush1.msra.mxu0 0.0
    %1616 = vmatprep.subr.mxu0 0.0
    %1617 = vmatpush1.msra.mxu0 0.0
    %1618 = vmatprep.subr.mxu0 0.0
    %1619 = vmatpush1.msra.mxu0 0.0
    %1620 = vmatprep.subr.mxu0 0.0
    %1621 = vmatpush1.msra.mxu0 0.0
    %1622 = vmatprep.subr.mxu0 0.0
    %1623 = vmatpush1.msra.mxu0 0.0
    %1624 = vmatprep.subr.mxu0 0.0
    %1625 = vmatpush1.msra.mxu0 0.0
    %1626 = vmatprep.subr.mxu0 0.0
    %1627 = vmatpush1.msra.mxu0 0.0
    %1628 = vmatprep.subr.mxu0 0.0
    %1629 = vmatpush1.msra.mxu0 0.0
    %1630 = vmatprep.subr.mxu0 0.0
    %1631 = vmatpush1.msra.mxu0 0.0
    %1632 = vmatprep.subr.mxu0 0.0
    %1633 = vmatpush1.msra.mxu0 0.0
    %1634 = vmatprep.subr.mxu0 0.0
    %1635 = vmatpush1.msra.mxu0 0.0
    %1636 = vmatprep.subr.mxu0 0.0
    %1637 = vmatpush1.msra.mxu0 0.0
    %1638 = vmatprep.subr.mxu0 0.0
    %1639 = vmatpush1.msra.mxu0 0.0
    %1640 = vmatprep.subr.mxu0 0.0
    %1641 = vmatpush1.msra.mxu0 0.0
    %1642 = vmatprep.subr.mxu0 0.0
    %1643 = vmatpush1.msra.mxu0 0.0
    %1644 = vmatprep.subr.mxu0 0.0
    %1645 = vmatpush1.msra.mxu0 0.0
    %1646 = vmatprep.subr.mxu0 0.0
    %1647 = vmatpush1.msra.mxu0 0.0
    %1648 = vmatprep.subr.mxu0 0.0
    %1649 = vmatpush1.msra.mxu0 0.0
    %1650 = vmatprep.subr.mxu0 0.0
    %1651 = vmatpush1.msra.mxu0 0.0
    %1652 = vmatprep.subr.mxu0 0.0
    %1653 = vmatpush1.msra.mxu0 0.0
    %1654 = vmatprep.subr.mxu0 0.0
    %1655 = vmatpush1.msra.mxu0 0.0
    %1656 = vmatprep.subr.mxu0 0.0
    %1657 = vmatpush1.msra.mxu0 0.0
    %1658 = vmatprep.subr.mxu0 0.0
    %1659 = vmatpush1.msra.mxu0 0.0
    %1660 = vmatprep.subr.mxu0 0.0
    %1661 = vmatpush1.msra.mxu0 0.0
    %1662 = vmatprep.subr.mxu0 0.0
    %1663 = vmatpush1.msra.mxu0 0.0
    %1664 = vmatprep.subr.mxu0 0.0
    %1665 = vmatpush1.msra.mxu0 0.0
    %1666 = vmatprep.subr.mxu0 0.0
    %1667 = vmatpush1.msra.mxu0 0.0
    %1668 = vmatprep.subr.mxu0 0.0
    %1669 = vmatpush1.msra.mxu0 0.0
    %1670 = vmatprep.subr.mxu0 0.0
    %1671 = vmatpush1.msra.mxu0 0.0
    %1672 = vmatprep.mubr.f32.mxu0 0.0
    %1673 = vmatmul.mubr.f32.gmra.mrb[0].mxu0 %v1606
    %v1674 = vpop.f32.mrb[0].mxu0
    %v1675 = vadd.f32 0.0, %v1674
    %v1676 = vpop.f32.mrb[0].mxu0
    %1677 = vdwg.mxu0
    %v1679 = vsel %vm530, %v1599, 0
    %v1682 = vsel %vm530, %v1675, 0
    %1684 = vmatprep.subr.mxu0 0.0
    %1685 = vmatpush1.msra.mxu0 %v525
    %1686 = vmatprep.subr.mxu0 0.0
    %1687 = vmatpush1.msra.mxu0 0.0
    %1688 = vmatprep.subr.mxu0 0.0
    %1689 = vmatpush1.msra.mxu0 0.0
    %1690 = vmatprep.subr.mxu0 0.0
    %1691 = vmatpush1.msra.mxu0 0.0
    %1692 = vmatprep.subr.mxu0 0.0
    %1693 = vmatpush1.msra.mxu0 0.0
    %1694 = vmatprep.subr.mxu0 0.0
    %1695 = vmatpush1.msra.mxu0 0.0
    %1696 = vmatprep.subr.mxu0 0.0
    %1697 = vmatpush1.msra.mxu0 0.0
    %1698 = vmatprep.subr.mxu0 0.0
    %1699 = vmatpush1.msra.mxu0 0.0
    %1700 = vmatprep.subr.mxu0 0.0
    %1701 = vmatpush1.msra.mxu0 0.0
    %1702 = vmatprep.subr.mxu0 0.0
    %1703 = vmatpush1.msra.mxu0 0.0
    %1704 = vmatprep.subr.mxu0 0.0
    %1705 = vmatpush1.msra.mxu0 0.0
    %1706 = vmatprep.subr.mxu0 0.0
    %1707 = vmatpush1.msra.mxu0 0.0
    %1708 = vmatprep.subr.mxu0 0.0
    %1709 = vmatpush1.msra.mxu0 0.0
    %1710 = vmatprep.subr.mxu0 0.0
    %1711 = vmatpush1.msra.mxu0 0.0
    %1712 = vmatprep.subr.mxu0 0.0
    %1713 = vmatpush1.msra.mxu0 0.0
    %1714 = vmatprep.subr.mxu0 0.0
    %1715 = vmatpush1.msra.mxu0 0.0
    %1716 = vmatprep.subr.mxu0 0.0
    %1717 = vmatpush1.msra.mxu0 0.0
    %1718 = vmatprep.subr.mxu0 0.0
    %1719 = vmatpush1.msra.mxu0 0.0
    %1720 = vmatprep.subr.mxu0 0.0
    %1721 = vmatpush1.msra.mxu0 0.0
    %1722 = vmatprep.subr.mxu0 0.0
    %1723 = vmatpush1.msra.mxu0 0.0
    %1724 = vmatprep.subr.mxu0 0.0
    %1725 = vmatpush1.msra.mxu0 0.0
    %1726 = vmatprep.subr.mxu0 0.0
    %1727 = vmatpush1.msra.mxu0 0.0
    %1728 = vmatprep.subr.mxu0 0.0
    %1729 = vmatpush1.msra.mxu0 0.0
    %1730 = vmatprep.subr.mxu0 0.0
    %1731 = vmatpush1.msra.mxu0 0.0
    %1732 = vmatprep.subr.mxu0 0.0
    %1733 = vmatpush1.msra.mxu0 0.0
    %1734 = vmatprep.subr.mxu0 0.0
    %1735 = vmatpush1.msra.mxu0 0.0
    %1736 = vmatprep.subr.mxu0 0.0
    %1737 = vmatpush1.msra.mxu0 0.0
    %1738 = vmatprep.subr.mxu0 0.0
    %1739 = vmatpush1.msra.mxu0 0.0
    %1740 = vmatprep.subr.mxu0 0.0
    %1741 = vmatpush1.msra.mxu0 0.0
    %1742 = vmatprep.subr.mxu0 0.0
    %1743 = vmatpush1.msra.mxu0 0.0
    %1744 = vmatprep.subr.mxu0 0.0
    %1745 = vmatpush1.msra.mxu0 0.0
    %1746 = vmatprep.subr.mxu0 0.0
    %1747 = vmatpush1.msra.mxu0 0.0
    %1748 = vmatprep.mubr.f32.mxu0 0.0
    %1749 = vmatmul.mubr.f32.gmra.mrb[0].mxu0 %v1679
    %v1750 = vpop.f32.mrb[0].mxu0
    %v1751 = vadd.f32 0.0, %v1750
    %v1752 = vpop.f32.mrb[0].mxu0
    %1753 = vmatprep.mubr.f32.mxu0 0.0
    %1754 = vmatmul.mubr.f32.gmra.mrb[0].mxu0 %v1682
    %v1755 = vpop.f32.mrb[0].mxu0
    %v1756 = vadd.f32 0.0, %v1755
    %v1757 = vpop.f32.mrb[0].mxu0
    %1758 = vdwg.mxu0
    %v1759 = vadd.f32 %v1340, %v1751
    %v1760 = vadd.f32 %v1345, %v1756
    %1761 = vrot.lane.b32.xlu0 %v515, 104
    %v1762 = vpop.permute.xlu0 %1761
    %1763 = vrot.lane.b32.xlu0 %v515, 72
    %v1764 = vpop.permute.xlu0 %1763
    %v1765 = vsel %vm530, %v1762, 0
    %v1767 = vsel %vm530, %v1764, 0
    %1769 = vmatprep.subr.mxu0 0.0
    %1770 = vmatpush1.xpose.msra.mxu0 %v1767
    %1771 = vmatprep.subr.mxu0 0.0
    %1772 = vmatpush1.xpose.msra.mxu0 0.0
    %1773 = vmatprep.subr.mxu0 0.0
    %1774 = vmatpush1.xpose.msra.mxu0 0.0
    %1775 = vmatprep.subr.mxu0 0.0
    %1776 = vmatpush1.xpose.msra.mxu0 0.0
    %1777 = vmatprep.subr.mxu0 0.0
    %1778 = vmatpush1.xpose.msra.mxu0 0.0
    %1779 = vmatprep.subr.mxu0 0.0
    %1780 = vmatpush1.xpose.msra.mxu0 0.0
    %1781 = vmatprep.subr.mxu0 0.0
    %1782 = vmatpush1.xpose.msra.mxu0 0.0
    %1783 = vmatprep.subr.mxu0 0.0
    %1784 = vmatpush1.xpose.msra.mxu0 0.0
    %1785 = vmatprep.subr.mxu0 0.0
    %1786 = vmatpush1.xpose.msra.mxu0 0.0
    %1787 = vmatprep.subr.mxu0 0.0
    %1788 = vmatpush1.xpose.msra.mxu0 0.0
    %1789 = vmatprep.subr.mxu0 0.0
    %1790 = vmatpush1.xpose.msra.mxu0 0.0
    %1791 = vmatprep.subr.mxu0 0.0
    %1792 = vmatpush1.xpose.msra.mxu0 0.0
    %1793 = vmatprep.subr.mxu0 0.0
    %1794 = vmatpush1.xpose.msra.mxu0 0.0
    %1795 = vmatprep.subr.mxu0 0.0
    %1796 = vmatpush1.xpose.msra.mxu0 0.0
    %1797 = vmatprep.subr.mxu0 0.0
    %1798 = vmatpush1.xpose.msra.mxu0 0.0
    %1799 = vmatprep.subr.mxu0 0.0
    %1800 = vmatpush1.xpose.msra.mxu0 0.0
    %1801 = vmatprep.subr.mxu0 0.0
    %1802 = vmatpush1.xpose.msra.mxu0 0.0
    %1803 = vmatprep.subr.mxu0 0.0
    %1804 = vmatpush1.xpose.msra.mxu0 0.0
    %1805 = vmatprep.subr.mxu0 0.0
    %1806 = vmatpush1.xpose.msra.mxu0 0.0
    %1807 = vmatprep.subr.mxu0 0.0
    %1808 = vmatpush1.xpose.msra.mxu0 0.0
    %1809 = vmatprep.subr.mxu0 0.0
    %1810 = vmatpush1.xpose.msra.mxu0 0.0
    %1811 = vmatprep.subr.mxu0 0.0
    %1812 = vmatpush1.xpose.msra.mxu0 0.0
    %1813 = vmatprep.subr.mxu0 0.0
    %1814 = vmatpush1.xpose.msra.mxu0 0.0
    %1815 = vmatprep.subr.mxu0 0.0
    %1816 = vmatpush1.xpose.msra.mxu0 0.0
    %1817 = vmatprep.subr.mxu0 0.0
    %1818 = vmatpush1.xpose.msra.mxu0 0.0
    %1819 = vmatprep.subr.mxu0 0.0
    %1820 = vmatpush1.xpose.msra.mxu0 0.0
    %1821 = vmatprep.subr.mxu0 0.0
    %1822 = vmatpush1.xpose.msra.mxu0 0.0
    %1823 = vmatprep.subr.mxu0 0.0
    %1824 = vmatpush1.xpose.msra.mxu0 0.0
    %1825 = vmatprep.subr.mxu0 0.0
    %1826 = vmatpush1.xpose.msra.mxu0 0.0
    %1827 = vmatprep.subr.mxu0 0.0
    %1828 = vmatpush1.xpose.msra.mxu0 0.0
    %1829 = vmatprep.subr.mxu0 0.0
    %1830 = vmatpush1.xpose.msra.mxu0 0.0
    %1831 = vmatprep.subr.mxu0 0.0
    %1832 = vmatpush1.xpose.msra.mxu0 0.0
    %1833 = vmatprep.mubr.f32.mxu0 0.0
    %1834 = vmatmul.mubr.f32.gmra.mrb[0].mxu0 %v1765
    %v1835 = vpop.f32.mrb[0].mxu0
    %v1836 = vadd.f32 0.0, %v1835
    %v1837 = vpop.f32.mrb[0].mxu0
    %1838 = vdwg.mxu0
    %1839 = vrot.lane.b32.xlu0 %v520, 104
    %v1840 = vpop.permute.xlu0 %1839
    %1841 = vrot.lane.b32.xlu0 %v520, 72
    %v1842 = vpop.permute.xlu0 %1841
    %v1843 = vsel %vm530, %v1840, 0
    %v1845 = vsel %vm530, %v1842, 0
    %1847 = vmatprep.subr.mxu0 0.0
    %1848 = vmatpush1.xpose.msra.mxu0 %v1845
    %1849 = vmatprep.subr.mxu0 0.0
    %1850 = vmatpush1.xpose.msra.mxu0 0.0
    %1851 = vmatprep.subr.mxu0 0.0
    %1852 = vmatpush1.xpose.msra.mxu0 0.0
    %1853 = vmatprep.subr.mxu0 0.0
    %1854 = vmatpush1.xpose.msra.mxu0 0.0
    %1855 = vmatprep.subr.mxu0 0.0
    %1856 = vmatpush1.xpose.msra.mxu0 0.0
    %1857 = vmatprep.subr.mxu0 0.0
    %1858 = vmatpush1.xpose.msra.mxu0 0.0
    %1859 = vmatprep.subr.mxu0 0.0
    %1860 = vmatpush1.xpose.msra.mxu0 0.0
    %1861 = vmatprep.subr.mxu0 0.0
    %1862 = vmatpush1.xpose.msra.mxu0 0.0
    %1863 = vmatprep.subr.mxu0 0.0
    %1864 = vmatpush1.xpose.msra.mxu0 0.0
    %1865 = vmatprep.subr.mxu0 0.0
    %1866 = vmatpush1.xpose.msra.mxu0 0.0
    %1867 = vmatprep.subr.mxu0 0.0
    %1868 = vmatpush1.xpose.msra.mxu0 0.0
    %1869 = vmatprep.subr.mxu0 0.0
    %1870 = vmatpush1.xpose.msra.mxu0 0.0
    %1871 = vmatprep.subr.mxu0 0.0
    %1872 = vmatpush1.xpose.msra.mxu0 0.0
    %1873 = vmatprep.subr.mxu0 0.0
    %1874 = vmatpush1.xpose.msra.mxu0 0.0
    %1875 = vmatprep.subr.mxu0 0.0
    %1876 = vmatpush1.xpose.msra.mxu0 0.0
    %1877 = vmatprep.subr.mxu0 0.0
    %1878 = vmatpush1.xpose.msra.mxu0 0.0
    %1879 = vmatprep.subr.mxu0 0.0
    %1880 = vmatpush1.xpose.msra.mxu0 0.0
    %1881 = vmatprep.subr.mxu0 0.0
    %1882 = vmatpush1.xpose.msra.mxu0 0.0
    %1883 = vmatprep.subr.mxu0 0.0
    %1884 = vmatpush1.xpose.msra.mxu0 0.0
    %1885 = vmatprep.subr.mxu0 0.0
    %1886 = vmatpush1.xpose.msra.mxu0 0.0
    %1887 = vmatprep.subr.mxu0 0.0
    %1888 = vmatpush1.xpose.msra.mxu0 0.0
    %1889 = vmatprep.subr.mxu0 0.0
    %1890 = vmatpush1.xpose.msra.mxu0 0.0
    %1891 = vmatprep.subr.mxu0 0.0
    %1892 = vmatpush1.xpose.msra.mxu0 0.0
    %1893 = vmatprep.subr.mxu0 0.0
    %1894 = vmatpush1.xpose.msra.mxu0 0.0
    %1895 = vmatprep.subr.mxu0 0.0
    %1896 = vmatpush1.xpose.msra.mxu0 0.0
    %1897 = vmatprep.subr.mxu0 0.0
    %1898 = vmatpush1.xpose.msra.mxu0 0.0
    %1899 = vmatprep.subr.mxu0 0.0
    %1900 = vmatpush1.xpose.msra.mxu0 0.0
    %1901 = vmatprep.subr.mxu0 0.0
    %1902 = vmatpush1.xpose.msra.mxu0 0.0
    %1903 = vmatprep.subr.mxu0 0.0
    %1904 = vmatpush1.xpose.msra.mxu0 0.0
    %1905 = vmatprep.subr.mxu0 0.0
    %1906 = vmatpush1.xpose.msra.mxu0 0.0
    %1907 = vmatprep.subr.mxu0 0.0
    %1908 = vmatpush1.xpose.msra.mxu0 0.0
    %1909 = vmatprep.subr.mxu0 0.0
    %1910 = vmatpush1.xpose.msra.mxu0 0.0
    %1911 = vmatprep.mubr.f32.mxu0 0.0
    %1912 = vmatmul.mubr.f32.gmra.mrb[0].mxu0 %v1843
    %v1913 = vpop.f32.mrb[0].mxu0
    %v1914 = vadd.f32 0.0, %v1913
    %v1915 = vpop.f32.mrb[0].mxu0
    %1916 = vdwg.mxu0
    %v1917 = vsel %vm530, %v1836, -inf
    %1918 = vmax.xlane.f32.xlu0 %v1917
    %v1919 = vpop.xlane.xlu0 %1918
    %v1920 = vsel %vm530, %v1914, -inf
    %1921 = vmax.xlane.f32.xlu0 %v1920
    %v1922 = vpop.xlane.xlu0 %1921
    %v1923 = vsub.f32 %v1836, %v1919
    %v1924 = vsub.f32 %v1914, %v1922
    %v1925 = vmul.f32 %v1923, 1.442695
    %v1926 = vpow.pop %v1925
    %v1927 = vmul.f32 %v1924, 1.442695
    %v1928 = vpow.pop %v1927
    %v1929 = vsel %vm530, %v1926, 0.0
    %1930 = vadd.xlane.f32.xlu0 %v1929
    %v1931 = vpop.xlane.xlu0 %1930
    %v1932 = vsel %vm530, %v1928, 0.0
    %1933 = vadd.xlane.f32.xlu0 %v1932
    %v1934 = vpop.xlane.xlu0 %1933
    %v1935 = vrcp.pop %v1931
    %v1936 = vrcp.pop %v1934
    %v1937 = vmul.f32 %v1926, %v1935
    %v1938 = vmul.f32 %v1928, %v1936
    %1939 = vrot.lane.b32.xlu0 %v515, 40
    %v1940 = vpop.permute.xlu0 %1939
    %v1943 = vsel %vm530, %v1937, 0
    %1945 = vmatprep.subr.mxu0 0.0
    %1946 = vmatpush1.msra.mxu0 %v1940
    %1947 = vmatprep.subr.mxu0 0.0
    %1948 = vmatpush1.msra.mxu0 0.0
    %1949 = vmatprep.subr.mxu0 0.0
    %1950 = vmatpush1.msra.mxu0 0.0
    %1951 = vmatprep.subr.mxu0 0.0
    %1952 = vmatpush1.msra.mxu0 0.0
    %1953 = vmatprep.subr.mxu0 0.0
    %1954 = vmatpush1.msra.mxu0 0.0
    %1955 = vmatprep.subr.mxu0 0.0
    %1956 = vmatpush1.msra.mxu0 0.0
    %1957 = vmatprep.subr.mxu0 0.0
    %1958 = vmatpush1.msra.mxu0 0.0
    %1959 = vmatprep.subr.mxu0 0.0
    %1960 = vmatpush1.msra.mxu0 0.0
    %1961 = vmatprep.subr.mxu0 0.0
    %1962 = vmatpush1.msra.mxu0 0.0
    %1963 = vmatprep.subr.mxu0 0.0
    %1964 = vmatpush1.msra.mxu0 0.0
    %1965 = vmatprep.subr.mxu0 0.0
    %1966 = vmatpush1.msra.mxu0 0.0
    %1967 = vmatprep.subr.mxu0 0.0
    %1968 = vmatpush1.msra.mxu0 0.0
    %1969 = vmatprep.subr.mxu0 0.0
    %1970 = vmatpush1.msra.mxu0 0.0
    %1971 = vmatprep.subr.mxu0 0.0
    %1972 = vmatpush1.msra.mxu0 0.0
    %1973 = vmatprep.subr.mxu0 0.0
    %1974 = vmatpush1.msra.mxu0 0.0
    %1975 = vmatprep.subr.mxu0 0.0
    %1976 = vmatpush1.msra.mxu0 0.0
    %1977 = vmatprep.subr.mxu0 0.0
    %1978 = vmatpush1.msra.mxu0 0.0
    %1979 = vmatprep.subr.mxu0 0.0
    %1980 = vmatpush1.msra.mxu0 0.0
    %1981 = vmatprep.subr.mxu0 0.0
    %1982 = vmatpush1.msra.mxu0 0.0
    %1983 = vmatprep.subr.mxu0 0.0
    %1984 = vmatpush1.msra.mxu0 0.0
    %1985 = vmatprep.subr.mxu0 0.0
    %1986 = vmatpush1.msra.mxu0 0.0
    %1987 = vmatprep.subr.mxu0 0.0
    %1988 = vmatpush1.msra.mxu0 0.0
    %1989 = vmatprep.subr.mxu0 0.0
    %1990 = vmatpush1.msra.mxu0 0.0
    %1991 = vmatprep.subr.mxu0 0.0
    %1992 = vmatpush1.msra.mxu0 0.0
    %1993 = vmatprep.subr.mxu0 0.0
    %1994 = vmatpush1.msra.mxu0 0.0
    %1995 = vmatprep.subr.mxu0 0.0
    %1996 = vmatpush1.msra.mxu0 0.0
    %1997 = vmatprep.subr.mxu0 0.0
    %1998 = vmatpush1.msra.mxu0 0.0
    %1999 = vmatprep.subr.mxu0 0.0
    %2000 = vmatpush1.msra.mxu0 0.0
    %2001 = vmatprep.subr.mxu0 0.0
    %2002 = vmatpush1.msra.mxu0 0.0
    %2003 = vmatprep.subr.mxu0 0.0
    %2004 = vmatpush1.msra.mxu0 0.0
    %2005 = vmatprep.subr.mxu0 0.0
    %2006 = vmatpush1.msra.mxu0 0.0
    %2007 = vmatprep.subr.mxu0 0.0
    %2008 = vmatpush1.msra.mxu0 0.0
    %2009 = vmatprep.mubr.f32.mxu0 0.0
    %2010 = vmatmul.mubr.f32.gmra.mrb[0].mxu0 %v1943
    %v2011 = vpop.f32.mrb[0].mxu0
    %v2012 = vadd.f32 0.0, %v2011
    %v2013 = vpop.f32.mrb[0].mxu0
    %2014 = vdwg.mxu0
    %2015 = vrot.lane.b32.xlu0 %v520, 40
    %v2016 = vpop.permute.xlu0 %2015
    %v2019 = vsel %vm530, %v1938, 0
    %2021 = vmatprep.subr.mxu0 0.0
    %2022 = vmatpush1.msra.mxu0 %v2016
    %2023 = vmatprep.subr.mxu0 0.0
    %2024 = vmatpush1.msra.mxu0 0.0
    %2025 = vmatprep.subr.mxu0 0.0
    %2026 = vmatpush1.msra.mxu0 0.0
    %2027 = vmatprep.subr.mxu0 0.0
    %2028 = vmatpush1.msra.mxu0 0.0
    %2029 = vmatprep.subr.mxu0 0.0
    %2030 = vmatpush1.msra.mxu0 0.0
    %2031 = vmatprep.subr.mxu0 0.0
    %2032 = vmatpush1.msra.mxu0 0.0
    %2033 = vmatprep.subr.mxu0 0.0
    %2034 = vmatpush1.msra.mxu0 0.0
    %2035 = vmatprep.subr.mxu0 0.0
    %2036 = vmatpush1.msra.mxu0 0.0
    %2037 = vmatprep.subr.mxu0 0.0
    %2038 = vmatpush1.msra.mxu0 0.0
    %2039 = vmatprep.subr.mxu0 0.0
    %2040 = vmatpush1.msra.mxu0 0.0
    %2041 = vmatprep.subr.mxu0 0.0
    %2042 = vmatpush1.msra.mxu0 0.0
    %2043 = vmatprep.subr.mxu0 0.0
    %2044 = vmatpush1.msra.mxu0 0.0
    %2045 = vmatprep.subr.mxu0 0.0
    %2046 = vmatpush1.msra.mxu0 0.0
    %2047 = vmatprep.subr.mxu0 0.0
    %2048 = vmatpush1.msra.mxu0 0.0
    %2049 = vmatprep.subr.mxu0 0.0
    %2050 = vmatpush1.msra.mxu0 0.0
    %2051 = vmatprep.subr.mxu0 0.0
    %2052 = vmatpush1.msra.mxu0 0.0
    %2053 = vmatprep.subr.mxu0 0.0
    %2054 = vmatpush1.msra.mxu0 0.0
    %2055 = vmatprep.subr.mxu0 0.0
    %2056 = vmatpush1.msra.mxu0 0.0
    %2057 = vmatprep.subr.mxu0 0.0
    %2058 = vmatpush1.msra.mxu0 0.0
    %2059 = vmatprep.subr.mxu0 0.0
    %2060 = vmatpush1.msra.mxu0 0.0
    %2061 = vmatprep.subr.mxu0 0.0
    %2062 = vmatpush1.msra.mxu0 0.0
    %2063 = vmatprep.subr.mxu0 0.0
    %2064 = vmatpush1.msra.mxu0 0.0
    %2065 = vmatprep.subr.mxu0 0.0
    %2066 = vmatpush1.msra.mxu0 0.0
    %2067 = vmatprep.subr.mxu0 0.0
    %2068 = vmatpush1.msra.mxu0 0.0
    %2069 = vmatprep.subr.mxu0 0.0
    %2070 = vmatpush1.msra.mxu0 0.0
    %2071 = vmatprep.subr.mxu0 0.0
    %2072 = vmatpush1.msra.mxu0 0.0
    %2073 = vmatprep.subr.mxu0 0.0
    %2074 = vmatpush1.msra.mxu0 0.0
    %2075 = vmatprep.subr.mxu0 0.0
    %2076 = vmatpush1.msra.mxu0 0.0
    %2077 = vmatprep.subr.mxu0 0.0
    %2078 = vmatpush1.msra.mxu0 0.0
    %2079 = vmatprep.subr.mxu0 0.0
    %2080 = vmatpush1.msra.mxu0 0.0
    %2081 = vmatprep.subr.mxu0 0.0
    %2082 = vmatpush1.msra.mxu0 0.0
    %2083 = vmatprep.subr.mxu0 0.0
    %2084 = vmatpush1.msra.mxu0 0.0
    %2085 = vmatprep.mubr.f32.mxu0 0.0
    %2086 = vmatmul.mubr.f32.gmra.mrb[0].mxu0 %v2019
    %v2087 = vpop.f32.mrb[0].mxu0
    %v2088 = vadd.f32 0.0, %v2087
    %v2089 = vpop.f32.mrb[0].mxu0
    %2090 = vdwg.mxu0
    %v2092 = vsel %vm530, %v2012, 0
    %v2095 = vsel %vm530, %v2088, 0
    %2097 = vmatprep.subr.mxu0 0.0
    %2098 = vmatpush1.msra.mxu0 %v526
    %2099 = vmatprep.subr.mxu0 0.0
    %2100 = vmatpush1.msra.mxu0 0.0
    %2101 = vmatprep.subr.mxu0 0.0
    %2102 = vmatpush1.msra.mxu0 0.0
    %2103 = vmatprep.subr.mxu0 0.0
    %2104 = vmatpush1.msra.mxu0 0.0
    %2105 = vmatprep.subr.mxu0 0.0
    %2106 = vmatpush1.msra.mxu0 0.0
    %2107 = vmatprep.subr.mxu0 0.0
    %2108 = vmatpush1.msra.mxu0 0.0
    %2109 = vmatprep.subr.mxu0 0.0
    %2110 = vmatpush1.msra.mxu0 0.0
    %2111 = vmatprep.subr.mxu0 0.0
    %2112 = vmatpush1.msra.mxu0 0.0
    %2113 = vmatprep.subr.mxu0 0.0
    %2114 = vmatpush1.msra.mxu0 0.0
    %2115 = vmatprep.subr.mxu0 0.0
    %2116 = vmatpush1.msra.mxu0 0.0
    %2117 = vmatprep.subr.mxu0 0.0
    %2118 = vmatpush1.msra.mxu0 0.0
    %2119 = vmatprep.subr.mxu0 0.0
    %2120 = vmatpush1.msra.mxu0 0.0
    %2121 = vmatprep.subr.mxu0 0.0
    %2122 = vmatpush1.msra.mxu0 0.0
    %2123 = vmatprep.subr.mxu0 0.0
    %2124 = vmatpush1.msra.mxu0 0.0
    %2125 = vmatprep.subr.mxu0 0.0
    %2126 = vmatpush1.msra.mxu0 0.0
    %2127 = vmatprep.subr.mxu0 0.0
    %2128 = vmatpush1.msra.mxu0 0.0
    %2129 = vmatprep.subr.mxu0 0.0
    %2130 = vmatpush1.msra.mxu0 0.0
    %2131 = vmatprep.subr.mxu0 0.0
    %2132 = vmatpush1.msra.mxu0 0.0
    %2133 = vmatprep.subr.mxu0 0.0
    %2134 = vmatpush1.msra.mxu0 0.0
    %2135 = vmatprep.subr.mxu0 0.0
    %2136 = vmatpush1.msra.mxu0 0.0
    %2137 = vmatprep.subr.mxu0 0.0
    %2138 = vmatpush1.msra.mxu0 0.0
    %2139 = vmatprep.subr.mxu0 0.0
    %2140 = vmatpush1.msra.mxu0 0.0
    %2141 = vmatprep.subr.mxu0 0.0
    %2142 = vmatpush1.msra.mxu0 0.0
    %2143 = vmatprep.subr.mxu0 0.0
    %2144 = vmatpush1.msra.mxu0 0.0
    %2145 = vmatprep.subr.mxu0 0.0
    %2146 = vmatpush1.msra.mxu0 0.0
    %2147 = vmatprep.subr.mxu0 0.0
    %2148 = vmatpush1.msra.mxu0 0.0
    %2149 = vmatprep.subr.mxu0 0.0
    %2150 = vmatpush1.msra.mxu0 0.0
    %2151 = vmatprep.subr.mxu0 0.0
    %2152 = vmatpush1.msra.mxu0 0.0
    %2153 = vmatprep.subr.mxu0 0.0
    %2154 = vmatpush1.msra.mxu0 0.0
    %2155 = vmatprep.subr.mxu0 0.0
    %2156 = vmatpush1.msra.mxu0 0.0
    %2157 = vmatprep.subr.mxu0 0.0
    %2158 = vmatpush1.msra.mxu0 0.0
    %2159 = vmatprep.subr.mxu0 0.0
    %2160 = vmatpush1.msra.mxu0 0.0
    %2161 = vmatprep.mubr.f32.mxu0 0.0
    %2162 = vmatmul.mubr.f32.gmra.mrb[0].mxu0 %v2092
    %v2163 = vpop.f32.mrb[0].mxu0
    %v2164 = vadd.f32 0.0, %v2163
    %v2165 = vpop.f32.mrb[0].mxu0
    %2166 = vmatprep.mubr.f32.mxu0 0.0
    %2167 = vmatmul.mubr.f32.gmra.mrb[0].mxu0 %v2095
    %v2168 = vpop.f32.mrb[0].mxu0
    %v2169 = vadd.f32 0.0, %v2168
    %v2170 = vpop.f32.mrb[0].mxu0
    %2171 = vdwg.mxu0
    %v2172 = vadd.f32 %v1759, %v2164
    %v2173 = vadd.f32 %v1760, %v2169
    %v2174 = vld [vmem:[%s11] sm:$0x1]
    %v2176 = vlaneseq
    %v2177 = vshrl.u32 %v2176, 7
    %v2178 = vsub.s32 0, %v2177
    %v2179 = vrot.slane %v2174, %v2178
    %v2181 = vadd.f32 %v2172, %v2179
    %v2182 = vadd.f32 %v2173, %v2179
    %v2183 = vmax.f32 %v2181, 0.0
    %v2184 = vmax.f32 %v2182, 0.0
    %s2185 = scalar_lea.vmem %s1, 32
    %v2186 = vld [vmem:[%s2185] sm:$0xff]
    %v2187 = vld [vmem:[%s2185 + $0x8] sm:$0xff]
    %v2188 = vld [vmem:[%s2185 + $0x10] sm:$0xff]
    %v2189 = vld [vmem:[%s2185 + $0x18] sm:$0xff]
    %2190 = vmatprep.subr.mxu0 0.0
    %2191 = vmatpush1.msra.mxu0 %v2183
    %2192 = vmatprep.subr.mxu0 0.0
    %2193 = vmatpush1.msra.mxu0 %v2184
    %2194 = vmatprep.subr.mxu0 0.0
    %2195 = vmatpush1.msra.mxu0 0.0
    %2196 = vmatprep.subr.mxu0 0.0
    %2197 = vmatpush1.msra.mxu0 0.0
    %2198 = vmatprep.subr.mxu0 0.0
    %2199 = vmatpush1.msra.mxu0 0.0
    %2200 = vmatprep.subr.mxu0 0.0
    %2201 = vmatpush1.msra.mxu0 0.0
    %2202 = vmatprep.subr.mxu0 0.0
    %2203 = vmatpush1.msra.mxu0 0.0
    %2204 = vmatprep.subr.mxu0 0.0
    %2205 = vmatpush1.msra.mxu0 0.0
    %2206 = vmatprep.subr.mxu0 0.0
    %2207 = vmatpush1.msra.mxu0 0.0
    %2208 = vmatprep.subr.mxu0 0.0
    %2209 = vmatpush1.msra.mxu0 0.0
    %2210 = vmatprep.subr.mxu0 0.0
    %2211 = vmatpush1.msra.mxu0 0.0
    %2212 = vmatprep.subr.mxu0 0.0
    %2213 = vmatpush1.msra.mxu0 0.0
    %2214 = vmatprep.subr.mxu0 0.0
    %2215 = vmatpush1.msra.mxu0 0.0
    %2216 = vmatprep.subr.mxu0 0.0
    %2217 = vmatpush1.msra.mxu0 0.0
    %2218 = vmatprep.subr.mxu0 0.0
    %2219 = vmatpush1.msra.mxu0 0.0
    %2220 = vmatprep.subr.mxu0 0.0
    %2221 = vmatpush1.msra.mxu0 0.0
    %2222 = vmatprep.subr.mxu0 0.0
    %2223 = vmatpush1.msra.mxu0 0.0
    %2224 = vmatprep.subr.mxu0 0.0
    %2225 = vmatpush1.msra.mxu0 0.0
    %2226 = vmatprep.subr.mxu0 0.0
    %2227 = vmatpush1.msra.mxu0 0.0
    %2228 = vmatprep.subr.mxu0 0.0
    %2229 = vmatpush1.msra.mxu0 0.0
    %2230 = vmatprep.subr.mxu0 0.0
    %2231 = vmatpush1.msra.mxu0 0.0
    %2232 = vmatprep.subr.mxu0 0.0
    %2233 = vmatpush1.msra.mxu0 0.0
    %2234 = vmatprep.subr.mxu0 0.0
    %2235 = vmatpush1.msra.mxu0 0.0
    %2236 = vmatprep.subr.mxu0 0.0
    %2237 = vmatpush1.msra.mxu0 0.0
    %2238 = vmatprep.subr.mxu0 0.0
    %2239 = vmatpush1.msra.mxu0 0.0
    %2240 = vmatprep.subr.mxu0 0.0
    %2241 = vmatpush1.msra.mxu0 0.0
    %2242 = vmatprep.subr.mxu0 0.0
    %2243 = vmatpush1.msra.mxu0 0.0
    %2244 = vmatprep.subr.mxu0 0.0
    %2245 = vmatpush1.msra.mxu0 0.0
    %2246 = vmatprep.subr.mxu0 0.0
    %2247 = vmatpush1.msra.mxu0 0.0
    %2248 = vmatprep.subr.mxu0 0.0
    %2249 = vmatpush1.msra.mxu0 0.0
    %2250 = vmatprep.subr.mxu0 0.0
    %2251 = vmatpush1.msra.mxu0 0.0
    %2252 = vmatprep.subr.mxu0 0.0
    %2253 = vmatpush1.msra.mxu0 0.0
    %2254 = vmatprep.mubr.f32.mxu0 0.0
    %2255 = vmatmul.mubr.f32.gmra.mrb[0].mxu0 %v56
    %v2256 = vpop.f32.mrb[0].mxu0
    %v2257 = vadd.f32 %v2186, %v2256
    %v2258 = vpop.f32.mrb[0].mxu0
    %2259 = vmatprep.mubr.f32.mxu0 0.0
    %2260 = vmatmul.mubr.f32.gmra.mrb[0].mxu0 %v59
    %v2261 = vpop.f32.mrb[0].mxu0
    %v2262 = vadd.f32 %v2187, %v2261
    %v2263 = vpop.f32.mrb[0].mxu0
    %2264 = vmatprep.mubr.f32.mxu0 0.0
    %2265 = vmatmul.mubr.f32.gmra.mrb[0].mxu0 %v62
    %v2266 = vpop.f32.mrb[0].mxu0
    %v2267 = vadd.f32 %v2188, %v2266
    %v2268 = vpop.f32.mrb[0].mxu0
    %2269 = vmatprep.mubr.f32.mxu0 0.0
    %2270 = vmatmul.mubr.f32.gmra.mrb[0].mxu0 %v65
    %v2271 = vpop.f32.mrb[0].mxu0
    %v2272 = vadd.f32 %v2189, %v2271
    %v2273 = vpop.f32.mrb[0].mxu0
    %2274 = vdwg.mxu0
    %v2275 = vmax.f32 %v2257, 0.0
    %v2276 = vmax.f32 %v2262, 0.0
    %v2277 = vmax.f32 %v2267, 0.0
    %v2278 = vmax.f32 %v2272, 0.0
    %2279 = vmatprep.subr.mxu0 0.0
    %2280 = vmatpush1.msra.mxu0 %v2275
    %2281 = vmatprep.subr.mxu0 0.0
    %2282 = vmatpush1.msra.mxu0 %v2276
    %2283 = vmatprep.subr.mxu0 0.0
    %2284 = vmatpush1.msra.mxu0 %v2277
    %2285 = vmatprep.subr.mxu0 0.0
    %2286 = vmatpush1.msra.mxu0 %v2278
    %2287 = vmatprep.subr.mxu0 0.0
    %2288 = vmatpush1.msra.mxu0 0.0
    %2289 = vmatprep.subr.mxu0 0.0
    %2290 = vmatpush1.msra.mxu0 0.0
    %2291 = vmatprep.subr.mxu0 0.0
    %2292 = vmatpush1.msra.mxu0 0.0
    %2293 = vmatprep.subr.mxu0 0.0
    %2294 = vmatpush1.msra.mxu0 0.0
    %2295 = vmatprep.subr.mxu0 0.0
    %2296 = vmatpush1.msra.mxu0 0.0
    %2297 = vmatprep.subr.mxu0 0.0
    %2298 = vmatpush1.msra.mxu0 0.0
    %2299 = vmatprep.subr.mxu0 0.0
    %2300 = vmatpush1.msra.mxu0 0.0
    %2301 = vmatprep.subr.mxu0 0.0
    %2302 = vmatpush1.msra.mxu0 0.0
    %2303 = vmatprep.subr.mxu0 0.0
    %2304 = vmatpush1.msra.mxu0 0.0
    %2305 = vmatprep.subr.mxu0 0.0
    %2306 = vmatpush1.msra.mxu0 0.0
    %2307 = vmatprep.subr.mxu0 0.0
    %2308 = vmatpush1.msra.mxu0 0.0
    %2309 = vmatprep.subr.mxu0 0.0
    %2310 = vmatpush1.msra.mxu0 0.0
    %2311 = vmatprep.subr.mxu0 0.0
    %2312 = vmatpush1.msra.mxu0 0.0
    %2313 = vmatprep.subr.mxu0 0.0
    %2314 = vmatpush1.msra.mxu0 0.0
    %2315 = vmatprep.subr.mxu0 0.0
    %2316 = vmatpush1.msra.mxu0 0.0
    %2317 = vmatprep.subr.mxu0 0.0
    %2318 = vmatpush1.msra.mxu0 0.0
    %2319 = vmatprep.subr.mxu0 0.0
    %2320 = vmatpush1.msra.mxu0 0.0
    %2321 = vmatprep.subr.mxu0 0.0
    %2322 = vmatpush1.msra.mxu0 0.0
    %2323 = vmatprep.subr.mxu0 0.0
    %2324 = vmatpush1.msra.mxu0 0.0
    %2325 = vmatprep.subr.mxu0 0.0
    %2326 = vmatpush1.msra.mxu0 0.0
    %2327 = vmatprep.subr.mxu0 0.0
    %2328 = vmatpush1.msra.mxu0 0.0
    %2329 = vmatprep.subr.mxu0 0.0
    %2330 = vmatpush1.msra.mxu0 0.0
    %2331 = vmatprep.subr.mxu0 0.0
    %2332 = vmatpush1.msra.mxu0 0.0
    %2333 = vmatprep.subr.mxu0 0.0
    %2334 = vmatpush1.msra.mxu0 0.0
    %2335 = vmatprep.subr.mxu0 0.0
    %2336 = vmatpush1.msra.mxu0 0.0
    %2337 = vmatprep.subr.mxu0 0.0
    %2338 = vmatpush1.msra.mxu0 0.0
    %2339 = vmatprep.subr.mxu0 0.0
    %2340 = vmatpush1.msra.mxu0 0.0
    %2341 = vmatprep.subr.mxu0 0.0
    %2342 = vmatpush1.msra.mxu0 0.0
    %2343 = vmatprep.mubr.f32.mxu0 0.0
    %2344 = vmatmul.mubr.f32.gmra.mrb[0].mxu0 %v158
    %v2345 = vpop.f32.mrb[0].mxu0
    %v2346 = vadd.f32 0.0, %v2345
    %v2347 = vpop.f32.mrb[0].mxu0
    %2348 = vmatprep.mubr.f32.mxu0 0.0
    %2349 = vmatmul.mubr.f32.gmra.mrb[0].mxu0 %v161
    %v2350 = vpop.f32.mrb[0].mxu0
    %v2351 = vadd.f32 0.0, %v2350
    %v2352 = vpop.f32.mrb[0].mxu0
    %2353 = vdwg.mxu0
    %v2354 = vadd.f32 %v2183, %v2346
    %v2355 = vadd.f32 %v2184, %v2351
    %s2356 = scalar_lea.vmem %s4, 32
    %v2357 = vld [vmem:[%s2356] sm:$0xff]
    %v2358 = vld [vmem:[%s2356 + $0x8] sm:$0xff]
    %v2359 = vld [vmem:[%s2356 + $0x10] sm:$0xff]
    %v2360 = vld [vmem:[%s2356 + $0x18] sm:$0xff]
    %s2361 = scalar_lea.vmem %s5, 1
    %v2362 = vld [vmem:[%s2361] sm:$0x1]
    %v2364 = vlaneseq
    %v2365 = vshrl.u32 %v2364, 7
    %v2366 = vsub.s32 0, %v2365
    %v2367 = vrot.slane %v2362, %v2366
    %v2370 = vsel %vm156, %v2354, 0
    %v2373 = vsel %vm156, %v2355, 0
    %2375 = vmatprep.subr.mxu0 0.0
    %2376 = vmatpush1.msra.mxu0 %v2357
    %2377 = vmatprep.subr.mxu0 0.0
    %2378 = vmatpush1.msra.mxu0 %v2358
    %2379 = vmatprep.subr.mxu0 0.0
    %2380 = vmatpush1.msra.mxu0 %v2359
    %2381 = vmatprep.subr.mxu0 0.0
    %2382 = vmatpush1.msra.mxu0 %v2360
    %2383 = vmatprep.subr.mxu0 0.0
    %2384 = vmatpush1.msra.mxu0 0.0
    %2385 = vmatprep.subr.mxu0 0.0
    %2386 = vmatpush1.msra.mxu0 0.0
    %2387 = vmatprep.subr.mxu0 0.0
    %2388 = vmatpush1.msra.mxu0 0.0
    %2389 = vmatprep.subr.mxu0 0.0
    %2390 = vmatpush1.msra.mxu0 0.0
    %2391 = vmatprep.subr.mxu0 0.0
    %2392 = vmatpush1.msra.mxu0 0.0
    %2393 = vmatprep.subr.mxu0 0.0
    %2394 = vmatpush1.msra.mxu0 0.0
    %2395 = vmatprep.subr.mxu0 0.0
    %2396 = vmatpush1.msra.mxu0 0.0
    %2397 = vmatprep.subr.mxu0 0.0
    %2398 = vmatpush1.msra.mxu0 0.0
    %2399 = vmatprep.subr.mxu0 0.0
    %2400 = vmatpush1.msra.mxu0 0.0
    %2401 = vmatprep.subr.mxu0 0.0
    %2402 = vmatpush1.msra.mxu0 0.0
    %2403 = vmatprep.subr.mxu0 0.0
    %2404 = vmatpush1.msra.mxu0 0.0
    %2405 = vmatprep.subr.mxu0 0.0
    %2406 = vmatpush1.msra.mxu0 0.0
    %2407 = vmatprep.subr.mxu0 0.0
    %2408 = vmatpush1.msra.mxu0 0.0
    %2409 = vmatprep.subr.mxu0 0.0
    %2410 = vmatpush1.msra.mxu0 0.0
    %2411 = vmatprep.subr.mxu0 0.0
    %2412 = vmatpush1.msra.mxu0 0.0
    %2413 = vmatprep.subr.mxu0 0.0
    %2414 = vmatpush1.msra.mxu0 0.0
    %2415 = vmatprep.subr.mxu0 0.0
    %2416 = vmatpush1.msra.mxu0 0.0
    %2417 = vmatprep.subr.mxu0 0.0
    %2418 = vmatpush1.msra.mxu0 0.0
    %2419 = vmatprep.subr.mxu0 0.0
    %2420 = vmatpush1.msra.mxu0 0.0
    %2421 = vmatprep.subr.mxu0 0.0
    %2422 = vmatpush1.msra.mxu0 0.0
    %2423 = vmatprep.subr.mxu0 0.0
    %2424 = vmatpush1.msra.mxu0 0.0
    %2425 = vmatprep.subr.mxu0 0.0
    %2426 = vmatpush1.msra.mxu0 0.0
    %2427 = vmatprep.subr.mxu0 0.0
    %2428 = vmatpush1.msra.mxu0 0.0
    %2429 = vmatprep.subr.mxu0 0.0
    %2430 = vmatpush1.msra.mxu0 0.0
    %2431 = vmatprep.subr.mxu0 0.0
    %2432 = vmatpush1.msra.mxu0 0.0
    %2433 = vmatprep.subr.mxu0 0.0
    %2434 = vmatpush1.msra.mxu0 0.0
    %2435 = vmatprep.subr.mxu0 0.0
    %2436 = vmatpush1.msra.mxu0 0.0
    %2437 = vmatprep.subr.mxu0 0.0
    %2438 = vmatpush1.msra.mxu0 0.0
    %2439 = vmatprep.mubr.f32.mxu0 0.0
    %2440 = vmatmul.mubr.f32.gmra.mrb[0].mxu0 %v2370
    %v2441 = vpop.f32.mrb[0].mxu0
    %v2442 = vadd.f32 %v2367, %v2441
    %v2443 = vpop.f32.mrb[0].mxu0
    %2444 = vmatprep.mubr.f32.mxu0 0.0
    %2445 = vmatmul.mubr.f32.gmra.mrb[0].mxu0 %v2373
    %v2446 = vpop.f32.mrb[0].mxu0
    %v2447 = vadd.f32 %v2367, %v2446
    %v2448 = vpop.f32.mrb[0].mxu0
    %2449 = vdwg.mxu0
    %v2450 = vmax.f32 %v2442, 0.0
    %v2451 = vmax.f32 %v2447, 0.0
    %s2452 = scalar_lea.vmem %s6, 64
    %v2453 = vld [vmem:[%s2452] sm:$0xff]
    %v2454 = vld [vmem:[%s2452 + $0x8] sm:$0xff]
    %v2455 = vld [vmem:[%s2452 + $0x10] sm:$0xff]
    %v2456 = vld [vmem:[%s2452 + $0x18] sm:$0xff]
    %v2457 = vld [vmem:[%s2452 + $0x20] sm:$0xff]
    %v2458 = vld [vmem:[%s2452 + $0x28] sm:$0xff]
    %v2459 = vld [vmem:[%s2452 + $0x30] sm:$0xff]
    %v2460 = vld [vmem:[%s2452 + $0x38] sm:$0xff]
    %s2461 = scalar_lea.vmem %s7, 1
    %v2462 = vld [vmem:[%s2461] sm:$0x1]
    %v2464 = vlaneseq
    %v2465 = vshrl.u32 %v2464, 7
    %v2466 = vsub.s32 0, %v2465
    %v2467 = vrot.slane %v2462, %v2466
    %v2470 = vsel %vm349, %v2450, 0
    %v2473 = vsel %vm349, %v2451, 0
    %2475 = vmatprep.subr.mxu0 0.0
    %2476 = vmatpush1.msra.mxu0 %v2453
    %2477 = vmatprep.subr.mxu0 0.0
    %2478 = vmatpush1.msra.mxu0 %v2454
    %2479 = vmatprep.subr.mxu0 0.0
    %2480 = vmatpush1.msra.mxu0 %v2455
    %2481 = vmatprep.subr.mxu0 0.0
    %2482 = vmatpush1.msra.mxu0 %v2456
    %2483 = vmatprep.subr.mxu0 0.0
    %2484 = vmatpush1.msra.mxu0 %v2457
    %2485 = vmatprep.subr.mxu0 0.0
    %2486 = vmatpush1.msra.mxu0 %v2458
    %2487 = vmatprep.subr.mxu0 0.0
    %2488 = vmatpush1.msra.mxu0 %v2459
    %2489 = vmatprep.subr.mxu0 0.0
    %2490 = vmatpush1.msra.mxu0 %v2460
    %2491 = vmatprep.subr.mxu0 0.0
    %2492 = vmatpush1.msra.mxu0 0.0
    %2493 = vmatprep.subr.mxu0 0.0
    %2494 = vmatpush1.msra.mxu0 0.0
    %2495 = vmatprep.subr.mxu0 0.0
    %2496 = vmatpush1.msra.mxu0 0.0
    %2497 = vmatprep.subr.mxu0 0.0
    %2498 = vmatpush1.msra.mxu0 0.0
    %2499 = vmatprep.subr.mxu0 0.0
    %2500 = vmatpush1.msra.mxu0 0.0
    %2501 = vmatprep.subr.mxu0 0.0
    %2502 = vmatpush1.msra.mxu0 0.0
    %2503 = vmatprep.subr.mxu0 0.0
    %2504 = vmatpush1.msra.mxu0 0.0
    %2505 = vmatprep.subr.mxu0 0.0
    %2506 = vmatpush1.msra.mxu0 0.0
    %2507 = vmatprep.subr.mxu0 0.0
    %2508 = vmatpush1.msra.mxu0 0.0
    %2509 = vmatprep.subr.mxu0 0.0
    %2510 = vmatpush1.msra.mxu0 0.0
    %2511 = vmatprep.subr.mxu0 0.0
    %2512 = vmatpush1.msra.mxu0 0.0
    %2513 = vmatprep.subr.mxu0 0.0
    %2514 = vmatpush1.msra.mxu0 0.0
    %2515 = vmatprep.subr.mxu0 0.0
    %2516 = vmatpush1.msra.mxu0 0.0
    %2517 = vmatprep.subr.mxu0 0.0
    %2518 = vmatpush1.msra.mxu0 0.0
    %2519 = vmatprep.subr.mxu0 0.0
    %2520 = vmatpush1.msra.mxu0 0.0
    %2521 = vmatprep.subr.mxu0 0.0
    %2522 = vmatpush1.msra.mxu0 0.0
    %2523 = vmatprep.subr.mxu0 0.0
    %2524 = vmatpush1.msra.mxu0 0.0
    %2525 = vmatprep.subr.mxu0 0.0
    %2526 = vmatpush1.msra.mxu0 0.0
    %2527 = vmatprep.subr.mxu0 0.0
    %2528 = vmatpush1.msra.mxu0 0.0
    %2529 = vmatprep.subr.mxu0 0.0
    %2530 = vmatpush1.msra.mxu0 0.0
    %2531 = vmatprep.subr.mxu0 0.0
    %2532 = vmatpush1.msra.mxu0 0.0
    %2533 = vmatprep.subr.mxu0 0.0
    %2534 = vmatpush1.msra.mxu0 0.0
    %2535 = vmatprep.subr.mxu0 0.0
    %2536 = vmatpush1.msra.mxu0 0.0
    %2537 = vmatprep.subr.mxu0 0.0
    %2538 = vmatpush1.msra.mxu0 0.0
    %2539 = vmatprep.mubr.f32.mxu0 0.0
    %2540 = vmatmul.mubr.f32.gmra.mrb[0].mxu0 %v2470
    %v2541 = vpop.f32.mrb[0].mxu0
    %v2542 = vadd.f32 %v2467, %v2541
    %v2543 = vpop.f32.mrb[0].mxu0
    %2544 = vmatprep.mubr.f32.mxu0 0.0
    %2545 = vmatmul.mubr.f32.gmra.mrb[0].mxu0 %v2473
    %v2546 = vpop.f32.mrb[0].mxu0
    %v2547 = vadd.f32 %v2467, %v2546
    %v2548 = vpop.f32.mrb[0].mxu0
    %2549 = vdwg.mxu0
    %s2550 = scalar_lea.vmem %s8, 32
    %v2551 = vld [vmem:[%s2550] sm:$0xff]
    %v2552 = vld [vmem:[%s2550 + $0x8] sm:$0xff]
    %v2553 = vld [vmem:[%s2550 + $0x10] sm:$0xff]
    %v2554 = vld [vmem:[%s2550 + $0x18] sm:$0xff]
    %s2555 = scalar_lea.vmem %s9, 1
    %v2556 = vld [vmem:[%s2555] sm:$0x1]
    %v2558 = vlaneseq
    %v2559 = vshrl.u32 %v2558, 7
    %v2560 = vsub.s32 0, %v2559
    %v2561 = vrot.slane %v2556, %v2560
    %v2564 = vsel %vm156, %v2542, 0
    %v2567 = vsel %vm156, %v2547, 0
    %2569 = vmatprep.subr.mxu0 0.0
    %2570 = vmatpush1.msra.mxu0 %v2551
    %2571 = vmatprep.subr.mxu0 0.0
    %2572 = vmatpush1.msra.mxu0 %v2552
    %2573 = vmatprep.subr.mxu0 0.0
    %2574 = vmatpush1.msra.mxu0 %v2553
    %2575 = vmatprep.subr.mxu0 0.0
    %2576 = vmatpush1.msra.mxu0 %v2554
    %2577 = vmatprep.subr.mxu0 0.0
    %2578 = vmatpush1.msra.mxu0 0.0
    %2579 = vmatprep.subr.mxu0 0.0
    %2580 = vmatpush1.msra.mxu0 0.0
    %2581 = vmatprep.subr.mxu0 0.0
    %2582 = vmatpush1.msra.mxu0 0.0
    %2583 = vmatprep.subr.mxu0 0.0
    %2584 = vmatpush1.msra.mxu0 0.0
    %2585 = vmatprep.subr.mxu0 0.0
    %2586 = vmatpush1.msra.mxu0 0.0
    %2587 = vmatprep.subr.mxu0 0.0
    %2588 = vmatpush1.msra.mxu0 0.0
    %2589 = vmatprep.subr.mxu0 0.0
    %2590 = vmatpush1.msra.mxu0 0.0
    %2591 = vmatprep.subr.mxu0 0.0
    %2592 = vmatpush1.msra.mxu0 0.0
    %2593 = vmatprep.subr.mxu0 0.0
    %2594 = vmatpush1.msra.mxu0 0.0
    %2595 = vmatprep.subr.mxu0 0.0
    %2596 = vmatpush1.msra.mxu0 0.0
    %2597 = vmatprep.subr.mxu0 0.0
    %2598 = vmatpush1.msra.mxu0 0.0
    %2599 = vmatprep.subr.mxu0 0.0
    %2600 = vmatpush1.msra.mxu0 0.0
    %2601 = vmatprep.subr.mxu0 0.0
    %2602 = vmatpush1.msra.mxu0 0.0
    %2603 = vmatprep.subr.mxu0 0.0
    %2604 = vmatpush1.msra.mxu0 0.0
    %2605 = vmatprep.subr.mxu0 0.0
    %2606 = vmatpush1.msra.mxu0 0.0
    %2607 = vmatprep.subr.mxu0 0.0
    %2608 = vmatpush1.msra.mxu0 0.0
    %2609 = vmatprep.subr.mxu0 0.0
    %2610 = vmatpush1.msra.mxu0 0.0
    %2611 = vmatprep.subr.mxu0 0.0
    %2612 = vmatpush1.msra.mxu0 0.0
    %2613 = vmatprep.subr.mxu0 0.0
    %2614 = vmatpush1.msra.mxu0 0.0
    %2615 = vmatprep.subr.mxu0 0.0
    %2616 = vmatpush1.msra.mxu0 0.0
    %2617 = vmatprep.subr.mxu0 0.0
    %2618 = vmatpush1.msra.mxu0 0.0
    %2619 = vmatprep.subr.mxu0 0.0
    %2620 = vmatpush1.msra.mxu0 0.0
    %2621 = vmatprep.subr.mxu0 0.0
    %2622 = vmatpush1.msra.mxu0 0.0
    %2623 = vmatprep.subr.mxu0 0.0
    %2624 = vmatpush1.msra.mxu0 0.0
    %2625 = vmatprep.subr.mxu0 0.0
    %2626 = vmatpush1.msra.mxu0 0.0
    %2627 = vmatprep.subr.mxu0 0.0
    %2628 = vmatpush1.msra.mxu0 0.0
    %2629 = vmatprep.subr.mxu0 0.0
    %2630 = vmatpush1.msra.mxu0 0.0
    %2631 = vmatprep.subr.mxu0 0.0
    %2632 = vmatpush1.msra.mxu0 0.0
    %2633 = vmatprep.mubr.f32.mxu0 0.0
    %2634 = vmatmul.mubr.f32.gmra.mrb[0].mxu0 %v2564
    %v2635 = vpop.f32.mrb[0].mxu0
    %v2636 = vadd.f32 %v2561, %v2635
    %v2637 = vpop.f32.mrb[0].mxu0
    %2638 = vmatprep.mubr.f32.mxu0 0.0
    %2639 = vmatmul.mubr.f32.gmra.mrb[0].mxu0 %v2567
    %v2640 = vpop.f32.mrb[0].mxu0
    %v2641 = vadd.f32 %v2561, %v2640
    %v2642 = vpop.f32.mrb[0].mxu0
    %2643 = vdwg.mxu0
    %s2644 = scalar_lea.vmem %s10, 32
    %v2645 = vld [vmem:[%s2644] sm:$0xff]
    %v2646 = vld [vmem:[%s2644 + $0x8] sm:$0xff]
    %v2647 = vld [vmem:[%s2644 + $0x10] sm:$0xff]
    %v2648 = vld [vmem:[%s2644 + $0x18] sm:$0xff]
    %2650 = vrot.lane.b32.xlu0 %v2636, 96
    %v2651 = vpop.permute.xlu0 %2650
    %v2652 = vsel %vm530, %v2636, 0
    %v2654 = vsel %vm530, %v2651, 0
    %2656 = vmatprep.subr.mxu0 0.0
    %2657 = vmatpush1.xpose.msra.mxu0 %v2654
    %2658 = vmatprep.subr.mxu0 0.0
    %2659 = vmatpush1.xpose.msra.mxu0 0.0
    %2660 = vmatprep.subr.mxu0 0.0
    %2661 = vmatpush1.xpose.msra.mxu0 0.0
    %2662 = vmatprep.subr.mxu0 0.0
    %2663 = vmatpush1.xpose.msra.mxu0 0.0
    %2664 = vmatprep.subr.mxu0 0.0
    %2665 = vmatpush1.xpose.msra.mxu0 0.0
    %2666 = vmatprep.subr.mxu0 0.0
    %2667 = vmatpush1.xpose.msra.mxu0 0.0
    %2668 = vmatprep.subr.mxu0 0.0
    %2669 = vmatpush1.xpose.msra.mxu0 0.0
    %2670 = vmatprep.subr.mxu0 0.0
    %2671 = vmatpush1.xpose.msra.mxu0 0.0
    %2672 = vmatprep.subr.mxu0 0.0
    %2673 = vmatpush1.xpose.msra.mxu0 0.0
    %2674 = vmatprep.subr.mxu0 0.0
    %2675 = vmatpush1.xpose.msra.mxu0 0.0
    %2676 = vmatprep.subr.mxu0 0.0
    %2677 = vmatpush1.xpose.msra.mxu0 0.0
    %2678 = vmatprep.subr.mxu0 0.0
    %2679 = vmatpush1.xpose.msra.mxu0 0.0
    %2680 = vmatprep.subr.mxu0 0.0
    %2681 = vmatpush1.xpose.msra.mxu0 0.0
    %2682 = vmatprep.subr.mxu0 0.0
    %2683 = vmatpush1.xpose.msra.mxu0 0.0
    %2684 = vmatprep.subr.mxu0 0.0
    %2685 = vmatpush1.xpose.msra.mxu0 0.0
    %2686 = vmatprep.subr.mxu0 0.0
    %2687 = vmatpush1.xpose.msra.mxu0 0.0
    %2688 = vmatprep.subr.mxu0 0.0
    %2689 = vmatpush1.xpose.msra.mxu0 0.0
    %2690 = vmatprep.subr.mxu0 0.0
    %2691 = vmatpush1.xpose.msra.mxu0 0.0
    %2692 = vmatprep.subr.mxu0 0.0
    %2693 = vmatpush1.xpose.msra.mxu0 0.0
    %2694 = vmatprep.subr.mxu0 0.0
    %2695 = vmatpush1.xpose.msra.mxu0 0.0
    %2696 = vmatprep.subr.mxu0 0.0
    %2697 = vmatpush1.xpose.msra.mxu0 0.0
    %2698 = vmatprep.subr.mxu0 0.0
    %2699 = vmatpush1.xpose.msra.mxu0 0.0
    %2700 = vmatprep.subr.mxu0 0.0
    %2701 = vmatpush1.xpose.msra.mxu0 0.0
    %2702 = vmatprep.subr.mxu0 0.0
    %2703 = vmatpush1.xpose.msra.mxu0 0.0
    %2704 = vmatprep.subr.mxu0 0.0
    %2705 = vmatpush1.xpose.msra.mxu0 0.0
    %2706 = vmatprep.subr.mxu0 0.0
    %2707 = vmatpush1.xpose.msra.mxu0 0.0
    %2708 = vmatprep.subr.mxu0 0.0
    %2709 = vmatpush1.xpose.msra.mxu0 0.0
    %2710 = vmatprep.subr.mxu0 0.0
    %2711 = vmatpush1.xpose.msra.mxu0 0.0
    %2712 = vmatprep.subr.mxu0 0.0
    %2713 = vmatpush1.xpose.msra.mxu0 0.0
    %2714 = vmatprep.subr.mxu0 0.0
    %2715 = vmatpush1.xpose.msra.mxu0 0.0
    %2716 = vmatprep.subr.mxu0 0.0
    %2717 = vmatpush1.xpose.msra.mxu0 0.0
    %2718 = vmatprep.subr.mxu0 0.0
    %2719 = vmatpush1.xpose.msra.mxu0 0.0
    %2720 = vmatprep.mubr.f32.mxu0 0.0
    %2721 = vmatmul.mubr.f32.gmra.mrb[0].mxu0 %v2652
    %v2722 = vpop.f32.mrb[0].mxu0
    %v2723 = vadd.f32 0.0, %v2722
    %v2724 = vpop.f32.mrb[0].mxu0
    %2725 = vdwg.mxu0
    %2727 = vrot.lane.b32.xlu0 %v2641, 96
    %v2728 = vpop.permute.xlu0 %2727
    %v2729 = vsel %vm530, %v2641, 0
    %v2731 = vsel %vm530, %v2728, 0
    %2733 = vmatprep.subr.mxu0 0.0
    %2734 = vmatpush1.xpose.msra.mxu0 %v2731
    %2735 = vmatprep.subr.mxu0 0.0
    %2736 = vmatpush1.xpose.msra.mxu0 0.0
    %2737 = vmatprep.subr.mxu0 0.0
    %2738 = vmatpush1.xpose.msra.mxu0 0.0
    %2739 = vmatprep.subr.mxu0 0.0
    %2740 = vmatpush1.xpose.msra.mxu0 0.0
    %2741 = vmatprep.subr.mxu0 0.0
    %2742 = vmatpush1.xpose.msra.mxu0 0.0
    %2743 = vmatprep.subr.mxu0 0.0
    %2744 = vmatpush1.xpose.msra.mxu0 0.0
    %2745 = vmatprep.subr.mxu0 0.0
    %2746 = vmatpush1.xpose.msra.mxu0 0.0
    %2747 = vmatprep.subr.mxu0 0.0
    %2748 = vmatpush1.xpose.msra.mxu0 0.0
    %2749 = vmatprep.subr.mxu0 0.0
    %2750 = vmatpush1.xpose.msra.mxu0 0.0
    %2751 = vmatprep.subr.mxu0 0.0
    %2752 = vmatpush1.xpose.msra.mxu0 0.0
    %2753 = vmatprep.subr.mxu0 0.0
    %2754 = vmatpush1.xpose.msra.mxu0 0.0
    %2755 = vmatprep.subr.mxu0 0.0
    %2756 = vmatpush1.xpose.msra.mxu0 0.0
    %2757 = vmatprep.subr.mxu0 0.0
    %2758 = vmatpush1.xpose.msra.mxu0 0.0
    %2759 = vmatprep.subr.mxu0 0.0
    %2760 = vmatpush1.xpose.msra.mxu0 0.0
    %2761 = vmatprep.subr.mxu0 0.0
    %2762 = vmatpush1.xpose.msra.mxu0 0.0
    %2763 = vmatprep.subr.mxu0 0.0
    %2764 = vmatpush1.xpose.msra.mxu0 0.0
    %2765 = vmatprep.subr.mxu0 0.0
    %2766 = vmatpush1.xpose.msra.mxu0 0.0
    %2767 = vmatprep.subr.mxu0 0.0
    %2768 = vmatpush1.xpose.msra.mxu0 0.0
    %2769 = vmatprep.subr.mxu0 0.0
    %2770 = vmatpush1.xpose.msra.mxu0 0.0
    %2771 = vmatprep.subr.mxu0 0.0
    %2772 = vmatpush1.xpose.msra.mxu0 0.0
    %2773 = vmatprep.subr.mxu0 0.0
    %2774 = vmatpush1.xpose.msra.mxu0 0.0
    %2775 = vmatprep.subr.mxu0 0.0
    %2776 = vmatpush1.xpose.msra.mxu0 0.0
    %2777 = vmatprep.subr.mxu0 0.0
    %2778 = vmatpush1.xpose.msra.mxu0 0.0
    %2779 = vmatprep.subr.mxu0 0.0
    %2780 = vmatpush1.xpose.msra.mxu0 0.0
    %2781 = vmatprep.subr.mxu0 0.0
    %2782 = vmatpush1.xpose.msra.mxu0 0.0
    %2783 = vmatprep.subr.mxu0 0.0
    %2784 = vmatpush1.xpose.msra.mxu0 0.0
    %2785 = vmatprep.subr.mxu0 0.0
    %2786 = vmatpush1.xpose.msra.mxu0 0.0
    %2787 = vmatprep.subr.mxu0 0.0
    %2788 = vmatpush1.xpose.msra.mxu0 0.0
    %2789 = vmatprep.subr.mxu0 0.0
    %2790 = vmatpush1.xpose.msra.mxu0 0.0
    %2791 = vmatprep.subr.mxu0 0.0
    %2792 = vmatpush1.xpose.msra.mxu0 0.0
    %2793 = vmatprep.subr.mxu0 0.0
    %2794 = vmatpush1.xpose.msra.mxu0 0.0
    %2795 = vmatprep.subr.mxu0 0.0
    %2796 = vmatpush1.xpose.msra.mxu0 0.0
    %2797 = vmatprep.mubr.f32.mxu0 0.0
    %2798 = vmatmul.mubr.f32.gmra.mrb[0].mxu0 %v2729
    %v2799 = vpop.f32.mrb[0].mxu0
    %v2800 = vadd.f32 0.0, %v2799
    %v2801 = vpop.f32.mrb[0].mxu0
    %2802 = vdwg.mxu0
    %v2803 = vsel %vm530, %v2723, -inf
    %2804 = vmax.xlane.f32.xlu0 %v2803
    %v2805 = vpop.xlane.xlu0 %2804
    %v2806 = vsel %vm530, %v2800, -inf
    %2807 = vmax.xlane.f32.xlu0 %v2806
    %v2808 = vpop.xlane.xlu0 %2807
    %v2809 = vsub.f32 %v2723, %v2805
    %v2810 = vsub.f32 %v2800, %v2808
    %v2811 = vmul.f32 %v2809, 1.442695
    %v2812 = vpow.pop %v2811
    %v2813 = vmul.f32 %v2810, 1.442695
    %v2814 = vpow.pop %v2813
    %v2815 = vsel %vm530, %v2812, 0.0
    %2816 = vadd.xlane.f32.xlu0 %v2815
    %v2817 = vpop.xlane.xlu0 %2816
    %v2818 = vsel %vm530, %v2814, 0.0
    %2819 = vadd.xlane.f32.xlu0 %v2818
    %v2820 = vpop.xlane.xlu0 %2819
    %v2821 = vrcp.pop %v2817
    %v2822 = vrcp.pop %v2820
    %v2823 = vmul.f32 %v2812, %v2821
    %v2824 = vmul.f32 %v2814, %v2822
    %2825 = vrot.lane.b32.xlu0 %v2636, 64
    %v2826 = vpop.permute.xlu0 %2825
    %v2829 = vsel %vm530, %v2823, 0
    %2831 = vmatprep.subr.mxu0 0.0
    %2832 = vmatpush1.msra.mxu0 %v2826
    %2833 = vmatprep.subr.mxu0 0.0
    %2834 = vmatpush1.msra.mxu0 0.0
    %2835 = vmatprep.subr.mxu0 0.0
    %2836 = vmatpush1.msra.mxu0 0.0
    %2837 = vmatprep.subr.mxu0 0.0
    %2838 = vmatpush1.msra.mxu0 0.0
    %2839 = vmatprep.subr.mxu0 0.0
    %2840 = vmatpush1.msra.mxu0 0.0
    %2841 = vmatprep.subr.mxu0 0.0
    %2842 = vmatpush1.msra.mxu0 0.0
    %2843 = vmatprep.subr.mxu0 0.0
    %2844 = vmatpush1.msra.mxu0 0.0
    %2845 = vmatprep.subr.mxu0 0.0
    %2846 = vmatpush1.msra.mxu0 0.0
    %2847 = vmatprep.subr.mxu0 0.0
    %2848 = vmatpush1.msra.mxu0 0.0
    %2849 = vmatprep.subr.mxu0 0.0
    %2850 = vmatpush1.msra.mxu0 0.0
    %2851 = vmatprep.subr.mxu0 0.0
    %2852 = vmatpush1.msra.mxu0 0.0
    %2853 = vmatprep.subr.mxu0 0.0
    %2854 = vmatpush1.msra.mxu0 0.0
    %2855 = vmatprep.subr.mxu0 0.0
    %2856 = vmatpush1.msra.mxu0 0.0
    %2857 = vmatprep.subr.mxu0 0.0
    %2858 = vmatpush1.msra.mxu0 0.0
    %2859 = vmatprep.subr.mxu0 0.0
    %2860 = vmatpush1.msra.mxu0 0.0
    %2861 = vmatprep.subr.mxu0 0.0
    %2862 = vmatpush1.msra.mxu0 0.0
    %2863 = vmatprep.subr.mxu0 0.0
    %2864 = vmatpush1.msra.mxu0 0.0
    %2865 = vmatprep.subr.mxu0 0.0
    %2866 = vmatpush1.msra.mxu0 0.0
    %2867 = vmatprep.subr.mxu0 0.0
    %2868 = vmatpush1.msra.mxu0 0.0
    %2869 = vmatprep.subr.mxu0 0.0
    %2870 = vmatpush1.msra.mxu0 0.0
    %2871 = vmatprep.subr.mxu0 0.0
    %2872 = vmatpush1.msra.mxu0 0.0
    %2873 = vmatprep.subr.mxu0 0.0
    %2874 = vmatpush1.msra.mxu0 0.0
    %2875 = vmatprep.subr.mxu0 0.0
    %2876 = vmatpush1.msra.mxu0 0.0
    %2877 = vmatprep.subr.mxu0 0.0
    %2878 = vmatpush1.msra.mxu0 0.0
    %2879 = vmatprep.subr.mxu0 0.0
    %2880 = vmatpush1.msra.mxu0 0.0
    %2881 = vmatprep.subr.mxu0 0.0
    %2882 = vmatpush1.msra.mxu0 0.0
    %2883 = vmatprep.subr.mxu0 0.0
    %2884 = vmatpush1.msra.mxu0 0.0
    %2885 = vmatprep.subr.mxu0 0.0
    %2886 = vmatpush1.msra.mxu0 0.0
    %2887 = vmatprep.subr.mxu0 0.0
    %2888 = vmatpush1.msra.mxu0 0.0
    %2889 = vmatprep.subr.mxu0 0.0
    %2890 = vmatpush1.msra.mxu0 0.0
    %2891 = vmatprep.subr.mxu0 0.0
    %2892 = vmatpush1.msra.mxu0 0.0
    %2893 = vmatprep.subr.mxu0 0.0
    %2894 = vmatpush1.msra.mxu0 0.0
    %2895 = vmatprep.mubr.f32.mxu0 0.0
    %2896 = vmatmul.mubr.f32.gmra.mrb[0].mxu0 %v2829
    %v2897 = vpop.f32.mrb[0].mxu0
    %v2898 = vadd.f32 0.0, %v2897
    %v2899 = vpop.f32.mrb[0].mxu0
    %2900 = vdwg.mxu0
    %2901 = vrot.lane.b32.xlu0 %v2641, 64
    %v2902 = vpop.permute.xlu0 %2901
    %v2905 = vsel %vm530, %v2824, 0
    %2907 = vmatprep.subr.mxu0 0.0
    %2908 = vmatpush1.msra.mxu0 %v2902
    %2909 = vmatprep.subr.mxu0 0.0
    %2910 = vmatpush1.msra.mxu0 0.0
    %2911 = vmatprep.subr.mxu0 0.0
    %2912 = vmatpush1.msra.mxu0 0.0
    %2913 = vmatprep.subr.mxu0 0.0
    %2914 = vmatpush1.msra.mxu0 0.0
    %2915 = vmatprep.subr.mxu0 0.0
    %2916 = vmatpush1.msra.mxu0 0.0
    %2917 = vmatprep.subr.mxu0 0.0
    %2918 = vmatpush1.msra.mxu0 0.0
    %2919 = vmatprep.subr.mxu0 0.0
    %2920 = vmatpush1.msra.mxu0 0.0
    %2921 = vmatprep.subr.mxu0 0.0
    %2922 = vmatpush1.msra.mxu0 0.0
    %2923 = vmatprep.subr.mxu0 0.0
    %2924 = vmatpush1.msra.mxu0 0.0
    %2925 = vmatprep.subr.mxu0 0.0
    %2926 = vmatpush1.msra.mxu0 0.0
    %2927 = vmatprep.subr.mxu0 0.0
    %2928 = vmatpush1.msra.mxu0 0.0
    %2929 = vmatprep.subr.mxu0 0.0
    %2930 = vmatpush1.msra.mxu0 0.0
    %2931 = vmatprep.subr.mxu0 0.0
    %2932 = vmatpush1.msra.mxu0 0.0
    %2933 = vmatprep.subr.mxu0 0.0
    %2934 = vmatpush1.msra.mxu0 0.0
    %2935 = vmatprep.subr.mxu0 0.0
    %2936 = vmatpush1.msra.mxu0 0.0
    %2937 = vmatprep.subr.mxu0 0.0
    %2938 = vmatpush1.msra.mxu0 0.0
    %2939 = vmatprep.subr.mxu0 0.0
    %2940 = vmatpush1.msra.mxu0 0.0
    %2941 = vmatprep.subr.mxu0 0.0
    %2942 = vmatpush1.msra.mxu0 0.0
    %2943 = vmatprep.subr.mxu0 0.0
    %2944 = vmatpush1.msra.mxu0 0.0
    %2945 = vmatprep.subr.mxu0 0.0
    %2946 = vmatpush1.msra.mxu0 0.0
    %2947 = vmatprep.subr.mxu0 0.0
    %2948 = vmatpush1.msra.mxu0 0.0
    %2949 = vmatprep.subr.mxu0 0.0
    %2950 = vmatpush1.msra.mxu0 0.0
    %2951 = vmatprep.subr.mxu0 0.0
    %2952 = vmatpush1.msra.mxu0 0.0
    %2953 = vmatprep.subr.mxu0 0.0
    %2954 = vmatpush1.msra.mxu0 0.0
    %2955 = vmatprep.subr.mxu0 0.0
    %2956 = vmatpush1.msra.mxu0 0.0
    %2957 = vmatprep.subr.mxu0 0.0
    %2958 = vmatpush1.msra.mxu0 0.0
    %2959 = vmatprep.subr.mxu0 0.0
    %2960 = vmatpush1.msra.mxu0 0.0
    %2961 = vmatprep.subr.mxu0 0.0
    %2962 = vmatpush1.msra.mxu0 0.0
    %2963 = vmatprep.subr.mxu0 0.0
    %2964 = vmatpush1.msra.mxu0 0.0
    %2965 = vmatprep.subr.mxu0 0.0
    %2966 = vmatpush1.msra.mxu0 0.0
    %2967 = vmatprep.subr.mxu0 0.0
    %2968 = vmatpush1.msra.mxu0 0.0
    %2969 = vmatprep.subr.mxu0 0.0
    %2970 = vmatpush1.msra.mxu0 0.0
    %2971 = vmatprep.mubr.f32.mxu0 0.0
    %2972 = vmatmul.mubr.f32.gmra.mrb[0].mxu0 %v2905
    %v2973 = vpop.f32.mrb[0].mxu0
    %v2974 = vadd.f32 0.0, %v2973
    %v2975 = vpop.f32.mrb[0].mxu0
    %2976 = vdwg.mxu0
    %2977 = vrot.lane.b32.xlu0 %v2636, 120
    %v2978 = vpop.permute.xlu0 %2977
    %2979 = vrot.lane.b32.xlu0 %v2636, 88
    %v2980 = vpop.permute.xlu0 %2979
    %v2981 = vsel %vm530, %v2978, 0
    %v2983 = vsel %vm530, %v2980, 0
    %2985 = vmatprep.subr.mxu0 0.0
    %2986 = vmatpush1.xpose.msra.mxu0 %v2983
    %2987 = vmatprep.subr.mxu0 0.0
    %2988 = vmatpush1.xpose.msra.mxu0 0.0
    %2989 = vmatprep.subr.mxu0 0.0
    %2990 = vmatpush1.xpose.msra.mxu0 0.0
    %2991 = vmatprep.subr.mxu0 0.0
    %2992 = vmatpush1.xpose.msra.mxu0 0.0
    %2993 = vmatprep.subr.mxu0 0.0
    %2994 = vmatpush1.xpose.msra.mxu0 0.0
    %2995 = vmatprep.subr.mxu0 0.0
    %2996 = vmatpush1.xpose.msra.mxu0 0.0
    %2997 = vmatprep.subr.mxu0 0.0
    %2998 = vmatpush1.xpose.msra.mxu0 0.0
    %2999 = vmatprep.subr.mxu0 0.0
    %3000 = vmatpush1.xpose.msra.mxu0 0.0
    %3001 = vmatprep.subr.mxu0 0.0
    %3002 = vmatpush1.xpose.msra.mxu0 0.0
    %3003 = vmatprep.subr.mxu0 0.0
    %3004 = vmatpush1.xpose.msra.mxu0 0.0
    %3005 = vmatprep.subr.mxu0 0.0
    %3006 = vmatpush1.xpose.msra.mxu0 0.0
    %3007 = vmatprep.subr.mxu0 0.0
    %3008 = vmatpush1.xpose.msra.mxu0 0.0
    %3009 = vmatprep.subr.mxu0 0.0
    %3010 = vmatpush1.xpose.msra.mxu0 0.0
    %3011 = vmatprep.subr.mxu0 0.0
    %3012 = vmatpush1.xpose.msra.mxu0 0.0
    %3013 = vmatprep.subr.mxu0 0.0
    %3014 = vmatpush1.xpose.msra.mxu0 0.0
    %3015 = vmatprep.subr.mxu0 0.0
    %3016 = vmatpush1.xpose.msra.mxu0 0.0
    %3017 = vmatprep.subr.mxu0 0.0
    %3018 = vmatpush1.xpose.msra.mxu0 0.0
    %3019 = vmatprep.subr.mxu0 0.0
    %3020 = vmatpush1.xpose.msra.mxu0 0.0
    %3021 = vmatprep.subr.mxu0 0.0
    %3022 = vmatpush1.xpose.msra.mxu0 0.0
    %3023 = vmatprep.subr.mxu0 0.0
    %3024 = vmatpush1.xpose.msra.mxu0 0.0
    %3025 = vmatprep.subr.mxu0 0.0
    %3026 = vmatpush1.xpose.msra.mxu0 0.0
    %3027 = vmatprep.subr.mxu0 0.0
    %3028 = vmatpush1.xpose.msra.mxu0 0.0
    %3029 = vmatprep.subr.mxu0 0.0
    %3030 = vmatpush1.xpose.msra.mxu0 0.0
    %3031 = vmatprep.subr.mxu0 0.0
    %3032 = vmatpush1.xpose.msra.mxu0 0.0
    %3033 = vmatprep.subr.mxu0 0.0
    %3034 = vmatpush1.xpose.msra.mxu0 0.0
    %3035 = vmatprep.subr.mxu0 0.0
    %3036 = vmatpush1.xpose.msra.mxu0 0.0
    %3037 = vmatprep.subr.mxu0 0.0
    %3038 = vmatpush1.xpose.msra.mxu0 0.0
    %3039 = vmatprep.subr.mxu0 0.0
    %3040 = vmatpush1.xpose.msra.mxu0 0.0
    %3041 = vmatprep.subr.mxu0 0.0
    %3042 = vmatpush1.xpose.msra.mxu0 0.0
    %3043 = vmatprep.subr.mxu0 0.0
    %3044 = vmatpush1.xpose.msra.mxu0 0.0
    %3045 = vmatprep.subr.mxu0 0.0
    %3046 = vmatpush1.xpose.msra.mxu0 0.0
    %3047 = vmatprep.subr.mxu0 0.0
    %3048 = vmatpush1.xpose.msra.mxu0 0.0
    %3049 = vmatprep.mubr.f32.mxu0 0.0
    %3050 = vmatmul.mubr.f32.gmra.mrb[0].mxu0 %v2981
    %v3051 = vpop.f32.mrb[0].mxu0
    %v3052 = vadd.f32 0.0, %v3051
    %v3053 = vpop.f32.mrb[0].mxu0
    %3054 = vdwg.mxu0
    %3055 = vrot.lane.b32.xlu0 %v2641, 120
    %v3056 = vpop.permute.xlu0 %3055
    %3057 = vrot.lane.b32.xlu0 %v2641, 88
    %v3058 = vpop.permute.xlu0 %3057
    %v3059 = vsel %vm530, %v3056, 0
    %v3061 = vsel %vm530, %v3058, 0
    %3063 = vmatprep.subr.mxu0 0.0
    %3064 = vmatpush1.xpose.msra.mxu0 %v3061
    %3065 = vmatprep.subr.mxu0 0.0
    %3066 = vmatpush1.xpose.msra.mxu0 0.0
    %3067 = vmatprep.subr.mxu0 0.0
    %3068 = vmatpush1.xpose.msra.mxu0 0.0
    %3069 = vmatprep.subr.mxu0 0.0
    %3070 = vmatpush1.xpose.msra.mxu0 0.0
    %3071 = vmatprep.subr.mxu0 0.0
    %3072 = vmatpush1.xpose.msra.mxu0 0.0
    %3073 = vmatprep.subr.mxu0 0.0
    %3074 = vmatpush1.xpose.msra.mxu0 0.0
    %3075 = vmatprep.subr.mxu0 0.0
    %3076 = vmatpush1.xpose.msra.mxu0 0.0
    %3077 = vmatprep.subr.mxu0 0.0
    %3078 = vmatpush1.xpose.msra.mxu0 0.0
    %3079 = vmatprep.subr.mxu0 0.0
    %3080 = vmatpush1.xpose.msra.mxu0 0.0
    %3081 = vmatprep.subr.mxu0 0.0
    %3082 = vmatpush1.xpose.msra.mxu0 0.0
    %3083 = vmatprep.subr.mxu0 0.0
    %3084 = vmatpush1.xpose.msra.mxu0 0.0
    %3085 = vmatprep.subr.mxu0 0.0
    %3086 = vmatpush1.xpose.msra.mxu0 0.0
    %3087 = vmatprep.subr.mxu0 0.0
    %3088 = vmatpush1.xpose.msra.mxu0 0.0
    %3089 = vmatprep.subr.mxu0 0.0
    %3090 = vmatpush1.xpose.msra.mxu0 0.0
    %3091 = vmatprep.subr.mxu0 0.0
    %3092 = vmatpush1.xpose.msra.mxu0 0.0
    %3093 = vmatprep.subr.mxu0 0.0
    %3094 = vmatpush1.xpose.msra.mxu0 0.0
    %3095 = vmatprep.subr.mxu0 0.0
    %3096 = vmatpush1.xpose.msra.mxu0 0.0
    %3097 = vmatprep.subr.mxu0 0.0
    %3098 = vmatpush1.xpose.msra.mxu0 0.0
    %3099 = vmatprep.subr.mxu0 0.0
    %3100 = vmatpush1.xpose.msra.mxu0 0.0
    %3101 = vmatprep.subr.mxu0 0.0
    %3102 = vmatpush1.xpose.msra.mxu0 0.0
    %3103 = vmatprep.subr.mxu0 0.0
    %3104 = vmatpush1.xpose.msra.mxu0 0.0
    %3105 = vmatprep.subr.mxu0 0.0
    %3106 = vmatpush1.xpose.msra.mxu0 0.0
    %3107 = vmatprep.subr.mxu0 0.0
    %3108 = vmatpush1.xpose.msra.mxu0 0.0
    %3109 = vmatprep.subr.mxu0 0.0
    %3110 = vmatpush1.xpose.msra.mxu0 0.0
    %3111 = vmatprep.subr.mxu0 0.0
    %3112 = vmatpush1.xpose.msra.mxu0 0.0
    %3113 = vmatprep.subr.mxu0 0.0
    %3114 = vmatpush1.xpose.msra.mxu0 0.0
    %3115 = vmatprep.subr.mxu0 0.0
    %3116 = vmatpush1.xpose.msra.mxu0 0.0
    %3117 = vmatprep.subr.mxu0 0.0
    %3118 = vmatpush1.xpose.msra.mxu0 0.0
    %3119 = vmatprep.subr.mxu0 0.0
    %3120 = vmatpush1.xpose.msra.mxu0 0.0
    %3121 = vmatprep.subr.mxu0 0.0
    %3122 = vmatpush1.xpose.msra.mxu0 0.0
    %3123 = vmatprep.subr.mxu0 0.0
    %3124 = vmatpush1.xpose.msra.mxu0 0.0
    %3125 = vmatprep.subr.mxu0 0.0
    %3126 = vmatpush1.xpose.msra.mxu0 0.0
    %3127 = vmatprep.mubr.f32.mxu0 0.0
    %3128 = vmatmul.mubr.f32.gmra.mrb[0].mxu0 %v3059
    %v3129 = vpop.f32.mrb[0].mxu0
    %v3130 = vadd.f32 0.0, %v3129
    %v3131 = vpop.f32.mrb[0].mxu0
    %3132 = vdwg.mxu0
    %v3133 = vsel %vm530, %v3052, -inf
    %3134 = vmax.xlane.f32.xlu0 %v3133
    %v3135 = vpop.xlane.xlu0 %3134
    %v3136 = vsel %vm530, %v3130, -inf
    %3137 = vmax.xlane.f32.xlu0 %v3136
    %v3138 = vpop.xlane.xlu0 %3137
    %v3139 = vsub.f32 %v3052, %v3135
    %v3140 = vsub.f32 %v3130, %v3138
    %v3141 = vmul.f32 %v3139, 1.442695
    %v3142 = vpow.pop %v3141
    %v3143 = vmul.f32 %v3140, 1.442695
    %v3144 = vpow.pop %v3143
    %v3145 = vsel %vm530, %v3142, 0.0
    %3146 = vadd.xlane.f32.xlu0 %v3145
    %v3147 = vpop.xlane.xlu0 %3146
    %v3148 = vsel %vm530, %v3144, 0.0
    %3149 = vadd.xlane.f32.xlu0 %v3148
    %v3150 = vpop.xlane.xlu0 %3149
    %v3151 = vrcp.pop %v3147
    %v3152 = vrcp.pop %v3150
    %v3153 = vmul.f32 %v3142, %v3151
    %v3154 = vmul.f32 %v3144, %v3152
    %3155 = vrot.lane.b32.xlu0 %v2636, 56
    %v3156 = vpop.permute.xlu0 %3155
    %v3159 = vsel %vm530, %v3153, 0
    %3161 = vmatprep.subr.mxu0 0.0
    %3162 = vmatpush1.msra.mxu0 %v3156
    %3163 = vmatprep.subr.mxu0 0.0
    %3164 = vmatpush1.msra.mxu0 0.0
    %3165 = vmatprep.subr.mxu0 0.0
    %3166 = vmatpush1.msra.mxu0 0.0
    %3167 = vmatprep.subr.mxu0 0.0
    %3168 = vmatpush1.msra.mxu0 0.0
    %3169 = vmatprep.subr.mxu0 0.0
    %3170 = vmatpush1.msra.mxu0 0.0
    %3171 = vmatprep.subr.mxu0 0.0
    %3172 = vmatpush1.msra.mxu0 0.0
    %3173 = vmatprep.subr.mxu0 0.0
    %3174 = vmatpush1.msra.mxu0 0.0
    %3175 = vmatprep.subr.mxu0 0.0
    %3176 = vmatpush1.msra.mxu0 0.0
    %3177 = vmatprep.subr.mxu0 0.0
    %3178 = vmatpush1.msra.mxu0 0.0
    %3179 = vmatprep.subr.mxu0 0.0
    %3180 = vmatpush1.msra.mxu0 0.0
    %3181 = vmatprep.subr.mxu0 0.0
    %3182 = vmatpush1.msra.mxu0 0.0
    %3183 = vmatprep.subr.mxu0 0.0
    %3184 = vmatpush1.msra.mxu0 0.0
    %3185 = vmatprep.subr.mxu0 0.0
    %3186 = vmatpush1.msra.mxu0 0.0
    %3187 = vmatprep.subr.mxu0 0.0
    %3188 = vmatpush1.msra.mxu0 0.0
    %3189 = vmatprep.subr.mxu0 0.0
    %3190 = vmatpush1.msra.mxu0 0.0
    %3191 = vmatprep.subr.mxu0 0.0
    %3192 = vmatpush1.msra.mxu0 0.0
    %3193 = vmatprep.subr.mxu0 0.0
    %3194 = vmatpush1.msra.mxu0 0.0
    %3195 = vmatprep.subr.mxu0 0.0
    %3196 = vmatpush1.msra.mxu0 0.0
    %3197 = vmatprep.subr.mxu0 0.0
    %3198 = vmatpush1.msra.mxu0 0.0
    %3199 = vmatprep.subr.mxu0 0.0
    %3200 = vmatpush1.msra.mxu0 0.0
    %3201 = vmatprep.subr.mxu0 0.0
    %3202 = vmatpush1.msra.mxu0 0.0
    %3203 = vmatprep.subr.mxu0 0.0
    %3204 = vmatpush1.msra.mxu0 0.0
    %3205 = vmatprep.subr.mxu0 0.0
    %3206 = vmatpush1.msra.mxu0 0.0
    %3207 = vmatprep.subr.mxu0 0.0
    %3208 = vmatpush1.msra.mxu0 0.0
    %3209 = vmatprep.subr.mxu0 0.0
    %3210 = vmatpush1.msra.mxu0 0.0
    %3211 = vmatprep.subr.mxu0 0.0
    %3212 = vmatpush1.msra.mxu0 0.0
    %3213 = vmatprep.subr.mxu0 0.0
    %3214 = vmatpush1.msra.mxu0 0.0
    %3215 = vmatprep.subr.mxu0 0.0
    %3216 = vmatpush1.msra.mxu0 0.0
    %3217 = vmatprep.subr.mxu0 0.0
    %3218 = vmatpush1.msra.mxu0 0.0
    %3219 = vmatprep.subr.mxu0 0.0
    %3220 = vmatpush1.msra.mxu0 0.0
    %3221 = vmatprep.subr.mxu0 0.0
    %3222 = vmatpush1.msra.mxu0 0.0
    %3223 = vmatprep.subr.mxu0 0.0
    %3224 = vmatpush1.msra.mxu0 0.0
    %3225 = vmatprep.mubr.f32.mxu0 0.0
    %3226 = vmatmul.mubr.f32.gmra.mrb[0].mxu0 %v3159
    %v3227 = vpop.f32.mrb[0].mxu0
    %v3228 = vadd.f32 0.0, %v3227
    %v3229 = vpop.f32.mrb[0].mxu0
    %3230 = vdwg.mxu0
    %3231 = vrot.lane.b32.xlu0 %v2641, 56
    %v3232 = vpop.permute.xlu0 %3231
    %v3235 = vsel %vm530, %v3154, 0
    %3237 = vmatprep.subr.mxu0 0.0
    %3238 = vmatpush1.msra.mxu0 %v3232
    %3239 = vmatprep.subr.mxu0 0.0
    %3240 = vmatpush1.msra.mxu0 0.0
    %3241 = vmatprep.subr.mxu0 0.0
    %3242 = vmatpush1.msra.mxu0 0.0
    %3243 = vmatprep.subr.mxu0 0.0
    %3244 = vmatpush1.msra.mxu0 0.0
    %3245 = vmatprep.subr.mxu0 0.0
    %3246 = vmatpush1.msra.mxu0 0.0
    %3247 = vmatprep.subr.mxu0 0.0
    %3248 = vmatpush1.msra.mxu0 0.0
    %3249 = vmatprep.subr.mxu0 0.0
    %3250 = vmatpush1.msra.mxu0 0.0
    %3251 = vmatprep.subr.mxu0 0.0
    %3252 = vmatpush1.msra.mxu0 0.0
    %3253 = vmatprep.subr.mxu0 0.0
    %3254 = vmatpush1.msra.mxu0 0.0
    %3255 = vmatprep.subr.mxu0 0.0
    %3256 = vmatpush1.msra.mxu0 0.0
    %3257 = vmatprep.subr.mxu0 0.0
    %3258 = vmatpush1.msra.mxu0 0.0
    %3259 = vmatprep.subr.mxu0 0.0
    %3260 = vmatpush1.msra.mxu0 0.0
    %3261 = vmatprep.subr.mxu0 0.0
    %3262 = vmatpush1.msra.mxu0 0.0
    %3263 = vmatprep.subr.mxu0 0.0
    %3264 = vmatpush1.msra.mxu0 0.0
    %3265 = vmatprep.subr.mxu0 0.0
    %3266 = vmatpush1.msra.mxu0 0.0
    %3267 = vmatprep.subr.mxu0 0.0
    %3268 = vmatpush1.msra.mxu0 0.0
    %3269 = vmatprep.subr.mxu0 0.0
    %3270 = vmatpush1.msra.mxu0 0.0
    %3271 = vmatprep.subr.mxu0 0.0
    %3272 = vmatpush1.msra.mxu0 0.0
    %3273 = vmatprep.subr.mxu0 0.0
    %3274 = vmatpush1.msra.mxu0 0.0
    %3275 = vmatprep.subr.mxu0 0.0
    %3276 = vmatpush1.msra.mxu0 0.0
    %3277 = vmatprep.subr.mxu0 0.0
    %3278 = vmatpush1.msra.mxu0 0.0
    %3279 = vmatprep.subr.mxu0 0.0
    %3280 = vmatpush1.msra.mxu0 0.0
    %3281 = vmatprep.subr.mxu0 0.0
    %3282 = vmatpush1.msra.mxu0 0.0
    %3283 = vmatprep.subr.mxu0 0.0
    %3284 = vmatpush1.msra.mxu0 0.0
    %3285 = vmatprep.subr.mxu0 0.0
    %3286 = vmatpush1.msra.mxu0 0.0
    %3287 = vmatprep.subr.mxu0 0.0
    %3288 = vmatpush1.msra.mxu0 0.0
    %3289 = vmatprep.subr.mxu0 0.0
    %3290 = vmatpush1.msra.mxu0 0.0
    %3291 = vmatprep.subr.mxu0 0.0
    %3292 = vmatpush1.msra.mxu0 0.0
    %3293 = vmatprep.subr.mxu0 0.0
    %3294 = vmatpush1.msra.mxu0 0.0
    %3295 = vmatprep.subr.mxu0 0.0
    %3296 = vmatpush1.msra.mxu0 0.0
    %3297 = vmatprep.subr.mxu0 0.0
    %3298 = vmatpush1.msra.mxu0 0.0
    %3299 = vmatprep.subr.mxu0 0.0
    %3300 = vmatpush1.msra.mxu0 0.0
    %3301 = vmatprep.mubr.f32.mxu0 0.0
    %3302 = vmatmul.mubr.f32.gmra.mrb[0].mxu0 %v3235
    %v3303 = vpop.f32.mrb[0].mxu0
    %v3304 = vadd.f32 0.0, %v3303
    %v3305 = vpop.f32.mrb[0].mxu0
    %3306 = vdwg.mxu0
    %v3308 = vsel %vm530, %v3228, 0
    %v3311 = vsel %vm530, %v3304, 0
    %3313 = vmatprep.subr.mxu0 0.0
    %3314 = vmatpush1.msra.mxu0 %v2646
    %3315 = vmatprep.subr.mxu0 0.0
    %3316 = vmatpush1.msra.mxu0 0.0
    %3317 = vmatprep.subr.mxu0 0.0
    %3318 = vmatpush1.msra.mxu0 0.0
    %3319 = vmatprep.subr.mxu0 0.0
    %3320 = vmatpush1.msra.mxu0 0.0
    %3321 = vmatprep.subr.mxu0 0.0
    %3322 = vmatpush1.msra.mxu0 0.0
    %3323 = vmatprep.subr.mxu0 0.0
    %3324 = vmatpush1.msra.mxu0 0.0
    %3325 = vmatprep.subr.mxu0 0.0
    %3326 = vmatpush1.msra.mxu0 0.0
    %3327 = vmatprep.subr.mxu0 0.0
    %3328 = vmatpush1.msra.mxu0 0.0
    %3329 = vmatprep.subr.mxu0 0.0
    %3330 = vmatpush1.msra.mxu0 0.0
    %3331 = vmatprep.subr.mxu0 0.0
    %3332 = vmatpush1.msra.mxu0 0.0
    %3333 = vmatprep.subr.mxu0 0.0
    %3334 = vmatpush1.msra.mxu0 0.0
    %3335 = vmatprep.subr.mxu0 0.0
    %3336 = vmatpush1.msra.mxu0 0.0
    %3337 = vmatprep.subr.mxu0 0.0
    %3338 = vmatpush1.msra.mxu0 0.0
    %3339 = vmatprep.subr.mxu0 0.0
    %3340 = vmatpush1.msra.mxu0 0.0
    %3341 = vmatprep.subr.mxu0 0.0
    %3342 = vmatpush1.msra.mxu0 0.0
    %3343 = vmatprep.subr.mxu0 0.0
    %3344 = vmatpush1.msra.mxu0 0.0
    %3345 = vmatprep.subr.mxu0 0.0
    %3346 = vmatpush1.msra.mxu0 0.0
    %3347 = vmatprep.subr.mxu0 0.0
    %3348 = vmatpush1.msra.mxu0 0.0
    %3349 = vmatprep.subr.mxu0 0.0
    %3350 = vmatpush1.msra.mxu0 0.0
    %3351 = vmatprep.subr.mxu0 0.0
    %3352 = vmatpush1.msra.mxu0 0.0
    %3353 = vmatprep.subr.mxu0 0.0
    %3354 = vmatpush1.msra.mxu0 0.0
    %3355 = vmatprep.subr.mxu0 0.0
    %3356 = vmatpush1.msra.mxu0 0.0
    %3357 = vmatprep.subr.mxu0 0.0
    %3358 = vmatpush1.msra.mxu0 0.0
    %3359 = vmatprep.subr.mxu0 0.0
    %3360 = vmatpush1.msra.mxu0 0.0
    %3361 = vmatprep.subr.mxu0 0.0
    %3362 = vmatpush1.msra.mxu0 0.0
    %3363 = vmatprep.subr.mxu0 0.0
    %3364 = vmatpush1.msra.mxu0 0.0
    %3365 = vmatprep.subr.mxu0 0.0
    %3366 = vmatpush1.msra.mxu0 0.0
    %3367 = vmatprep.subr.mxu0 0.0
    %3368 = vmatpush1.msra.mxu0 0.0
    %3369 = vmatprep.subr.mxu0 0.0
    %3370 = vmatpush1.msra.mxu0 0.0
    %3371 = vmatprep.subr.mxu0 0.0
    %3372 = vmatpush1.msra.mxu0 0.0
    %3373 = vmatprep.subr.mxu0 0.0
    %3374 = vmatpush1.msra.mxu0 0.0
    %3375 = vmatprep.subr.mxu0 0.0
    %3376 = vmatpush1.msra.mxu0 0.0
    %3377 = vmatprep.mubr.f32.mxu0 0.0
    %3378 = vmatmul.mubr.f32.gmra.mrb[0].mxu0 %v3308
    %v3379 = vpop.f32.mrb[0].mxu0
    %v3380 = vadd.f32 0.0, %v3379
    %v3381 = vpop.f32.mrb[0].mxu0
    %3382 = vmatprep.mubr.f32.mxu0 0.0
    %3383 = vmatmul.mubr.f32.gmra.mrb[0].mxu0 %v3311
    %v3384 = vpop.f32.mrb[0].mxu0
    %v3385 = vadd.f32 0.0, %v3384
    %v3386 = vpop.f32.mrb[0].mxu0
    %3387 = vdwg.mxu0
    %v3389 = vsel %vm530, %v2898, 0
    %v3392 = vsel %vm530, %v2974, 0
    %3394 = vmatprep.subr.mxu0 0.0
    %3395 = vmatpush1.msra.mxu0 %v2645
    %3396 = vmatprep.subr.mxu0 0.0
    %3397 = vmatpush1.msra.mxu0 0.0
    %3398 = vmatprep.subr.mxu0 0.0
    %3399 = vmatpush1.msra.mxu0 0.0
    %3400 = vmatprep.subr.mxu0 0.0
    %3401 = vmatpush1.msra.mxu0 0.0
    %3402 = vmatprep.subr.mxu0 0.0
    %3403 = vmatpush1.msra.mxu0 0.0
    %3404 = vmatprep.subr.mxu0 0.0
    %3405 = vmatpush1.msra.mxu0 0.0
    %3406 = vmatprep.subr.mxu0 0.0
    %3407 = vmatpush1.msra.mxu0 0.0
    %3408 = vmatprep.subr.mxu0 0.0
    %3409 = vmatpush1.msra.mxu0 0.0
    %3410 = vmatprep.subr.mxu0 0.0
    %3411 = vmatpush1.msra.mxu0 0.0
    %3412 = vmatprep.subr.mxu0 0.0
    %3413 = vmatpush1.msra.mxu0 0.0
    %3414 = vmatprep.subr.mxu0 0.0
    %3415 = vmatpush1.msra.mxu0 0.0
    %3416 = vmatprep.subr.mxu0 0.0
    %3417 = vmatpush1.msra.mxu0 0.0
    %3418 = vmatprep.subr.mxu0 0.0
    %3419 = vmatpush1.msra.mxu0 0.0
    %3420 = vmatprep.subr.mxu0 0.0
    %3421 = vmatpush1.msra.mxu0 0.0
    %3422 = vmatprep.subr.mxu0 0.0
    %3423 = vmatpush1.msra.mxu0 0.0
    %3424 = vmatprep.subr.mxu0 0.0
    %3425 = vmatpush1.msra.mxu0 0.0
    %3426 = vmatprep.subr.mxu0 0.0
    %3427 = vmatpush1.msra.mxu0 0.0
    %3428 = vmatprep.subr.mxu0 0.0
    %3429 = vmatpush1.msra.mxu0 0.0
    %3430 = vmatprep.subr.mxu0 0.0
    %3431 = vmatpush1.msra.mxu0 0.0
    %3432 = vmatprep.subr.mxu0 0.0
    %3433 = vmatpush1.msra.mxu0 0.0
    %3434 = vmatprep.subr.mxu0 0.0
    %3435 = vmatpush1.msra.mxu0 0.0
    %3436 = vmatprep.subr.mxu0 0.0
    %3437 = vmatpush1.msra.mxu0 0.0
    %3438 = vmatprep.subr.mxu0 0.0
    %3439 = vmatpush1.msra.mxu0 0.0
    %3440 = vmatprep.subr.mxu0 0.0
    %3441 = vmatpush1.msra.mxu0 0.0
    %3442 = vmatprep.subr.mxu0 0.0
    %3443 = vmatpush1.msra.mxu0 0.0
    %3444 = vmatprep.subr.mxu0 0.0
    %3445 = vmatpush1.msra.mxu0 0.0
    %3446 = vmatprep.subr.mxu0 0.0
    %3447 = vmatpush1.msra.mxu0 0.0
    %3448 = vmatprep.subr.mxu0 0.0
    %3449 = vmatpush1.msra.mxu0 0.0
    %3450 = vmatprep.subr.mxu0 0.0
    %3451 = vmatpush1.msra.mxu0 0.0
    %3452 = vmatprep.subr.mxu0 0.0
    %3453 = vmatpush1.msra.mxu0 0.0
    %3454 = vmatprep.subr.mxu0 0.0
    %3455 = vmatpush1.msra.mxu0 0.0
    %3456 = vmatprep.subr.mxu0 0.0
    %3457 = vmatpush1.msra.mxu0 0.0
    %3458 = vmatprep.mubr.f32.mxu0 0.0
    %3459 = vmatmul.mubr.f32.gmra.mrb[0].mxu0 %v3389
    %v3460 = vpop.f32.mrb[0].mxu0
    %v3461 = vadd.f32 %v3380, %v3460
    %v3462 = vpop.f32.mrb[0].mxu0
    %3463 = vmatprep.mubr.f32.mxu0 0.0
    %3464 = vmatmul.mubr.f32.gmra.mrb[0].mxu0 %v3392
    %v3465 = vpop.f32.mrb[0].mxu0
    %v3466 = vadd.f32 %v3385, %v3465
    %v3467 = vpop.f32.mrb[0].mxu0
    %3468 = vdwg.mxu0
    %3469 = vrot.lane.b32.xlu0 %v2636, 112
    %v3470 = vpop.permute.xlu0 %3469
    %3471 = vrot.lane.b32.xlu0 %v2636, 80
    %v3472 = vpop.permute.xlu0 %3471
    %v3473 = vsel %vm530, %v3470, 0
    %v3475 = vsel %vm530, %v3472, 0
    %3477 = vmatprep.subr.mxu0 0.0
    %3478 = vmatpush1.xpose.msra.mxu0 %v3475
    %3479 = vmatprep.subr.mxu0 0.0
    %3480 = vmatpush1.xpose.msra.mxu0 0.0
    %3481 = vmatprep.subr.mxu0 0.0
    %3482 = vmatpush1.xpose.msra.mxu0 0.0
    %3483 = vmatprep.subr.mxu0 0.0
    %3484 = vmatpush1.xpose.msra.mxu0 0.0
    %3485 = vmatprep.subr.mxu0 0.0
    %3486 = vmatpush1.xpose.msra.mxu0 0.0
    %3487 = vmatprep.subr.mxu0 0.0
    %3488 = vmatpush1.xpose.msra.mxu0 0.0
    %3489 = vmatprep.subr.mxu0 0.0
    %3490 = vmatpush1.xpose.msra.mxu0 0.0
    %3491 = vmatprep.subr.mxu0 0.0
    %3492 = vmatpush1.xpose.msra.mxu0 0.0
    %3493 = vmatprep.subr.mxu0 0.0
    %3494 = vmatpush1.xpose.msra.mxu0 0.0
    %3495 = vmatprep.subr.mxu0 0.0
    %3496 = vmatpush1.xpose.msra.mxu0 0.0
    %3497 = vmatprep.subr.mxu0 0.0
    %3498 = vmatpush1.xpose.msra.mxu0 0.0
    %3499 = vmatprep.subr.mxu0 0.0
    %3500 = vmatpush1.xpose.msra.mxu0 0.0
    %3501 = vmatprep.subr.mxu0 0.0
    %3502 = vmatpush1.xpose.msra.mxu0 0.0
    %3503 = vmatprep.subr.mxu0 0.0
    %3504 = vmatpush1.xpose.msra.mxu0 0.0
    %3505 = vmatprep.subr.mxu0 0.0
    %3506 = vmatpush1.xpose.msra.mxu0 0.0
    %3507 = vmatprep.subr.mxu0 0.0
    %3508 = vmatpush1.xpose.msra.mxu0 0.0
    %3509 = vmatprep.subr.mxu0 0.0
    %3510 = vmatpush1.xpose.msra.mxu0 0.0
    %3511 = vmatprep.subr.mxu0 0.0
    %3512 = vmatpush1.xpose.msra.mxu0 0.0
    %3513 = vmatprep.subr.mxu0 0.0
    %3514 = vmatpush1.xpose.msra.mxu0 0.0
    %3515 = vmatprep.subr.mxu0 0.0
    %3516 = vmatpush1.xpose.msra.mxu0 0.0
    %3517 = vmatprep.subr.mxu0 0.0
    %3518 = vmatpush1.xpose.msra.mxu0 0.0
    %3519 = vmatprep.subr.mxu0 0.0
    %3520 = vmatpush1.xpose.msra.mxu0 0.0
    %3521 = vmatprep.subr.mxu0 0.0
    %3522 = vmatpush1.xpose.msra.mxu0 0.0
    %3523 = vmatprep.subr.mxu0 0.0
    %3524 = vmatpush1.xpose.msra.mxu0 0.0
    %3525 = vmatprep.subr.mxu0 0.0
    %3526 = vmatpush1.xpose.msra.mxu0 0.0
    %3527 = vmatprep.subr.mxu0 0.0
    %3528 = vmatpush1.xpose.msra.mxu0 0.0
    %3529 = vmatprep.subr.mxu0 0.0
    %3530 = vmatpush1.xpose.msra.mxu0 0.0
    %3531 = vmatprep.subr.mxu0 0.0
    %3532 = vmatpush1.xpose.msra.mxu0 0.0
    %3533 = vmatprep.subr.mxu0 0.0
    %3534 = vmatpush1.xpose.msra.mxu0 0.0
    %3535 = vmatprep.subr.mxu0 0.0
    %3536 = vmatpush1.xpose.msra.mxu0 0.0
    %3537 = vmatprep.subr.mxu0 0.0
    %3538 = vmatpush1.xpose.msra.mxu0 0.0
    %3539 = vmatprep.subr.mxu0 0.0
    %3540 = vmatpush1.xpose.msra.mxu0 0.0
    %3541 = vmatprep.mubr.f32.mxu0 0.0
    %3542 = vmatmul.mubr.f32.gmra.mrb[0].mxu0 %v3473
    %v3543 = vpop.f32.mrb[0].mxu0
    %v3544 = vadd.f32 0.0, %v3543
    %v3545 = vpop.f32.mrb[0].mxu0
    %3546 = vdwg.mxu0
    %3547 = vrot.lane.b32.xlu0 %v2641, 112
    %v3548 = vpop.permute.xlu0 %3547
    %3549 = vrot.lane.b32.xlu0 %v2641, 80
    %v3550 = vpop.permute.xlu0 %3549
    %v3551 = vsel %vm530, %v3548, 0
    %v3553 = vsel %vm530, %v3550, 0
    %3555 = vmatprep.subr.mxu0 0.0
    %3556 = vmatpush1.xpose.msra.mxu0 %v3553
    %3557 = vmatprep.subr.mxu0 0.0
    %3558 = vmatpush1.xpose.msra.mxu0 0.0
    %3559 = vmatprep.subr.mxu0 0.0
    %3560 = vmatpush1.xpose.msra.mxu0 0.0
    %3561 = vmatprep.subr.mxu0 0.0
    %3562 = vmatpush1.xpose.msra.mxu0 0.0
    %3563 = vmatprep.subr.mxu0 0.0
    %3564 = vmatpush1.xpose.msra.mxu0 0.0
    %3565 = vmatprep.subr.mxu0 0.0
    %3566 = vmatpush1.xpose.msra.mxu0 0.0
    %3567 = vmatprep.subr.mxu0 0.0
    %3568 = vmatpush1.xpose.msra.mxu0 0.0
    %3569 = vmatprep.subr.mxu0 0.0
    %3570 = vmatpush1.xpose.msra.mxu0 0.0
    %3571 = vmatprep.subr.mxu0 0.0
    %3572 = vmatpush1.xpose.msra.mxu0 0.0
    %3573 = vmatprep.subr.mxu0 0.0
    %3574 = vmatpush1.xpose.msra.mxu0 0.0
    %3575 = vmatprep.subr.mxu0 0.0
    %3576 = vmatpush1.xpose.msra.mxu0 0.0
    %3577 = vmatprep.subr.mxu0 0.0
    %3578 = vmatpush1.xpose.msra.mxu0 0.0
    %3579 = vmatprep.subr.mxu0 0.0
    %3580 = vmatpush1.xpose.msra.mxu0 0.0
    %3581 = vmatprep.subr.mxu0 0.0
    %3582 = vmatpush1.xpose.msra.mxu0 0.0
    %3583 = vmatprep.subr.mxu0 0.0
    %3584 = vmatpush1.xpose.msra.mxu0 0.0
    %3585 = vmatprep.subr.mxu0 0.0
    %3586 = vmatpush1.xpose.msra.mxu0 0.0
    %3587 = vmatprep.subr.mxu0 0.0
    %3588 = vmatpush1.xpose.msra.mxu0 0.0
    %3589 = vmatprep.subr.mxu0 0.0
    %3590 = vmatpush1.xpose.msra.mxu0 0.0
    %3591 = vmatprep.subr.mxu0 0.0
    %3592 = vmatpush1.xpose.msra.mxu0 0.0
    %3593 = vmatprep.subr.mxu0 0.0
    %3594 = vmatpush1.xpose.msra.mxu0 0.0
    %3595 = vmatprep.subr.mxu0 0.0
    %3596 = vmatpush1.xpose.msra.mxu0 0.0
    %3597 = vmatprep.subr.mxu0 0.0
    %3598 = vmatpush1.xpose.msra.mxu0 0.0
    %3599 = vmatprep.subr.mxu0 0.0
    %3600 = vmatpush1.xpose.msra.mxu0 0.0
    %3601 = vmatprep.subr.mxu0 0.0
    %3602 = vmatpush1.xpose.msra.mxu0 0.0
    %3603 = vmatprep.subr.mxu0 0.0
    %3604 = vmatpush1.xpose.msra.mxu0 0.0
    %3605 = vmatprep.subr.mxu0 0.0
    %3606 = vmatpush1.xpose.msra.mxu0 0.0
    %3607 = vmatprep.subr.mxu0 0.0
    %3608 = vmatpush1.xpose.msra.mxu0 0.0
    %3609 = vmatprep.subr.mxu0 0.0
    %3610 = vmatpush1.xpose.msra.mxu0 0.0
    %3611 = vmatprep.subr.mxu0 0.0
    %3612 = vmatpush1.xpose.msra.mxu0 0.0
    %3613 = vmatprep.subr.mxu0 0.0
    %3614 = vmatpush1.xpose.msra.mxu0 0.0
    %3615 = vmatprep.subr.mxu0 0.0
    %3616 = vmatpush1.xpose.msra.mxu0 0.0
    %3617 = vmatprep.subr.mxu0 0.0
    %3618 = vmatpush1.xpose.msra.mxu0 0.0
    %3619 = vmatprep.mubr.f32.mxu0 0.0
    %3620 = vmatmul.mubr.f32.gmra.mrb[0].mxu0 %v3551
    %v3621 = vpop.f32.mrb[0].mxu0
    %v3622 = vadd.f32 0.0, %v3621
    %v3623 = vpop.f32.mrb[0].mxu0
    %3624 = vdwg.mxu0
    %v3625 = vsel %vm530, %v3544, -inf
    %3626 = vmax.xlane.f32.xlu0 %v3625
    %v3627 = vpop.xlane.xlu0 %3626
    %v3628 = vsel %vm530, %v3622, -inf
    %3629 = vmax.xlane.f32.xlu0 %v3628
    %v3630 = vpop.xlane.xlu0 %3629
    %v3631 = vsub.f32 %v3544, %v3627
    %v3632 = vsub.f32 %v3622, %v3630
    %v3633 = vmul.f32 %v3631, 1.442695
    %v3634 = vpow.pop %v3633
    %v3635 = vmul.f32 %v3632, 1.442695
    %v3636 = vpow.pop %v3635
    %v3637 = vsel %vm530, %v3634, 0.0
    %3638 = vadd.xlane.f32.xlu0 %v3637
    %v3639 = vpop.xlane.xlu0 %3638
    %v3640 = vsel %vm530, %v3636, 0.0
    %3641 = vadd.xlane.f32.xlu0 %v3640
    %v3642 = vpop.xlane.xlu0 %3641
    %v3643 = vrcp.pop %v3639
    %v3644 = vrcp.pop %v3642
    %v3645 = vmul.f32 %v3634, %v3643
    %v3646 = vmul.f32 %v3636, %v3644
    %3647 = vrot.lane.b32.xlu0 %v2636, 48
    %v3648 = vpop.permute.xlu0 %3647
    %v3651 = vsel %vm530, %v3645, 0
    %3653 = vmatprep.subr.mxu0 0.0
    %3654 = vmatpush1.msra.mxu0 %v3648
    %3655 = vmatprep.subr.mxu0 0.0
    %3656 = vmatpush1.msra.mxu0 0.0
    %3657 = vmatprep.subr.mxu0 0.0
    %3658 = vmatpush1.msra.mxu0 0.0
    %3659 = vmatprep.subr.mxu0 0.0
    %3660 = vmatpush1.msra.mxu0 0.0
    %3661 = vmatprep.subr.mxu0 0.0
    %3662 = vmatpush1.msra.mxu0 0.0
    %3663 = vmatprep.subr.mxu0 0.0
    %3664 = vmatpush1.msra.mxu0 0.0
    %3665 = vmatprep.subr.mxu0 0.0
    %3666 = vmatpush1.msra.mxu0 0.0
    %3667 = vmatprep.subr.mxu0 0.0
    %3668 = vmatpush1.msra.mxu0 0.0
    %3669 = vmatprep.subr.mxu0 0.0
    %3670 = vmatpush1.msra.mxu0 0.0
    %3671 = vmatprep.subr.mxu0 0.0
    %3672 = vmatpush1.msra.mxu0 0.0
    %3673 = vmatprep.subr.mxu0 0.0
    %3674 = vmatpush1.msra.mxu0 0.0
    %3675 = vmatprep.subr.mxu0 0.0
    %3676 = vmatpush1.msra.mxu0 0.0
    %3677 = vmatprep.subr.mxu0 0.0
    %3678 = vmatpush1.msra.mxu0 0.0
    %3679 = vmatprep.subr.mxu0 0.0
    %3680 = vmatpush1.msra.mxu0 0.0
    %3681 = vmatprep.subr.mxu0 0.0
    %3682 = vmatpush1.msra.mxu0 0.0
    %3683 = vmatprep.subr.mxu0 0.0
    %3684 = vmatpush1.msra.mxu0 0.0
    %3685 = vmatprep.subr.mxu0 0.0
    %3686 = vmatpush1.msra.mxu0 0.0
    %3687 = vmatprep.subr.mxu0 0.0
    %3688 = vmatpush1.msra.mxu0 0.0
    %3689 = vmatprep.subr.mxu0 0.0
    %3690 = vmatpush1.msra.mxu0 0.0
    %3691 = vmatprep.subr.mxu0 0.0
    %3692 = vmatpush1.msra.mxu0 0.0
    %3693 = vmatprep.subr.mxu0 0.0
    %3694 = vmatpush1.msra.mxu0 0.0
    %3695 = vmatprep.subr.mxu0 0.0
    %3696 = vmatpush1.msra.mxu0 0.0
    %3697 = vmatprep.subr.mxu0 0.0
    %3698 = vmatpush1.msra.mxu0 0.0
    %3699 = vmatprep.subr.mxu0 0.0
    %3700 = vmatpush1.msra.mxu0 0.0
    %3701 = vmatprep.subr.mxu0 0.0
    %3702 = vmatpush1.msra.mxu0 0.0
    %3703 = vmatprep.subr.mxu0 0.0
    %3704 = vmatpush1.msra.mxu0 0.0
    %3705 = vmatprep.subr.mxu0 0.0
    %3706 = vmatpush1.msra.mxu0 0.0
    %3707 = vmatprep.subr.mxu0 0.0
    %3708 = vmatpush1.msra.mxu0 0.0
    %3709 = vmatprep.subr.mxu0 0.0
    %3710 = vmatpush1.msra.mxu0 0.0
    %3711 = vmatprep.subr.mxu0 0.0
    %3712 = vmatpush1.msra.mxu0 0.0
    %3713 = vmatprep.subr.mxu0 0.0
    %3714 = vmatpush1.msra.mxu0 0.0
    %3715 = vmatprep.subr.mxu0 0.0
    %3716 = vmatpush1.msra.mxu0 0.0
    %3717 = vmatprep.mubr.f32.mxu0 0.0
    %3718 = vmatmul.mubr.f32.gmra.mrb[0].mxu0 %v3651
    %v3719 = vpop.f32.mrb[0].mxu0
    %v3720 = vadd.f32 0.0, %v3719
    %v3721 = vpop.f32.mrb[0].mxu0
    %3722 = vdwg.mxu0
    %3723 = vrot.lane.b32.xlu0 %v2641, 48
    %v3724 = vpop.permute.xlu0 %3723
    %v3727 = vsel %vm530, %v3646, 0
    %3729 = vmatprep.subr.mxu0 0.0
    %3730 = vmatpush1.msra.mxu0 %v3724
    %3731 = vmatprep.subr.mxu0 0.0
    %3732 = vmatpush1.msra.mxu0 0.0
    %3733 = vmatprep.subr.mxu0 0.0
    %3734 = vmatpush1.msra.mxu0 0.0
    %3735 = vmatprep.subr.mxu0 0.0
    %3736 = vmatpush1.msra.mxu0 0.0
    %3737 = vmatprep.subr.mxu0 0.0
    %3738 = vmatpush1.msra.mxu0 0.0
    %3739 = vmatprep.subr.mxu0 0.0
    %3740 = vmatpush1.msra.mxu0 0.0
    %3741 = vmatprep.subr.mxu0 0.0
    %3742 = vmatpush1.msra.mxu0 0.0
    %3743 = vmatprep.subr.mxu0 0.0
    %3744 = vmatpush1.msra.mxu0 0.0
    %3745 = vmatprep.subr.mxu0 0.0
    %3746 = vmatpush1.msra.mxu0 0.0
    %3747 = vmatprep.subr.mxu0 0.0
    %3748 = vmatpush1.msra.mxu0 0.0
    %3749 = vmatprep.subr.mxu0 0.0
    %3750 = vmatpush1.msra.mxu0 0.0
    %3751 = vmatprep.subr.mxu0 0.0
    %3752 = vmatpush1.msra.mxu0 0.0
    %3753 = vmatprep.subr.mxu0 0.0
    %3754 = vmatpush1.msra.mxu0 0.0
    %3755 = vmatprep.subr.mxu0 0.0
    %3756 = vmatpush1.msra.mxu0 0.0
    %3757 = vmatprep.subr.mxu0 0.0
    %3758 = vmatpush1.msra.mxu0 0.0
    %3759 = vmatprep.subr.mxu0 0.0
    %3760 = vmatpush1.msra.mxu0 0.0
    %3761 = vmatprep.subr.mxu0 0.0
    %3762 = vmatpush1.msra.mxu0 0.0
    %3763 = vmatprep.subr.mxu0 0.0
    %3764 = vmatpush1.msra.mxu0 0.0
    %3765 = vmatprep.subr.mxu0 0.0
    %3766 = vmatpush1.msra.mxu0 0.0
    %3767 = vmatprep.subr.mxu0 0.0
    %3768 = vmatpush1.msra.mxu0 0.0
    %3769 = vmatprep.subr.mxu0 0.0
    %3770 = vmatpush1.msra.mxu0 0.0
    %3771 = vmatprep.subr.mxu0 0.0
    %3772 = vmatpush1.msra.mxu0 0.0
    %3773 = vmatprep.subr.mxu0 0.0
    %3774 = vmatpush1.msra.mxu0 0.0
    %3775 = vmatprep.subr.mxu0 0.0
    %3776 = vmatpush1.msra.mxu0 0.0
    %3777 = vmatprep.subr.mxu0 0.0
    %3778 = vmatpush1.msra.mxu0 0.0
    %3779 = vmatprep.subr.mxu0 0.0
    %3780 = vmatpush1.msra.mxu0 0.0
    %3781 = vmatprep.subr.mxu0 0.0
    %3782 = vmatpush1.msra.mxu0 0.0
    %3783 = vmatprep.subr.mxu0 0.0
    %3784 = vmatpush1.msra.mxu0 0.0
    %3785 = vmatprep.subr.mxu0 0.0
    %3786 = vmatpush1.msra.mxu0 0.0
    %3787 = vmatprep.subr.mxu0 0.0
    %3788 = vmatpush1.msra.mxu0 0.0
    %3789 = vmatprep.subr.mxu0 0.0
    %3790 = vmatpush1.msra.mxu0 0.0
    %3791 = vmatprep.subr.mxu0 0.0
    %3792 = vmatpush1.msra.mxu0 0.0
    %3793 = vmatprep.mubr.f32.mxu0 0.0
    %3794 = vmatmul.mubr.f32.gmra.mrb[0].mxu0 %v3727
    %v3795 = vpop.f32.mrb[0].mxu0
    %v3796 = vadd.f32 0.0, %v3795
    %v3797 = vpop.f32.mrb[0].mxu0
    %3798 = vdwg.mxu0
    %v3800 = vsel %vm530, %v3720, 0
    %v3803 = vsel %vm530, %v3796, 0
    %3805 = vmatprep.subr.mxu0 0.0
    %3806 = vmatpush1.msra.mxu0 %v2647
    %3807 = vmatprep.subr.mxu0 0.0
    %3808 = vmatpush1.msra.mxu0 0.0
    %3809 = vmatprep.subr.mxu0 0.0
    %3810 = vmatpush1.msra.mxu0 0.0
    %3811 = vmatprep.subr.mxu0 0.0
    %3812 = vmatpush1.msra.mxu0 0.0
    %3813 = vmatprep.subr.mxu0 0.0
    %3814 = vmatpush1.msra.mxu0 0.0
    %3815 = vmatprep.subr.mxu0 0.0
    %3816 = vmatpush1.msra.mxu0 0.0
    %3817 = vmatprep.subr.mxu0 0.0
    %3818 = vmatpush1.msra.mxu0 0.0
    %3819 = vmatprep.subr.mxu0 0.0
    %3820 = vmatpush1.msra.mxu0 0.0
    %3821 = vmatprep.subr.mxu0 0.0
    %3822 = vmatpush1.msra.mxu0 0.0
    %3823 = vmatprep.subr.mxu0 0.0
    %3824 = vmatpush1.msra.mxu0 0.0
    %3825 = vmatprep.subr.mxu0 0.0
    %3826 = vmatpush1.msra.mxu0 0.0
    %3827 = vmatprep.subr.mxu0 0.0
    %3828 = vmatpush1.msra.mxu0 0.0
    %3829 = vmatprep.subr.mxu0 0.0
    %3830 = vmatpush1.msra.mxu0 0.0
    %3831 = vmatprep.subr.mxu0 0.0
    %3832 = vmatpush1.msra.mxu0 0.0
    %3833 = vmatprep.subr.mxu0 0.0
    %3834 = vmatpush1.msra.mxu0 0.0
    %3835 = vmatprep.subr.mxu0 0.0
    %3836 = vmatpush1.msra.mxu0 0.0
    %3837 = vmatprep.subr.mxu0 0.0
    %3838 = vmatpush1.msra.mxu0 0.0
    %3839 = vmatprep.subr.mxu0 0.0
    %3840 = vmatpush1.msra.mxu0 0.0
    %3841 = vmatprep.subr.mxu0 0.0
    %3842 = vmatpush1.msra.mxu0 0.0
    %3843 = vmatprep.subr.mxu0 0.0
    %3844 = vmatpush1.msra.mxu0 0.0
    %3845 = vmatprep.subr.mxu0 0.0
    %3846 = vmatpush1.msra.mxu0 0.0
    %3847 = vmatprep.subr.mxu0 0.0
    %3848 = vmatpush1.msra.mxu0 0.0
    %3849 = vmatprep.subr.mxu0 0.0
    %3850 = vmatpush1.msra.mxu0 0.0
    %3851 = vmatprep.subr.mxu0 0.0
    %3852 = vmatpush1.msra.mxu0 0.0
    %3853 = vmatprep.subr.mxu0 0.0
    %3854 = vmatpush1.msra.mxu0 0.0
    %3855 = vmatprep.subr.mxu0 0.0
    %3856 = vmatpush1.msra.mxu0 0.0
    %3857 = vmatprep.subr.mxu0 0.0
    %3858 = vmatpush1.msra.mxu0 0.0
    %3859 = vmatprep.subr.mxu0 0.0
    %3860 = vmatpush1.msra.mxu0 0.0
    %3861 = vmatprep.subr.mxu0 0.0
    %3862 = vmatpush1.msra.mxu0 0.0
    %3863 = vmatprep.subr.mxu0 0.0
    %3864 = vmatpush1.msra.mxu0 0.0
    %3865 = vmatprep.subr.mxu0 0.0
    %3866 = vmatpush1.msra.mxu0 0.0
    %3867 = vmatprep.subr.mxu0 0.0
    %3868 = vmatpush1.msra.mxu0 0.0
    %3869 = vmatprep.mubr.f32.mxu0 0.0
    %3870 = vmatmul.mubr.f32.gmra.mrb[0].mxu0 %v3800
    %v3871 = vpop.f32.mrb[0].mxu0
    %v3872 = vadd.f32 0.0, %v3871
    %v3873 = vpop.f32.mrb[0].mxu0
    %3874 = vmatprep.mubr.f32.mxu0 0.0
    %3875 = vmatmul.mubr.f32.gmra.mrb[0].mxu0 %v3803
    %v3876 = vpop.f32.mrb[0].mxu0
    %v3877 = vadd.f32 0.0, %v3876
    %v3878 = vpop.f32.mrb[0].mxu0
    %3879 = vdwg.mxu0
    %v3880 = vadd.f32 %v3461, %v3872
    %v3881 = vadd.f32 %v3466, %v3877
    %3882 = vrot.lane.b32.xlu0 %v2636, 104
    %v3883 = vpop.permute.xlu0 %3882
    %3884 = vrot.lane.b32.xlu0 %v2636, 72
    %v3885 = vpop.permute.xlu0 %3884
    %v3886 = vsel %vm530, %v3883, 0
    %v3888 = vsel %vm530, %v3885, 0
    %3890 = vmatprep.subr.mxu0 0.0
    %3891 = vmatpush1.xpose.msra.mxu0 %v3888
    %3892 = vmatprep.subr.mxu0 0.0
    %3893 = vmatpush1.xpose.msra.mxu0 0.0
    %3894 = vmatprep.subr.mxu0 0.0
    %3895 = vmatpush1.xpose.msra.mxu0 0.0
    %3896 = vmatprep.subr.mxu0 0.0
    %3897 = vmatpush1.xpose.msra.mxu0 0.0
    %3898 = vmatprep.subr.mxu0 0.0
    %3899 = vmatpush1.xpose.msra.mxu0 0.0
    %3900 = vmatprep.subr.mxu0 0.0
    %3901 = vmatpush1.xpose.msra.mxu0 0.0
    %3902 = vmatprep.subr.mxu0 0.0
    %3903 = vmatpush1.xpose.msra.mxu0 0.0
    %3904 = vmatprep.subr.mxu0 0.0
    %3905 = vmatpush1.xpose.msra.mxu0 0.0
    %3906 = vmatprep.subr.mxu0 0.0
    %3907 = vmatpush1.xpose.msra.mxu0 0.0
    %3908 = vmatprep.subr.mxu0 0.0
    %3909 = vmatpush1.xpose.msra.mxu0 0.0
    %3910 = vmatprep.subr.mxu0 0.0
    %3911 = vmatpush1.xpose.msra.mxu0 0.0
    %3912 = vmatprep.subr.mxu0 0.0
    %3913 = vmatpush1.xpose.msra.mxu0 0.0
    %3914 = vmatprep.subr.mxu0 0.0
    %3915 = vmatpush1.xpose.msra.mxu0 0.0
    %3916 = vmatprep.subr.mxu0 0.0
    %3917 = vmatpush1.xpose.msra.mxu0 0.0
    %3918 = vmatprep.subr.mxu0 0.0
    %3919 = vmatpush1.xpose.msra.mxu0 0.0
    %3920 = vmatprep.subr.mxu0 0.0
    %3921 = vmatpush1.xpose.msra.mxu0 0.0
    %3922 = vmatprep.subr.mxu0 0.0
    %3923 = vmatpush1.xpose.msra.mxu0 0.0
    %3924 = vmatprep.subr.mxu0 0.0
    %3925 = vmatpush1.xpose.msra.mxu0 0.0
    %3926 = vmatprep.subr.mxu0 0.0
    %3927 = vmatpush1.xpose.msra.mxu0 0.0
    %3928 = vmatprep.subr.mxu0 0.0
    %3929 = vmatpush1.xpose.msra.mxu0 0.0
    %3930 = vmatprep.subr.mxu0 0.0
    %3931 = vmatpush1.xpose.msra.mxu0 0.0
    %3932 = vmatprep.subr.mxu0 0.0
    %3933 = vmatpush1.xpose.msra.mxu0 0.0
    %3934 = vmatprep.subr.mxu0 0.0
    %3935 = vmatpush1.xpose.msra.mxu0 0.0
    %3936 = vmatprep.subr.mxu0 0.0
    %3937 = vmatpush1.xpose.msra.mxu0 0.0
    %3938 = vmatprep.subr.mxu0 0.0
    %3939 = vmatpush1.xpose.msra.mxu0 0.0
    %3940 = vmatprep.subr.mxu0 0.0
    %3941 = vmatpush1.xpose.msra.mxu0 0.0
    %3942 = vmatprep.subr.mxu0 0.0
    %3943 = vmatpush1.xpose.msra.mxu0 0.0
    %3944 = vmatprep.subr.mxu0 0.0
    %3945 = vmatpush1.xpose.msra.mxu0 0.0
    %3946 = vmatprep.subr.mxu0 0.0
    %3947 = vmatpush1.xpose.msra.mxu0 0.0
    %3948 = vmatprep.subr.mxu0 0.0
    %3949 = vmatpush1.xpose.msra.mxu0 0.0
    %3950 = vmatprep.subr.mxu0 0.0
    %3951 = vmatpush1.xpose.msra.mxu0 0.0
    %3952 = vmatprep.subr.mxu0 0.0
    %3953 = vmatpush1.xpose.msra.mxu0 0.0
    %3954 = vmatprep.mubr.f32.mxu0 0.0
    %3955 = vmatmul.mubr.f32.gmra.mrb[0].mxu0 %v3886
    %v3956 = vpop.f32.mrb[0].mxu0
    %v3957 = vadd.f32 0.0, %v3956
    %v3958 = vpop.f32.mrb[0].mxu0
    %3959 = vdwg.mxu0
    %3960 = vrot.lane.b32.xlu0 %v2641, 104
    %v3961 = vpop.permute.xlu0 %3960
    %3962 = vrot.lane.b32.xlu0 %v2641, 72
    %v3963 = vpop.permute.xlu0 %3962
    %v3964 = vsel %vm530, %v3961, 0
    %v3966 = vsel %vm530, %v3963, 0
    %3968 = vmatprep.subr.mxu0 0.0
    %3969 = vmatpush1.xpose.msra.mxu0 %v3966
    %3970 = vmatprep.subr.mxu0 0.0
    %3971 = vmatpush1.xpose.msra.mxu0 0.0
    %3972 = vmatprep.subr.mxu0 0.0
    %3973 = vmatpush1.xpose.msra.mxu0 0.0
    %3974 = vmatprep.subr.mxu0 0.0
    %3975 = vmatpush1.xpose.msra.mxu0 0.0
    %3976 = vmatprep.subr.mxu0 0.0
    %3977 = vmatpush1.xpose.msra.mxu0 0.0
    %3978 = vmatprep.subr.mxu0 0.0
    %3979 = vmatpush1.xpose.msra.mxu0 0.0
    %3980 = vmatprep.subr.mxu0 0.0
    %3981 = vmatpush1.xpose.msra.mxu0 0.0
    %3982 = vmatprep.subr.mxu0 0.0
    %3983 = vmatpush1.xpose.msra.mxu0 0.0
    %3984 = vmatprep.subr.mxu0 0.0
    %3985 = vmatpush1.xpose.msra.mxu0 0.0
    %3986 = vmatprep.subr.mxu0 0.0
    %3987 = vmatpush1.xpose.msra.mxu0 0.0
    %3988 = vmatprep.subr.mxu0 0.0
    %3989 = vmatpush1.xpose.msra.mxu0 0.0
    %3990 = vmatprep.subr.mxu0 0.0
    %3991 = vmatpush1.xpose.msra.mxu0 0.0
    %3992 = vmatprep.subr.mxu0 0.0
    %3993 = vmatpush1.xpose.msra.mxu0 0.0
    %3994 = vmatprep.subr.mxu0 0.0
    %3995 = vmatpush1.xpose.msra.mxu0 0.0
    %3996 = vmatprep.subr.mxu0 0.0
    %3997 = vmatpush1.xpose.msra.mxu0 0.0
    %3998 = vmatprep.subr.mxu0 0.0
    %3999 = vmatpush1.xpose.msra.mxu0 0.0
    %4000 = vmatprep.subr.mxu0 0.0
    %4001 = vmatpush1.xpose.msra.mxu0 0.0
    %4002 = vmatprep.subr.mxu0 0.0
    %4003 = vmatpush1.xpose.msra.mxu0 0.0
    %4004 = vmatprep.subr.mxu0 0.0
    %4005 = vmatpush1.xpose.msra.mxu0 0.0
    %4006 = vmatprep.subr.mxu0 0.0
    %4007 = vmatpush1.xpose.msra.mxu0 0.0
    %4008 = vmatprep.subr.mxu0 0.0
    %4009 = vmatpush1.xpose.msra.mxu0 0.0
    %4010 = vmatprep.subr.mxu0 0.0
    %4011 = vmatpush1.xpose.msra.mxu0 0.0
    %4012 = vmatprep.subr.mxu0 0.0
    %4013 = vmatpush1.xpose.msra.mxu0 0.0
    %4014 = vmatprep.subr.mxu0 0.0
    %4015 = vmatpush1.xpose.msra.mxu0 0.0
    %4016 = vmatprep.subr.mxu0 0.0
    %4017 = vmatpush1.xpose.msra.mxu0 0.0
    %4018 = vmatprep.subr.mxu0 0.0
    %4019 = vmatpush1.xpose.msra.mxu0 0.0
    %4020 = vmatprep.subr.mxu0 0.0
    %4021 = vmatpush1.xpose.msra.mxu0 0.0
    %4022 = vmatprep.subr.mxu0 0.0
    %4023 = vmatpush1.xpose.msra.mxu0 0.0
    %4024 = vmatprep.subr.mxu0 0.0
    %4025 = vmatpush1.xpose.msra.mxu0 0.0
    %4026 = vmatprep.subr.mxu0 0.0
    %4027 = vmatpush1.xpose.msra.mxu0 0.0
    %4028 = vmatprep.subr.mxu0 0.0
    %4029 = vmatpush1.xpose.msra.mxu0 0.0
    %4030 = vmatprep.subr.mxu0 0.0
    %4031 = vmatpush1.xpose.msra.mxu0 0.0
    %4032 = vmatprep.mubr.f32.mxu0 0.0
    %4033 = vmatmul.mubr.f32.gmra.mrb[0].mxu0 %v3964
    %v4034 = vpop.f32.mrb[0].mxu0
    %v4035 = vadd.f32 0.0, %v4034
    %v4036 = vpop.f32.mrb[0].mxu0
    %4037 = vdwg.mxu0
    %v4038 = vsel %vm530, %v3957, -inf
    %4039 = vmax.xlane.f32.xlu0 %v4038
    %v4040 = vpop.xlane.xlu0 %4039
    %v4041 = vsel %vm530, %v4035, -inf
    %4042 = vmax.xlane.f32.xlu0 %v4041
    %v4043 = vpop.xlane.xlu0 %4042
    %v4044 = vsub.f32 %v3957, %v4040
    %v4045 = vsub.f32 %v4035, %v4043
    %v4046 = vmul.f32 %v4044, 1.442695
    %v4047 = vpow.pop %v4046
    %v4048 = vmul.f32 %v4045, 1.442695
    %v4049 = vpow.pop %v4048
    %v4050 = vsel %vm530, %v4047, 0.0
    %4051 = vadd.xlane.f32.xlu0 %v4050
    %v4052 = vpop.xlane.xlu0 %4051
    %v4053 = vsel %vm530, %v4049, 0.0
    %4054 = vadd.xlane.f32.xlu0 %v4053
    %v4055 = vpop.xlane.xlu0 %4054
    %v4056 = vrcp.pop %v4052
    %v4057 = vrcp.pop %v4055
    %v4058 = vmul.f32 %v4047, %v4056
    %v4059 = vmul.f32 %v4049, %v4057
    %4060 = vrot.lane.b32.xlu0 %v2636, 40
    %v4061 = vpop.permute.xlu0 %4060
    %v4064 = vsel %vm530, %v4058, 0
    %4066 = vmatprep.subr.mxu0 0.0
    %4067 = vmatpush1.msra.mxu0 %v4061
    %4068 = vmatprep.subr.mxu0 0.0
    %4069 = vmatpush1.msra.mxu0 0.0
    %4070 = vmatprep.subr.mxu0 0.0
    %4071 = vmatpush1.msra.mxu0 0.0
    %4072 = vmatprep.subr.mxu0 0.0
    %4073 = vmatpush1.msra.mxu0 0.0
    %4074 = vmatprep.subr.mxu0 0.0
    %4075 = vmatpush1.msra.mxu0 0.0
    %4076 = vmatprep.subr.mxu0 0.0
    %4077 = vmatpush1.msra.mxu0 0.0
    %4078 = vmatprep.subr.mxu0 0.0
    %4079 = vmatpush1.msra.mxu0 0.0
    %4080 = vmatprep.subr.mxu0 0.0
    %4081 = vmatpush1.msra.mxu0 0.0
    %4082 = vmatprep.subr.mxu0 0.0
    %4083 = vmatpush1.msra.mxu0 0.0
    %4084 = vmatprep.subr.mxu0 0.0
    %4085 = vmatpush1.msra.mxu0 0.0
    %4086 = vmatprep.subr.mxu0 0.0
    %4087 = vmatpush1.msra.mxu0 0.0
    %4088 = vmatprep.subr.mxu0 0.0
    %4089 = vmatpush1.msra.mxu0 0.0
    %4090 = vmatprep.subr.mxu0 0.0
    %4091 = vmatpush1.msra.mxu0 0.0
    %4092 = vmatprep.subr.mxu0 0.0
    %4093 = vmatpush1.msra.mxu0 0.0
    %4094 = vmatprep.subr.mxu0 0.0
    %4095 = vmatpush1.msra.mxu0 0.0
    %4096 = vmatprep.subr.mxu0 0.0
    %4097 = vmatpush1.msra.mxu0 0.0
    %4098 = vmatprep.subr.mxu0 0.0
    %4099 = vmatpush1.msra.mxu0 0.0
    %4100 = vmatprep.subr.mxu0 0.0
    %4101 = vmatpush1.msra.mxu0 0.0
    %4102 = vmatprep.subr.mxu0 0.0
    %4103 = vmatpush1.msra.mxu0 0.0
    %4104 = vmatprep.subr.mxu0 0.0
    %4105 = vmatpush1.msra.mxu0 0.0
    %4106 = vmatprep.subr.mxu0 0.0
    %4107 = vmatpush1.msra.mxu0 0.0
    %4108 = vmatprep.subr.mxu0 0.0
    %4109 = vmatpush1.msra.mxu0 0.0
    %4110 = vmatprep.subr.mxu0 0.0
    %4111 = vmatpush1.msra.mxu0 0.0
    %4112 = vmatprep.subr.mxu0 0.0
    %4113 = vmatpush1.msra.mxu0 0.0
    %4114 = vmatprep.subr.mxu0 0.0
    %4115 = vmatpush1.msra.mxu0 0.0
    %4116 = vmatprep.subr.mxu0 0.0
    %4117 = vmatpush1.msra.mxu0 0.0
    %4118 = vmatprep.subr.mxu0 0.0
    %4119 = vmatpush1.msra.mxu0 0.0
    %4120 = vmatprep.subr.mxu0 0.0
    %4121 = vmatpush1.msra.mxu0 0.0
    %4122 = vmatprep.subr.mxu0 0.0
    %4123 = vmatpush1.msra.mxu0 0.0
    %4124 = vmatprep.subr.mxu0 0.0
    %4125 = vmatpush1.msra.mxu0 0.0
    %4126 = vmatprep.subr.mxu0 0.0
    %4127 = vmatpush1.msra.mxu0 0.0
    %4128 = vmatprep.subr.mxu0 0.0
    %4129 = vmatpush1.msra.mxu0 0.0
    %4130 = vmatprep.mubr.f32.mxu0 0.0
    %4131 = vmatmul.mubr.f32.gmra.mrb[0].mxu0 %v4064
    %v4132 = vpop.f32.mrb[0].mxu0
    %v4133 = vadd.f32 0.0, %v4132
    %v4134 = vpop.f32.mrb[0].mxu0
    %4135 = vdwg.mxu0
    %4136 = vrot.lane.b32.xlu0 %v2641, 40
    %v4137 = vpop.permute.xlu0 %4136
    %v4140 = vsel %vm530, %v4059, 0
    %4142 = vmatprep.subr.mxu0 0.0
    %4143 = vmatpush1.msra.mxu0 %v4137
    %4144 = vmatprep.subr.mxu0 0.0
    %4145 = vmatpush1.msra.mxu0 0.0
    %4146 = vmatprep.subr.mxu0 0.0
    %4147 = vmatpush1.msra.mxu0 0.0
    %4148 = vmatprep.subr.mxu0 0.0
    %4149 = vmatpush1.msra.mxu0 0.0
    %4150 = vmatprep.subr.mxu0 0.0
    %4151 = vmatpush1.msra.mxu0 0.0
    %4152 = vmatprep.subr.mxu0 0.0
    %4153 = vmatpush1.msra.mxu0 0.0
    %4154 = vmatprep.subr.mxu0 0.0
    %4155 = vmatpush1.msra.mxu0 0.0
    %4156 = vmatprep.subr.mxu0 0.0
    %4157 = vmatpush1.msra.mxu0 0.0
    %4158 = vmatprep.subr.mxu0 0.0
    %4159 = vmatpush1.msra.mxu0 0.0
    %4160 = vmatprep.subr.mxu0 0.0
    %4161 = vmatpush1.msra.mxu0 0.0
    %4162 = vmatprep.subr.mxu0 0.0
    %4163 = vmatpush1.msra.mxu0 0.0
    %4164 = vmatprep.subr.mxu0 0.0
    %4165 = vmatpush1.msra.mxu0 0.0
    %4166 = vmatprep.subr.mxu0 0.0
    %4167 = vmatpush1.msra.mxu0 0.0
    %4168 = vmatprep.subr.mxu0 0.0
    %4169 = vmatpush1.msra.mxu0 0.0
    %4170 = vmatprep.subr.mxu0 0.0
    %4171 = vmatpush1.msra.mxu0 0.0
    %4172 = vmatprep.subr.mxu0 0.0
    %4173 = vmatpush1.msra.mxu0 0.0
    %4174 = vmatprep.subr.mxu0 0.0
    %4175 = vmatpush1.msra.mxu0 0.0
    %4176 = vmatprep.subr.mxu0 0.0
    %4177 = vmatpush1.msra.mxu0 0.0
    %4178 = vmatprep.subr.mxu0 0.0
    %4179 = vmatpush1.msra.mxu0 0.0
    %4180 = vmatprep.subr.mxu0 0.0
    %4181 = vmatpush1.msra.mxu0 0.0
    %4182 = vmatprep.subr.mxu0 0.0
    %4183 = vmatpush1.msra.mxu0 0.0
    %4184 = vmatprep.subr.mxu0 0.0
    %4185 = vmatpush1.msra.mxu0 0.0
    %4186 = vmatprep.subr.mxu0 0.0
    %4187 = vmatpush1.msra.mxu0 0.0
    %4188 = vmatprep.subr.mxu0 0.0
    %4189 = vmatpush1.msra.mxu0 0.0
    %4190 = vmatprep.subr.mxu0 0.0
    %4191 = vmatpush1.msra.mxu0 0.0
    %4192 = vmatprep.subr.mxu0 0.0
    %4193 = vmatpush1.msra.mxu0 0.0
    %4194 = vmatprep.subr.mxu0 0.0
    %4195 = vmatpush1.msra.mxu0 0.0
    %4196 = vmatprep.subr.mxu0 0.0
    %4197 = vmatpush1.msra.mxu0 0.0
    %4198 = vmatprep.subr.mxu0 0.0
    %4199 = vmatpush1.msra.mxu0 0.0
    %4200 = vmatprep.subr.mxu0 0.0
    %4201 = vmatpush1.msra.mxu0 0.0
    %4202 = vmatprep.subr.mxu0 0.0
    %4203 = vmatpush1.msra.mxu0 0.0
    %4204 = vmatprep.subr.mxu0 0.0
    %4205 = vmatpush1.msra.mxu0 0.0
    %4206 = vmatprep.mubr.f32.mxu0 0.0
    %4207 = vmatmul.mubr.f32.gmra.mrb[0].mxu0 %v4140
    %v4208 = vpop.f32.mrb[0].mxu0
    %v4209 = vadd.f32 0.0, %v4208
    %v4210 = vpop.f32.mrb[0].mxu0
    %4211 = vdwg.mxu0
    %v4213 = vsel %vm530, %v4133, 0
    %v4216 = vsel %vm530, %v4209, 0
    %4218 = vmatprep.subr.mxu0 0.0
    %4219 = vmatpush1.msra.mxu0 %v2648
    %4220 = vmatprep.subr.mxu0 0.0
    %4221 = vmatpush1.msra.mxu0 0.0
    %4222 = vmatprep.subr.mxu0 0.0
    %4223 = vmatpush1.msra.mxu0 0.0
    %4224 = vmatprep.subr.mxu0 0.0
    %4225 = vmatpush1.msra.mxu0 0.0
    %4226 = vmatprep.subr.mxu0 0.0
    %4227 = vmatpush1.msra.mxu0 0.0
    %4228 = vmatprep.subr.mxu0 0.0
    %4229 = vmatpush1.msra.mxu0 0.0
    %4230 = vmatprep.subr.mxu0 0.0
    %4231 = vmatpush1.msra.mxu0 0.0
    %4232 = vmatprep.subr.mxu0 0.0
    %4233 = vmatpush1.msra.mxu0 0.0
    %4234 = vmatprep.subr.mxu0 0.0
    %4235 = vmatpush1.msra.mxu0 0.0
    %4236 = vmatprep.subr.mxu0 0.0
    %4237 = vmatpush1.msra.mxu0 0.0
    %4238 = vmatprep.subr.mxu0 0.0
    %4239 = vmatpush1.msra.mxu0 0.0
    %4240 = vmatprep.subr.mxu0 0.0
    %4241 = vmatpush1.msra.mxu0 0.0
    %4242 = vmatprep.subr.mxu0 0.0
    %4243 = vmatpush1.msra.mxu0 0.0
    %4244 = vmatprep.subr.mxu0 0.0
    %4245 = vmatpush1.msra.mxu0 0.0
    %4246 = vmatprep.subr.mxu0 0.0
    %4247 = vmatpush1.msra.mxu0 0.0
    %4248 = vmatprep.subr.mxu0 0.0
    %4249 = vmatpush1.msra.mxu0 0.0
    %4250 = vmatprep.subr.mxu0 0.0
    %4251 = vmatpush1.msra.mxu0 0.0
    %4252 = vmatprep.subr.mxu0 0.0
    %4253 = vmatpush1.msra.mxu0 0.0
    %4254 = vmatprep.subr.mxu0 0.0
    %4255 = vmatpush1.msra.mxu0 0.0
    %4256 = vmatprep.subr.mxu0 0.0
    %4257 = vmatpush1.msra.mxu0 0.0
    %4258 = vmatprep.subr.mxu0 0.0
    %4259 = vmatpush1.msra.mxu0 0.0
    %4260 = vmatprep.subr.mxu0 0.0
    %4261 = vmatpush1.msra.mxu0 0.0
    %4262 = vmatprep.subr.mxu0 0.0
    %4263 = vmatpush1.msra.mxu0 0.0
    %4264 = vmatprep.subr.mxu0 0.0
    %4265 = vmatpush1.msra.mxu0 0.0
    %4266 = vmatprep.subr.mxu0 0.0
    %4267 = vmatpush1.msra.mxu0 0.0
    %4268 = vmatprep.subr.mxu0 0.0
    %4269 = vmatpush1.msra.mxu0 0.0
    %4270 = vmatprep.subr.mxu0 0.0
    %4271 = vmatpush1.msra.mxu0 0.0
    %4272 = vmatprep.subr.mxu0 0.0
    %4273 = vmatpush1.msra.mxu0 0.0
    %4274 = vmatprep.subr.mxu0 0.0
    %4275 = vmatpush1.msra.mxu0 0.0
    %4276 = vmatprep.subr.mxu0 0.0
    %4277 = vmatpush1.msra.mxu0 0.0
    %4278 = vmatprep.subr.mxu0 0.0
    %4279 = vmatpush1.msra.mxu0 0.0
    %4280 = vmatprep.subr.mxu0 0.0
    %4281 = vmatpush1.msra.mxu0 0.0
    %4282 = vmatprep.mubr.f32.mxu0 0.0
    %4283 = vmatmul.mubr.f32.gmra.mrb[0].mxu0 %v4213
    %v4284 = vpop.f32.mrb[0].mxu0
    %v4285 = vadd.f32 0.0, %v4284
    %v4286 = vpop.f32.mrb[0].mxu0
    %4287 = vmatprep.mubr.f32.mxu0 0.0
    %4288 = vmatmul.mubr.f32.gmra.mrb[0].mxu0 %v4216
    %v4289 = vpop.f32.mrb[0].mxu0
    %v4290 = vadd.f32 0.0, %v4289
    %v4291 = vpop.f32.mrb[0].mxu0
    %4292 = vdwg.mxu0
    %v4293 = vadd.f32 %v3880, %v4285
    %v4294 = vadd.f32 %v3881, %v4290
    %s4295 = scalar_lea.vmem %s11, 1
    %v4296 = vld [vmem:[%s4295] sm:$0x1]
    %v4298 = vlaneseq
    %v4299 = vshrl.u32 %v4298, 7
    %v4300 = vsub.s32 0, %v4299
    %v4301 = vrot.slane %v4296, %v4300
    %v4303 = vadd.f32 %v4293, %v4301
    %v4304 = vadd.f32 %v4294, %v4301
    %4305 = vst.msk [vmem:[#allocation2] sm:$0xff] %vm156, %v4303
    %4306 = vst.msk [vmem:[#allocation2 + $0x8] sm:$0xff] %vm156, %v4304
    // Predicated region
    $region50: #{gin_node_embedding_forward.1} parent=1 // pred_check
      _
    $region51: #{gin_node_embedding_forward.1} parent=1 // pred_check_branch
      %4308 = sbr.rel (0) target = $region53
    $region52: #{gin_node_embedding_forward.1} parent=1 // pred_region
      %s4310 = ssub.s32 256, 256
      %4311 = vsyncadd [#allocation3], %s4310
      %s4312 = sshll.u32 [#allocation2], 4
      %s4313 = int_to_ptr.vmem [resolvable:$true] %s4312
      %4318 = dma.vmem_to_hbm [thread:$0]  %s4313, 256, %s12, [#allocation3], 128, 128, 8
    $region53: #{gin_node_embedding_forward.1} parent=1 // pred_fallthru
      _
    // Predicated region
    $region54: #{gin_node_embedding_forward.1} parent=1 // pred_check
      _
    $region55: #{gin_node_embedding_forward.1} parent=1 // pred_check_branch
      %4320 = sbr.rel (0) target = $region57
    $region56: #{gin_node_embedding_forward.1} parent=1 // pred_region
      %4321 = dma.done [#allocation3], 256
    $region57: #{gin_node_embedding_forward.1} parent=1 // pred_fallthru
      _
    %4322 = vsyncpa [#allocation3], 1

</llo_original>
